<compile_context>
chip_gen: v7x
topology: tpu7x:2x2x1
jax: 0.10.0
libtpu: 0.0.40
codegen_flags: <defaults>
</compile_context>

<pallas_src>
import functools

import jax
import jax.numpy as jnp
from jax.experimental import pallas as pl
from jax.experimental.pallas import tpu as pltpu


def _layernorm(x, w, b, eps=1e-5):
    # x: (rows, C), w/b: (C,) -- biased variance, same as torch.nn.LayerNorm.
    mean = jnp.mean(x, axis=-1, keepdims=True)
    var = jnp.mean((x - mean) ** 2, axis=-1, keepdims=True)
    return (x - mean) * jax.lax.rsqrt(var + eps) * w + b


def _gelu_exact(x):
    # torch.nn.GELU default = exact erf formulation (kept for PyTorch parity).
    return 0.5 * x * (1.0 + jax.lax.erf(x * (2.0 ** -0.5)))


def block_kernel(x_ref,
                 ln1w_ref, ln1b_ref,
                 wqkv_ref,
                 wp_ref, pb_ref,
                 ln2w_ref, ln2b_ref,
                 w1_ref, b1_ref,
                 w2_ref, b2_ref,
                 o_ref,
                 *, num_heads):
    # One grid step == Bt batch elements; all dense matmuls use rows = Bt * N.
    Bt, N, C = x_ref.shape
    nh = num_heads
    Dh = C // nh
    rows = Bt * N

    x = x_ref[...].astype(jnp.float32).reshape(rows, C)      # (rows, C)

    # ---- Attention branch: x_attn = Attention(norm1(x)) ----
    xn = _layernorm(x, ln1w_ref[0], ln1b_ref[0])
    xnb = xn.astype(jnp.bfloat16)                             # bf16 MXU in, f32 acc

    # Single fused QKV matmul; 128-aligned lane slices are free.  The attention
    # scale is already folded into the q weight columns (prepare_block_params).
    qkv = jnp.dot(xnb, wqkv_ref[...], preferred_element_type=jnp.float32)  # (rows,3C)
    q = qkv[:, 0 * C:1 * C]
    k = qkv[:, 1 * C:2 * C]
    v = qkv[:, 2 * C:3 * C]

    def split_heads(t):
        # (rows, C) -> (nh*Bt, N, Dh): single leading batch dim so both attention
        # einsums are batched MXU matmuls.  Only one 3-D transpose (same relayout
        # the per-batch version used, now amortized over Bt*N rows); the trailing
        # reshape (nh, Bt*N, Dh) -> (nh*Bt, N, Dh) is a pure row-major view.
        return (t.reshape(rows, nh, Dh).transpose(1, 0, 2)
                 .reshape(nh * Bt, N, Dh).astype(jnp.bfloat16))

    qz, kz, vz = split_heads(q), split_heads(k), split_heads(v)

    s = jnp.einsum("znd,zmd->znm", qz, kz,
                   preferred_element_type=jnp.float32)        # (nh*Bt, N, N) f32
    s = s - jnp.max(s, axis=-1, keepdims=True)
    p = jnp.exp(s)
    p = p * pl.reciprocal(jnp.sum(p, axis=-1, keepdims=True), approx=True)
    ctx = jnp.einsum("znm,zmd->znd", p.astype(jnp.bfloat16), vz,
                     preferred_element_type=jnp.float32)      # (nh*Bt, N, Dh)
    ctx = (ctx.reshape(nh, rows, Dh).transpose(1, 0, 2)       # merge heads
              .reshape(rows, C).astype(jnp.bfloat16))

    x_attn = (jnp.dot(ctx, wp_ref[...], preferred_element_type=jnp.float32)
              + pb_ref[0])                                    # (rows, C)
    x1 = x + x_attn                                           # residual 1 (f32)

    # ---- MLP branch: out = x1 + Mlp(norm2(x1)) ----
    # For production ViT dims on v7x, stream fc1/fc2 over a hidden-dim grid axis
    # with an f32 accumulator; unnecessary at these shapes.
    xn2 = _layernorm(x1, ln2w_ref[0], ln2b_ref[0]).astype(jnp.bfloat16)
    h = jnp.dot(xn2, w1_ref[...], preferred_element_type=jnp.float32) + b1_ref[0]
    h = _gelu_exact(h).astype(jnp.bfloat16)
    mlp = jnp.dot(h, w2_ref[...], preferred_element_type=jnp.float32) + b2_ref[0]

    o_ref[...] = (x1 + mlp).reshape(Bt, N, C).astype(o_ref.dtype)


def _vmem_capacity_bytes():
    try:
        return int(pltpu.get_tpu_info().vmem_capacity_bytes)
    except Exception:
        return 128 << 20   # conservative fallback (v5e/v6e physical VMEM)


def _vmem_limit_bytes(bt, N, C, hid, nh):
    rows = bt * N
    io_blocks = 2 * 2 * rows * C * 4                              # x + out, 2-buffered
    weights = 2 * (3 * C * C + C * C + C * hid + hid * C) * 2     # bf16, 2-buffered
    biases = 2 * (6 * C + hid) * 4
    scratch = (rows * 3 * C * 4                                   # fused qkv (f32)
               + 3 * rows * C * 2 * 4                             # head-major q/k/v (lane pad)
               + 2 * nh * bt * N * max(N, 128) * 4                # scores + probs (f32)
               + 3 * rows * C * 4                                 # x, x_attn, x1 (f32)
               + 2 * rows * hid * 4)                              # fc1 out + gelu (f32)
    need = io_blocks + weights + biases + scratch + (4 << 20)
    cap = _vmem_capacity_bytes()
    return int(max(min(need, (cap * 3) // 4), 16 << 20))


def _pick_batch_tile(batch, seq, target_rows=256):
    # Feed the MXU >= target_rows effective rows per step when the batch allows;
    # falls back to a divisor of `batch`.
    bt = max(1, min(batch, pl.cdiv(target_rows, seq)))
    while batch % bt:
        bt -= 1
    return bt


def prepare_block_params(params, num_heads):
    """One-time parameter prep (hoisted out of the per-forward path): cast matmul
    weights to bf16 and fold 1/sqrt(Dh) into the q columns of the fused qkv weight
    (exact, since qkv_bias=False)."""
    C = params["qkv_w"].shape[0]
    scale = (C // num_heads) ** (-0.5)
    qkv_w = params["qkv_w"].at[:, :C].multiply(scale).astype(jnp.bfloat16)
    return {
        "ln1_w": params["ln1_w"], "ln1_b": params["ln1_b"],
        "qkv_w": qkv_w,
        "proj_w": params["proj_w"].astype(jnp.bfloat16),
        "proj_b": params["proj_b"],
        "ln2_w": params["ln2_w"], "ln2_b": params["ln2_b"],
        "fc1_w": params["fc1_w"].astype(jnp.bfloat16),
        "fc1_b": params["fc1_b"],
        "fc2_w": params["fc2_w"].astype(jnp.bfloat16),
        "fc2_b": params["fc2_b"],
    }


def block_forward(x, kparams, num_heads, *, block_b=None):
    B, N, C = x.shape
    hid = kparams["fc1_w"].shape[1]
    bt = block_b if block_b is not None else _pick_batch_tile(B, N)
    assert B % bt == 0, (B, bt)

    const = lambda shape: pl.BlockSpec(shape, lambda b: (0,) * len(shape))
    kernel = functools.partial(block_kernel, num_heads=num_heads)

    cost = pl.CostEstimate(
        flops=int(2 * B * N * C * (3 * C + C + 2 * hid) + 4 * B * N * N * C),
        transcendentals=int(B * num_heads * N * N + B * N * hid),
        bytes_accessed=int(2 * B * N * C * 4
                           + (3 * C * C + C * C + 2 * C * hid) * 2
                           + (6 * C + hid) * 4),
    )

    return pl.pallas_call(
        kernel,
        out_shape=jax.ShapeDtypeStruct((B, N, C), x.dtype),
        grid_spec=pltpu.PrefetchScalarGridSpec(
            num_scalar_prefetch=0,
            grid=(B // bt,),
            in_specs=[
                pl.BlockSpec((bt, N, C), lambda b: (b, 0, 0)),   # x
                const((1, C)), const((1, C)),                    # ln1 weight / bias
                const((C, 3 * C)),                               # fused qkv weight (bf16)
                const((C, C)), const((1, C)),                    # proj weight (bf16) / bias
                const((1, C)), const((1, C)),                    # ln2 weight / bias
                const((C, hid)), const((1, hid)),                # fc1 weight (bf16) / bias
                const((hid, C)), const((1, C)),                  # fc2 weight (bf16) / bias
            ],
            out_specs=pl.BlockSpec((bt, N, C), lambda b: (b, 0, 0)),
        ),
        compiler_params=pltpu.CompilerParams(
            dimension_semantics=("parallel",),
            vmem_limit_bytes=_vmem_limit_bytes(bt, N, C, hid, num_heads)),
        cost_estimate=cost,
    )(x,
      kparams["ln1_w"], kparams["ln1_b"],
      kparams["qkv_w"],
      kparams["proj_w"], kparams["proj_b"],
      kparams["ln2_w"], kparams["ln2_b"],
      kparams["fc1_w"], kparams["fc1_b"],
      kparams["fc2_w"], kparams["fc2_b"])


def reference_forward(x, params, num_heads):
    """Pure-JAX (f32) reference mirroring the PyTorch Block forward (normal-SA path)."""
    B, N, C = x.shape
    Dh = C // num_heads
    scale = Dh ** (-0.5)

    def ln(t, w, b):
        m = jnp.mean(t, axis=-1, keepdims=True)
        v = jnp.mean((t - m) ** 2, axis=-1, keepdims=True)
        return (t - m) / jnp.sqrt(v + 1e-5) * w[0] + b[0]

    xn = ln(x, params["ln1_w"], params["ln1_b"])
    qkv = xn @ params["qkv_w"]                                   # (B, N, 3C)
    qkv = qkv.reshape(B, N, 3, num_heads, Dh).transpose(2, 0, 3, 1, 4)
    q, k, v = qkv[0], qkv[1], qkv[2]                             # (B, H, N, Dh)
    attn = (q @ jnp.swapaxes(k, -2, -1)) * scale
    attn = jax.nn.softmax(attn, axis=-1)
    out = (attn @ v).transpose(0, 2, 1, 3).reshape(B, N, C)
    x_attn = out @ params["proj_w"] + params["proj_b"][0]
    x1 = x + x_attn
    xn2 = ln(x1, params["ln2_w"], params["ln2_b"])
    h = xn2 @ params["fc1_w"] + params["fc1_b"][0]
    h = 0.5 * h * (1.0 + jax.lax.erf(h / jnp.sqrt(2.0)))
    return x1 + (h @ params["fc2_w"] + params["fc2_b"][0])


def init_params(key, dim, num_heads, mlp_ratio=4.0):
    hidden = int(dim * mlp_ratio)
    ks = jax.random.split(key, 6)
    s = 0.02
    return {
        "ln1_w": jnp.ones((1, dim), jnp.float32),
        "ln1_b": jnp.zeros((1, dim), jnp.float32),
        # qkv_bias=False -> no qkv bias. Weights stored as (in, out).
        "qkv_w": s * jax.random.normal(ks[0], (dim, 3 * dim), jnp.float32),
        "proj_w": s * jax.random.normal(ks[1], (dim, dim), jnp.float32),
        "proj_b": s * jax.random.normal(ks[2], (1, dim), jnp.float32),
        "ln2_w": jnp.ones((1, dim), jnp.float32),
        "ln2_b": jnp.zeros((1, dim), jnp.float32),
        "fc1_w": s * jax.random.normal(ks[3], (dim, hidden), jnp.float32),
        "fc1_b": jnp.zeros((1, hidden), jnp.float32),
        "fc2_w": s * jax.random.normal(ks[4], (hidden, dim), jnp.float32),
        "fc2_b": jnp.zeros((1, dim), jnp.float32),
    }


if __name__ == "__main__":
    # Small 128-lane-aligned shapes: B=4, seq N=16, dim C=128, 4 heads (Dh=32),
    # mlp hidden 512.  block_b=2 -> 2 batch elements (32 rows) per grid step and a
    # 2-step parallel grid (exercises the batch-tiled index_map / megacore split).
    B, N, C = 4, 16, 128
    num_heads = 4

    key = jax.random.PRNGKey(0)
    kx, kp = jax.random.split(key)
    x = jax.random.normal(kx, (B, N, C), jnp.float32)
    params = init_params(kp, C, num_heads)

    # One-time parameter prep (bf16 cast + scale folding), hoisted out of the
    # per-forward path.
    kparams = prepare_block_params(params, num_heads)

    out = block_forward(x, kparams, num_heads, block_b=2)
    out = jax.block_until_ready(out)

    ref = reference_forward(x, params, num_heads)
    assert out.shape == (B, N, C)
    # bf16 matmul weights/activations + approx reciprocal vs f32 reference.
    assert jnp.allclose(out, ref, rtol=1e-2, atol=1e-2), (
        float(jnp.max(jnp.abs(out - ref))))

    # TODO(synk): mctf / size log-bias branch and dropout are not implemented
    # (use_mctf=False, prop_attn off, drop=0 -> identity in this configuration).
    print("KERNEL_OK")
</pallas_src>

<mosaic_0001>
module attributes {stable_mosaic.version = 11 : i64} {
  func.func @block_kernel(%arg0: i32, %arg1: memref<2x16x128xf32, #tpu.memory_space<vmem>>, %arg2: memref<1x128xf32, #tpu.memory_space<vmem>>, %arg3: memref<1x128xf32, #tpu.memory_space<vmem>>, %arg4: memref<128x384xbf16, #tpu.memory_space<vmem>>, %arg5: memref<128x128xbf16, #tpu.memory_space<vmem>>, %arg6: memref<1x128xf32, #tpu.memory_space<vmem>>, %arg7: memref<1x128xf32, #tpu.memory_space<vmem>>, %arg8: memref<1x128xf32, #tpu.memory_space<vmem>>, %arg9: memref<128x512xbf16, #tpu.memory_space<vmem>>, %arg10: memref<1x512xf32, #tpu.memory_space<vmem>>, %arg11: memref<512x128xbf16, #tpu.memory_space<vmem>>, %arg12: memref<1x128xf32, #tpu.memory_space<vmem>>, %arg13: memref<2x16x128xf32, #tpu.memory_space<vmem>>) attributes {dimension_semantics = [#tpu.dimension_semantics<parallel>], iteration_bounds = array<i64: 2>, scalar_prefetch = 0 : i64, scratch_operands = 0 : i64, tpu.core_type = #tpu.core_type<tc>, window_params = [{transform_indices = @transform_0, window_bounds = array<i64: 2, 16, 128>}, {pipeline_mode = #tpu.pipeline_mode<synchronous>, transform_indices = @transform_1, window_bounds = array<i64: 1, 128>}, {pipeline_mode = #tpu.pipeline_mode<synchronous>, transform_indices = @transform_2, window_bounds = array<i64: 1, 128>}, {pipeline_mode = #tpu.pipeline_mode<synchronous>, transform_indices = @transform_3, window_bounds = array<i64: 128, 384>}, {pipeline_mode = #tpu.pipeline_mode<synchronous>, transform_indices = @transform_4, window_bounds = array<i64: 128, 128>}, {pipeline_mode = #tpu.pipeline_mode<synchronous>, transform_indices = @transform_5, window_bounds = array<i64: 1, 128>}, {pipeline_mode = #tpu.pipeline_mode<synchronous>, transform_indices = @transform_6, window_bounds = array<i64: 1, 128>}, {pipeline_mode = #tpu.pipeline_mode<synchronous>, transform_indices = @transform_7, window_bounds = array<i64: 1, 128>}, {pipeline_mode = #tpu.pipeline_mode<synchronous>, transform_indices = @transform_8, window_bounds = array<i64: 128, 512>}, {pipeline_mode = #tpu.pipeline_mode<synchronous>, transform_indices = @transform_9, window_bounds = array<i64: 1, 512>}, {pipeline_mode = #tpu.pipeline_mode<synchronous>, transform_indices = @transform_10, window_bounds = array<i64: 512, 128>}, {pipeline_mode = #tpu.pipeline_mode<synchronous>, transform_indices = @transform_11, window_bounds = array<i64: 1, 128>}, {transform_indices = @transform_12, window_bounds = array<i64: 2, 16, 128>}]} {
    %c0 = arith.constant 0 : index
    %c0_0 = arith.constant 0 : index
    %c0_1 = arith.constant 0 : index
    %0 = vector.load %arg1[%c0, %c0_0, %c0_1] : memref<2x16x128xf32, #tpu.memory_space<vmem>>, vector<2x16x128xf32>
    %1 = vector.shape_cast %0 : vector<2x16x128xf32> to vector<32x128xf32>
    %c0_2 = arith.constant 0 : index
    %c0_3 = arith.constant 0 : index
    %2 = vector.load %arg2[%c0_2, %c0_3] : memref<1x128xf32, #tpu.memory_space<vmem>>, vector<1x128xf32>
    %3 = vector.shape_cast %2 : vector<1x128xf32> to vector<128xf32>
    %c0_4 = arith.constant 0 : index
    %c0_5 = arith.constant 0 : index
    %4 = vector.load %arg3[%c0_4, %c0_5] : memref<1x128xf32, #tpu.memory_space<vmem>>, vector<1x128xf32>
    %5 = vector.shape_cast %4 : vector<1x128xf32> to vector<128xf32>
    %cst = arith.constant dense<0.000000e+00> : vector<32xf32>
    %6 = vector.multi_reduction <add>, %1, %cst [1] : vector<32x128xf32> to vector<32xf32>
    %7 = vector.shape_cast %6 : vector<32xf32> to vector<32x1xf32>
    %cst_6 = arith.constant 1.280000e+02 : f32
    %8 = vector.broadcast %cst_6 : f32 to vector<32x1xf32>
    %9 = arith.divf %7, %8 : vector<32x1xf32>
    %10 = vector.broadcast %9 : vector<32x1xf32> to vector<32x128xf32>
    %11 = arith.subf %1, %10 : vector<32x128xf32>
    %12 = arith.mulf %11, %11 : vector<32x128xf32>
    %cst_7 = arith.constant dense<0.000000e+00> : vector<32xf32>
    %13 = vector.multi_reduction <add>, %12, %cst_7 [1] : vector<32x128xf32> to vector<32xf32>
    %14 = vector.shape_cast %13 : vector<32xf32> to vector<32x1xf32>
    %cst_8 = arith.constant 1.280000e+02 : f32
    %15 = vector.broadcast %cst_8 : f32 to vector<32x1xf32>
    %16 = arith.divf %14, %15 : vector<32x1xf32>
    %17 = vector.broadcast %9 : vector<32x1xf32> to vector<32x128xf32>
    %18 = arith.subf %1, %17 : vector<32x128xf32>
    %cst_9 = arith.constant 9.99999974E-6 : f32
    %19 = vector.broadcast %cst_9 : f32 to vector<32x1xf32>
    %20 = arith.addf %16, %19 : vector<32x1xf32>
    %21 = math.rsqrt %20 : vector<32x1xf32>
    %22 = vector.broadcast %21 : vector<32x1xf32> to vector<32x128xf32>
    %23 = arith.mulf %18, %22 : vector<32x128xf32>
    %24 = vector.shape_cast %3 : vector<128xf32> to vector<1x128xf32>
    %25 = vector.broadcast %24 : vector<1x128xf32> to vector<32x128xf32>
    %26 = arith.mulf %23, %25 : vector<32x128xf32>
    %27 = vector.shape_cast %5 : vector<128xf32> to vector<1x128xf32>
    %28 = vector.broadcast %27 : vector<1x128xf32> to vector<32x128xf32>
    %29 = arith.addf %26, %28 : vector<32x128xf32>
    %30 = arith.truncf %29 : vector<32x128xf32> to vector<32x128xbf16>
    %c0_10 = arith.constant 0 : index
    %c0_11 = arith.constant 0 : index
    %31 = vector.load %arg4[%c0_10, %c0_11] : memref<128x384xbf16, #tpu.memory_space<vmem>>, vector<128x384xbf16>
    %cst_12 = arith.constant dense<0.000000e+00> : vector<32x384xf32>
    %32 = tpu.matmul %30, %31, %cst_12 {dimension_numbers = #tpu.dot_dimension_numbers<[1], [0], [0], [1], [0, 0, 1, 1], [], []>} : vector<32x128xbf16>, vector<128x384xbf16>, vector<32x384xf32> -> vector<32x384xf32>
    %33 = vector.extract_strided_slice %32 {offsets = [0, 0], sizes = [32, 128], strides = [1, 1]} : vector<32x384xf32> to vector<32x128xf32>
    %34 = vector.extract_strided_slice %32 {offsets = [0, 128], sizes = [32, 128], strides = [1, 1]} : vector<32x384xf32> to vector<32x128xf32>
    %35 = vector.extract_strided_slice %32 {offsets = [0, 256], sizes = [32, 128], strides = [1, 1]} : vector<32x384xf32> to vector<32x128xf32>
    %36 = vector.shape_cast %33 : vector<32x128xf32> to vector<32x4x32xf32>
    %37 = tpu.transpose %36, [1, 0, 2] : vector<32x4x32xf32> -> vector<4x32x32xf32>
    %38 = vector.shape_cast %37 : vector<4x32x32xf32> to vector<8x16x32xf32>
    %39 = arith.truncf %38 : vector<8x16x32xf32> to vector<8x16x32xbf16>
    %40 = vector.shape_cast %34 : vector<32x128xf32> to vector<32x4x32xf32>
    %41 = tpu.transpose %40, [1, 0, 2] : vector<32x4x32xf32> -> vector<4x32x32xf32>
    %42 = vector.shape_cast %41 : vector<4x32x32xf32> to vector<8x16x32xf32>
    %43 = arith.truncf %42 : vector<8x16x32xf32> to vector<8x16x32xbf16>
    %44 = vector.shape_cast %35 : vector<32x128xf32> to vector<32x4x32xf32>
    %45 = tpu.transpose %44, [1, 0, 2] : vector<32x4x32xf32> -> vector<4x32x32xf32>
    %46 = vector.shape_cast %45 : vector<4x32x32xf32> to vector<8x16x32xf32>
    %47 = arith.truncf %46 : vector<8x16x32xf32> to vector<8x16x32xbf16>
    "tpu.trace_start"() <{level = 10 : i32, message = "znd,zmd->znm"}> : () -> ()
    %cst_13 = arith.constant dense<0.000000e+00> : vector<8x16x16xf32>
    %48 = tpu.matmul %39, %43, %cst_13 {dimension_numbers = #tpu.dot_dimension_numbers<[2], [2], [1], [1], [0, 0, 0, 1, 1, 1], [0], [0]>} : vector<8x16x32xbf16>, vector<8x16x32xbf16>, vector<8x16x16xf32> -> vector<8x16x16xf32>
    "tpu.trace_stop"() : () -> ()
    %cst_14 = arith.constant dense<0xFF800000> : vector<8x16xf32>
    %49 = vector.multi_reduction <maximumf>, %48, %cst_14 [2] : vector<8x16x16xf32> to vector<8x16xf32>
    %50 = vector.shape_cast %49 : vector<8x16xf32> to vector<8x16x1xf32>
    %51 = vector.broadcast %50 : vector<8x16x1xf32> to vector<8x16x16xf32>
    %52 = arith.subf %48, %51 : vector<8x16x16xf32>
    %53 = math.exp %52 : vector<8x16x16xf32>
    %cst_15 = arith.constant dense<0.000000e+00> : vector<8x16xf32>
    %54 = vector.multi_reduction <add>, %53, %cst_15 [2] : vector<8x16x16xf32> to vector<8x16xf32>
    %55 = vector.shape_cast %54 : vector<8x16xf32> to vector<8x16x1xf32>
    %56 = tpu.reciprocal %55 {approx = true} : vector<8x16x1xf32> -> vector<8x16x1xf32>
    %57 = vector.broadcast %56 : vector<8x16x1xf32> to vector<8x16x16xf32>
    %58 = arith.mulf %53, %57 : vector<8x16x16xf32>
    %59 = arith.truncf %58 : vector<8x16x16xf32> to vector<8x16x16xbf16>
    "tpu.trace_start"() <{level = 10 : i32, message = "znm,zmd->znd"}> : () -> ()
    %cst_16 = arith.constant dense<0.000000e+00> : vector<8x16x32xf32>
    %60 = tpu.matmul %59, %47, %cst_16 {dimension_numbers = #tpu.dot_dimension_numbers<[2], [1], [1], [2], [0, 0, 0, 1, 1, 2], [0], [0]>} : vector<8x16x16xbf16>, vector<8x16x32xbf16>, vector<8x16x32xf32> -> vector<8x16x32xf32>
    "tpu.trace_stop"() : () -> ()
    %61 = vector.shape_cast %60 : vector<8x16x32xf32> to vector<4x32x32xf32>
    %62 = tpu.transpose %61, [1, 0, 2] : vector<4x32x32xf32> -> vector<32x4x32xf32>
    %63 = vector.shape_cast %62 : vector<32x4x32xf32> to vector<32x128xf32>
    %64 = arith.truncf %63 : vector<32x128xf32> to vector<32x128xbf16>
    %c0_17 = arith.constant 0 : index
    %c0_18 = arith.constant 0 : index
    %65 = vector.load %arg5[%c0_17, %c0_18] : memref<128x128xbf16, #tpu.memory_space<vmem>>, vector<128x128xbf16>
    %cst_19 = arith.constant dense<0.000000e+00> : vector<32x128xf32>
    %66 = tpu.matmul %64, %65, %cst_19 {dimension_numbers = #tpu.dot_dimension_numbers<[1], [0], [0], [1], [0, 0, 1, 1], [], []>} : vector<32x128xbf16>, vector<128x128xbf16>, vector<32x128xf32> -> vector<32x128xf32>
    %c0_20 = arith.constant 0 : index
    %c0_21 = arith.constant 0 : index
    %67 = vector.load %arg6[%c0_20, %c0_21] : memref<1x128xf32, #tpu.memory_space<vmem>>, vector<1x128xf32>
    %68 = vector.shape_cast %67 : vector<1x128xf32> to vector<128xf32>
    %69 = vector.shape_cast %68 : vector<128xf32> to vector<1x128xf32>
    %70 = vector.broadcast %69 : vector<1x128xf32> to vector<32x128xf32>
    %71 = arith.addf %66, %70 : vector<32x128xf32>
    %72 = arith.addf %1, %71 : vector<32x128xf32>
    %c0_22 = arith.constant 0 : index
    %c0_23 = arith.constant 0 : index
    %73 = vector.load %arg7[%c0_22, %c0_23] : memref<1x128xf32, #tpu.memory_space<vmem>>, vector<1x128xf32>
    %74 = vector.shape_cast %73 : vector<1x128xf32> to vector<128xf32>
    %c0_24 = arith.constant 0 : index
    %c0_25 = arith.constant 0 : index
    %75 = vector.load %arg8[%c0_24, %c0_25] : memref<1x128xf32, #tpu.memory_space<vmem>>, vector<1x128xf32>
    %76 = vector.shape_cast %75 : vector<1x128xf32> to vector<128xf32>
    %cst_26 = arith.constant dense<0.000000e+00> : vector<32xf32>
    %77 = vector.multi_reduction <add>, %72, %cst_26 [1] : vector<32x128xf32> to vector<32xf32>
    %78 = vector.shape_cast %77 : vector<32xf32> to vector<32x1xf32>
    %cst_27 = arith.constant 1.280000e+02 : f32
    %79 = vector.broadcast %cst_27 : f32 to vector<32x1xf32>
    %80 = arith.divf %78, %79 : vector<32x1xf32>
    %81 = vector.broadcast %80 : vector<32x1xf32> to vector<32x128xf32>
    %82 = arith.subf %72, %81 : vector<32x128xf32>
    %83 = arith.mulf %82, %82 : vector<32x128xf32>
    %cst_28 = arith.constant dense<0.000000e+00> : vector<32xf32>
    %84 = vector.multi_reduction <add>, %83, %cst_28 [1] : vector<32x128xf32> to vector<32xf32>
    %85 = vector.shape_cast %84 : vector<32xf32> to vector<32x1xf32>
    %cst_29 = arith.constant 1.280000e+02 : f32
    %86 = vector.broadcast %cst_29 : f32 to vector<32x1xf32>
    %87 = arith.divf %85, %86 : vector<32x1xf32>
    %88 = vector.broadcast %80 : vector<32x1xf32> to vector<32x128xf32>
    %89 = arith.subf %72, %88 : vector<32x128xf32>
    %cst_30 = arith.constant 9.99999974E-6 : f32
    %90 = vector.broadcast %cst_30 : f32 to vector<32x1xf32>
    %91 = arith.addf %87, %90 : vector<32x1xf32>
    %92 = math.rsqrt %91 : vector<32x1xf32>
    %93 = vector.broadcast %92 : vector<32x1xf32> to vector<32x128xf32>
    %94 = arith.mulf %89, %93 : vector<32x128xf32>
    %95 = vector.shape_cast %74 : vector<128xf32> to vector<1x128xf32>
    %96 = vector.broadcast %95 : vector<1x128xf32> to vector<32x128xf32>
    %97 = arith.mulf %94, %96 : vector<32x128xf32>
    %98 = vector.shape_cast %76 : vector<128xf32> to vector<1x128xf32>
    %99 = vector.broadcast %98 : vector<1x128xf32> to vector<32x128xf32>
    %100 = arith.addf %97, %99 : vector<32x128xf32>
    %101 = arith.truncf %100 : vector<32x128xf32> to vector<32x128xbf16>
    %c0_31 = arith.constant 0 : index
    %c0_32 = arith.constant 0 : index
    %102 = vector.load %arg9[%c0_31, %c0_32] : memref<128x512xbf16, #tpu.memory_space<vmem>>, vector<128x512xbf16>
    %cst_33 = arith.constant dense<0.000000e+00> : vector<32x512xf32>
    %103 = tpu.matmul %101, %102, %cst_33 {dimension_numbers = #tpu.dot_dimension_numbers<[1], [0], [0], [1], [0, 0, 1, 1], [], []>} : vector<32x128xbf16>, vector<128x512xbf16>, vector<32x512xf32> -> vector<32x512xf32>
    %c0_34 = arith.constant 0 : index
    %c0_35 = arith.constant 0 : index
    %104 = vector.load %arg10[%c0_34, %c0_35] : memref<1x512xf32, #tpu.memory_space<vmem>>, vector<1x512xf32>
    %105 = vector.shape_cast %104 : vector<1x512xf32> to vector<512xf32>
    %106 = vector.shape_cast %105 : vector<512xf32> to vector<1x512xf32>
    %107 = vector.broadcast %106 : vector<1x512xf32> to vector<32x512xf32>
    %108 = arith.addf %103, %107 : vector<32x512xf32>
    %cst_36 = arith.constant 5.000000e-01 : f32
    %109 = vector.broadcast %cst_36 : f32 to vector<32x512xf32>
    %110 = arith.mulf %109, %108 : vector<32x512xf32>
    %cst_37 = arith.constant 0.707106769 : f32
    %111 = vector.broadcast %cst_37 : f32 to vector<32x512xf32>
    %112 = arith.mulf %108, %111 : vector<32x512xf32>
    %113 = math.erf %112 : vector<32x512xf32>
    %cst_38 = arith.constant 1.000000e+00 : f32
    %114 = vector.broadcast %cst_38 : f32 to vector<32x512xf32>
    %115 = arith.addf %114, %113 : vector<32x512xf32>
    %116 = arith.mulf %110, %115 : vector<32x512xf32>
    %117 = arith.truncf %116 : vector<32x512xf32> to vector<32x512xbf16>
    %c0_39 = arith.constant 0 : index
    %c0_40 = arith.constant 0 : index
    %118 = vector.load %arg11[%c0_39, %c0_40] : memref<512x128xbf16, #tpu.memory_space<vmem>>, vector<512x128xbf16>
    %cst_41 = arith.constant dense<0.000000e+00> : vector<32x128xf32>
    %119 = tpu.matmul %117, %118, %cst_41 {dimension_numbers = #tpu.dot_dimension_numbers<[1], [0], [0], [1], [0, 0, 1, 1], [], []>} : vector<32x512xbf16>, vector<512x128xbf16>, vector<32x128xf32> -> vector<32x128xf32>
    %c0_42 = arith.constant 0 : index
    %c0_43 = arith.constant 0 : index
    %120 = vector.load %arg12[%c0_42, %c0_43] : memref<1x128xf32, #tpu.memory_space<vmem>>, vector<1x128xf32>
    %121 = vector.shape_cast %120 : vector<1x128xf32> to vector<128xf32>
    %122 = vector.shape_cast %121 : vector<128xf32> to vector<1x128xf32>
    %123 = vector.broadcast %122 : vector<1x128xf32> to vector<32x128xf32>
    %124 = arith.addf %119, %123 : vector<32x128xf32>
    %125 = arith.addf %72, %124 : vector<32x128xf32>
    %126 = vector.shape_cast %125 : vector<32x128xf32> to vector<2x16x128xf32>
    %c0_44 = arith.constant 0 : index
    %c0_45 = arith.constant 0 : index
    %c0_46 = arith.constant 0 : index
    %127 = vector.load %arg13[%c0_44, %c0_45, %c0_46] : memref<2x16x128xf32, #tpu.memory_space<vmem>>, vector<2x16x128xf32>
    tpu.vector_store %arg13[%c0_44, %c0_45, %c0_46], %126 {strides = array<i32>} : memref<2x16x128xf32, #tpu.memory_space<vmem>>, vector<2x16x128xf32>,
    return
  }
  func.func @transform_0(%arg0: i32) -> (i32, i32, i32) {
    %c0_i32 = arith.constant 0 : i32
    %c0_i32_0 = arith.constant 0 : i32
    %c0_i32_1 = arith.constant 0 : i32
    return %arg0, %c0_i32, %c0_i32_0 : i32, i32, i32
  }
  func.func @transform_1(%arg0: i32) -> (i32, i32) {
    %c0_i32 = arith.constant 0 : i32
    %c0_i32_0 = arith.constant 0 : i32
    %c0_i32_1 = arith.constant 0 : i32
    return %c0_i32, %c0_i32_0 : i32, i32
  }
  func.func @transform_2(%arg0: i32) -> (i32, i32) {
    %c0_i32 = arith.constant 0 : i32
    %c0_i32_0 = arith.constant 0 : i32
    %c0_i32_1 = arith.constant 0 : i32
    return %c0_i32, %c0_i32_0 : i32, i32
  }
  func.func @transform_3(%arg0: i32) -> (i32, i32) {
    %c0_i32 = arith.constant 0 : i32
    %c0_i32_0 = arith.constant 0 : i32
    %c0_i32_1 = arith.constant 0 : i32
    return %c0_i32, %c0_i32_0 : i32, i32
  }
  func.func @transform_4(%arg0: i32) -> (i32, i32) {
    %c0_i32 = arith.constant 0 : i32
    %c0_i32_0 = arith.constant 0 : i32
    %c0_i32_1 = arith.constant 0 : i32
    return %c0_i32, %c0_i32_0 : i32, i32
  }
  func.func @transform_5(%arg0: i32) -> (i32, i32) {
    %c0_i32 = arith.constant 0 : i32
    %c0_i32_0 = arith.constant 0 : i32
    %c0_i32_1 = arith.constant 0 : i32
    return %c0_i32, %c0_i32_0 : i32, i32
  }
  func.func @transform_6(%arg0: i32) -> (i32, i32) {
    %c0_i32 = arith.constant 0 : i32
    %c0_i32_0 = arith.constant 0 : i32
    %c0_i32_1 = arith.constant 0 : i32
    return %c0_i32, %c0_i32_0 : i32, i32
  }
  func.func @transform_7(%arg0: i32) -> (i32, i32) {
    %c0_i32 = arith.constant 0 : i32
    %c0_i32_0 = arith.constant 0 : i32
    %c0_i32_1 = arith.constant 0 : i32
    return %c0_i32, %c0_i32_0 : i32, i32
  }
  func.func @transform_8(%arg0: i32) -> (i32, i32) {
    %c0_i32 = arith.constant 0 : i32
    %c0_i32_0 = arith.constant 0 : i32
    %c0_i32_1 = arith.constant 0 : i32
    return %c0_i32, %c0_i32_0 : i32, i32
  }
  func.func @transform_9(%arg0: i32) -> (i32, i32) {
    %c0_i32 = arith.constant 0 : i32
    %c0_i32_0 = arith.constant 0 : i32
    %c0_i32_1 = arith.constant 0 : i32
    return %c0_i32, %c0_i32_0 : i32, i32
  }
  func.func @transform_10(%arg0: i32) -> (i32, i32) {
    %c0_i32 = arith.constant 0 : i32
    %c0_i32_0 = arith.constant 0 : i32
    %c0_i32_1 = arith.constant 0 : i32
    return %c0_i32, %c0_i32_0 : i32, i32
  }
  func.func @transform_11(%arg0: i32) -> (i32, i32) {
    %c0_i32 = arith.constant 0 : i32
    %c0_i32_0 = arith.constant 0 : i32
    %c0_i32_1 = arith.constant 0 : i32
    return %c0_i32, %c0_i32_0 : i32, i32
  }
  func.func @transform_12(%arg0: i32) -> (i32, i32, i32) {
    %c0_i32 = arith.constant 0 : i32
    %c0_i32_0 = arith.constant 0 : i32
    %c0_i32_1 = arith.constant 0 : i32
    return %arg0, %c0_i32, %c0_i32_0 : i32, i32, i32
  }
}

</mosaic_0001>

<llo_original>
// kernel: tpu_custom_call.1
$region0: #{tpu_custom_call.1}
  #allocation0 [shape = 'u32[]', space=smem, size = 0x4, offset = 0x4, fixed_abs, tag = 'smem constant byte address 0x4 - core index']
  #allocation1 [shape = 'u32[144,128]{1,0:T(1,128)}', space=vmem, size = 0x12000, scoped, tag = 'internal scratch']
  %s0 = inlined_call_operand.hbm [shape: f32[4,16,128], index: 0, kind: input, shape index: {}]
  %s1 = inlined_call_operand.vmem [shape: f32[1,128], index: 1, kind: input, shape index: {}]
  %s2 = inlined_call_operand.vmem [shape: f32[1,128], index: 2, kind: input, shape index: {}]
  %s3 = inlined_call_operand.hbm [shape: bf16[128,384], index: 3, kind: input, shape index: {}]
  %s4 = inlined_call_operand.hbm [shape: bf16[128,128], index: 4, kind: input, shape index: {}]
  %s5 = inlined_call_operand.vmem [shape: f32[1,128], index: 5, kind: input, shape index: {}]
  %s6 = inlined_call_operand.vmem [shape: f32[1,128], index: 6, kind: input, shape index: {}]
  %s7 = inlined_call_operand.vmem [shape: f32[1,128], index: 7, kind: input, shape index: {}]
  %s8 = inlined_call_operand.hbm [shape: bf16[128,512], index: 8, kind: input, shape index: {}]
  %s9 = inlined_call_operand.vmem [shape: f32[1,512], index: 9, kind: input, shape index: {}]
  %s10 = inlined_call_operand.hbm [shape: bf16[512,128], index: 10, kind: input, shape index: {}]
  %s11 = inlined_call_operand.vmem [shape: f32[1,128], index: 11, kind: input, shape index: {}]
  %s12 = inlined_call_operand.hbm [shape: f32[4,16,128], index: 12, kind: output, shape index: {}]
  %s13 = sld [smem:[#allocation0]]
  $region101: #{tpu_custom_call.1} parent=0
    _
  %s15 = ssub.s32 1, %s13
  %s16 = scalar_select 0, %s15, %s13
  $region1: #{tpu_custom_call.1} parent=0
    #allocation2 [shape = 'u8[32768]{0}', space=vmem, size = 0x8000, scoped, tag = 'input window, operand 0']
    #allocation3 [shape = 's32[2]{0}', space=sflag, size = 0x8, scoped, tag = 'scoped memory for tpu_custom_call.1']
    #allocation4 [shape = 's32[2]{0}', space=sflag, size = 0x8, scoped, tag = 'scoped memory for tpu_custom_call.1']
    #allocation5 [shape = 'u8[98304]{0}', space=vmem, size = 0x18000, scoped, tag = 'input window, operand 3, single buffered']
    #allocation6 [shape = 's32[1]{0}', space=sflag, size = 0x4, scoped, tag = 'scoped memory for tpu_custom_call.1']
    #allocation7 [shape = 'u8[32768]{0}', space=vmem, size = 0x8000, scoped, tag = 'input window, operand 4, single buffered']
    #allocation8 [shape = 'u8[131072]{0}', space=vmem, size = 0x20000, scoped, tag = 'input window, operand 8, single buffered']
    #allocation9 [shape = 's32[1]{0}', space=sflag, size = 0x4, scoped, tag = 'scoped memory for tpu_custom_call.1']
    #allocation10 [shape = 'u8[131072]{0}', space=vmem, size = 0x20000, scoped, tag = 'input window, operand 10, single buffered']
    #allocation11 [shape = 'u8[32768]{0}', space=vmem, size = 0x8000, scoped, tag = 'output window, operand 0']
    %17 = vsyncpa [#allocation3], 0
    %s18 = scalar_lea.sflag [#allocation3], 1
    %19 = vsyncpa %s18, 0
    %20 = vsyncpa [#allocation6], 0
    %21 = vsyncpa [#allocation9], 0
    %22 = vsyncpa [#allocation4], 0
    %s23 = scalar_lea.sflag [#allocation4], 1
    %24 = vsyncpa %s23, 0
    loop: start=0, step=1, limit=4
    $region2: #{tpu_custom_call.1} parent=1 // loop_pre_header
      _
    $region3: #{tpu_custom_call.1} parent=1 // loop_header
      %s26 = sphi 0, %s30
      %p27 = scmp.ge.s32.totalorder %s26, 4
      %s36 = sphi 0, %s38
      %s39 = sphi 0, %s36
      %s40 = sphi 0, %s39
      %s56 = sphi 0, %s40
      %s60 = sphi 0, %s60
      %s62 = sphi 0, %s60
      %s63 = sphi 0, %s62
      %s77 = sphi 0, %s63
      %s81 = sphi 0, %s81
      %s83 = sphi 0, %s81
      %s84 = sphi 0, %s83
      %s98 = sphi 0, %s84
      %s102 = sphi 0, %s102
      %s104 = sphi 0, %s102
      %s105 = sphi 0, %s104
      %s119 = sphi 0, %s105
      %s123 = sphi 0, %s123
      %s125 = sphi 0, %s123
      %s126 = sphi 0, %s125
      %s140 = sphi 0, %s126
      %s144 = sphi 0, %s144
      %s146 = sphi 0, %s144
      %s147 = sphi 0, %s146
      %s161 = sphi 0, %s147
      %s165 = sphi 0, %s165
      %s167 = sphi 0, %s165
      %s168 = sphi 0, %s167
      %s182 = sphi 0, %s168
      %s186 = sphi 0, %s186
      %s188 = sphi 0, %s186
      %s189 = sphi 0, %s188
      %s203 = sphi 0, %s189
      %s207 = sphi 0, %s207
      %s209 = sphi 0, %s207
      %s210 = sphi 0, %s209
      %s224 = sphi 0, %s210
      %s228 = sphi 0, %s228
      %s230 = sphi 0, %s228
      %s231 = sphi 0, %s230
      %s245 = sphi 0, %s231
      %s249 = sphi 0, %s249
      %s251 = sphi 0, %s249
      %s252 = sphi 0, %s251
      %s266 = sphi 0, %s252
      %s270 = sphi 0, %s270
      %s272 = sphi 0, %s270
      %s273 = sphi 0, %s272
      %s287 = sphi 0, %s273
      %s293 = sphi 0, %s295
      %s296 = sphi 0, %s293
      %s297 = sphi 0, %s296
      %s313 = sphi 0, %s297
    $region4: #{tpu_custom_call.1} parent=1 // loop_header_branch
      %29 = sbr.rel (%p27) target = $region8
    $region5: #{tpu_custom_call.1} parent=1 // loop_body
      %s31 = ssub.s32 %s26, 1
      %s32 = ssub.s32 %s26, 2
      %s33 = sadd.s32 %s26, 1
      %s34 = ssub.s32 %s26, %s33
      %p35 = scmp.eq.s32.totalorder %s34, 0
      %s37 = sadd.s32 %s36, 1
      %s38 = scalar_select %p35, %s36, %s37
      %p41 = pneg %p35
      %p42 = scmp.eq.s32.totalorder %s26, 1
      %p43 = por %p41, %p42
      %p44 = scmp.ne.s32.totalorder %s36, %s39
      %p45 = scmp.eq.s32.totalorder %s26, 0
      %p46 = por %p44, %p45
      %p47 = scmp.ne.s32.totalorder %s36, %s39
      %p48 = scmp.eq.s32.totalorder %s31, 1
      %p49 = por %p47, %p48
      %p50 = scmp.ne.s32.totalorder %s39, %s40
      %p51 = scmp.eq.s32.totalorder %s31, 0
      %p52 = por %p50, %p51
      %p53 = scmp.ne.s32.totalorder %s39, %s40
      %p54 = scmp.eq.s32.totalorder %s32, 1
      %p55 = por %p53, %p54
      %p57 = scmp.ne.s32.totalorder %s40, %s56
      %p58 = scmp.eq.s32.totalorder %s32, 0
      %p59 = por %p57, %p58
      %s61 = sadd.s32 %s60, 1
      %p64 = scmp.eq.s32.totalorder %s26, 1
      %p65 = scmp.ne.s32.totalorder %s60, %s62
      %p66 = scmp.eq.s32.totalorder %s26, 0
      %p67 = por %p65, %p66
      %p68 = scmp.ne.s32.totalorder %s60, %s62
      %p69 = scmp.eq.s32.totalorder %s31, 1
      %p70 = por %p68, %p69
      %p71 = scmp.ne.s32.totalorder %s62, %s63
      %p72 = scmp.eq.s32.totalorder %s31, 0
      %p73 = por %p71, %p72
      %p74 = scmp.ne.s32.totalorder %s62, %s63
      %p75 = scmp.eq.s32.totalorder %s32, 1
      %p76 = por %p74, %p75
      %p78 = scmp.ne.s32.totalorder %s63, %s77
      %p79 = scmp.eq.s32.totalorder %s32, 0
      %p80 = por %p78, %p79
      %s82 = sadd.s32 %s81, 1
      %p85 = scmp.eq.s32.totalorder %s26, 1
      %p86 = scmp.ne.s32.totalorder %s81, %s83
      %p87 = scmp.eq.s32.totalorder %s26, 0
      %p88 = por %p86, %p87
      %p89 = scmp.ne.s32.totalorder %s81, %s83
      %p90 = scmp.eq.s32.totalorder %s31, 1
      %p91 = por %p89, %p90
      %p92 = scmp.ne.s32.totalorder %s83, %s84
      %p93 = scmp.eq.s32.totalorder %s31, 0
      %p94 = por %p92, %p93
      %p95 = scmp.ne.s32.totalorder %s83, %s84
      %p96 = scmp.eq.s32.totalorder %s32, 1
      %p97 = por %p95, %p96
      %p99 = scmp.ne.s32.totalorder %s84, %s98
      %p100 = scmp.eq.s32.totalorder %s32, 0
      %p101 = por %p99, %p100
      %s103 = sadd.s32 %s102, 1
      %p106 = scmp.eq.s32.totalorder %s26, 1
      %p107 = scmp.ne.s32.totalorder %s102, %s104
      %p108 = scmp.eq.s32.totalorder %s26, 0
      %p109 = por %p107, %p108
      %p110 = scmp.ne.s32.totalorder %s102, %s104
      %p111 = scmp.eq.s32.totalorder %s31, 1
      %p112 = por %p110, %p111
      %p113 = scmp.ne.s32.totalorder %s104, %s105
      %p114 = scmp.eq.s32.totalorder %s31, 0
      %p115 = por %p113, %p114
      %p116 = scmp.ne.s32.totalorder %s104, %s105
      %p117 = scmp.eq.s32.totalorder %s32, 1
      %p118 = por %p116, %p117
      %p120 = scmp.ne.s32.totalorder %s105, %s119
      %p121 = scmp.eq.s32.totalorder %s32, 0
      %p122 = por %p120, %p121
      %s124 = sadd.s32 %s123, 1
      %p127 = scmp.eq.s32.totalorder %s26, 1
      %p128 = scmp.ne.s32.totalorder %s123, %s125
      %p129 = scmp.eq.s32.totalorder %s26, 0
      %p130 = por %p128, %p129
      %p131 = scmp.ne.s32.totalorder %s123, %s125
      %p132 = scmp.eq.s32.totalorder %s31, 1
      %p133 = por %p131, %p132
      %p134 = scmp.ne.s32.totalorder %s125, %s126
      %p135 = scmp.eq.s32.totalorder %s31, 0
      %p136 = por %p134, %p135
      %p137 = scmp.ne.s32.totalorder %s125, %s126
      %p138 = scmp.eq.s32.totalorder %s32, 1
      %p139 = por %p137, %p138
      %p141 = scmp.ne.s32.totalorder %s126, %s140
      %p142 = scmp.eq.s32.totalorder %s32, 0
      %p143 = por %p141, %p142
      %s145 = sadd.s32 %s144, 1
      %p148 = scmp.eq.s32.totalorder %s26, 1
      %p149 = scmp.ne.s32.totalorder %s144, %s146
      %p150 = scmp.eq.s32.totalorder %s26, 0
      %p151 = por %p149, %p150
      %p152 = scmp.ne.s32.totalorder %s144, %s146
      %p153 = scmp.eq.s32.totalorder %s31, 1
      %p154 = por %p152, %p153
      %p155 = scmp.ne.s32.totalorder %s146, %s147
      %p156 = scmp.eq.s32.totalorder %s31, 0
      %p157 = por %p155, %p156
      %p158 = scmp.ne.s32.totalorder %s146, %s147
      %p159 = scmp.eq.s32.totalorder %s32, 1
      %p160 = por %p158, %p159
      %p162 = scmp.ne.s32.totalorder %s147, %s161
      %p163 = scmp.eq.s32.totalorder %s32, 0
      %p164 = por %p162, %p163
      %s166 = sadd.s32 %s165, 1
      %p169 = scmp.eq.s32.totalorder %s26, 1
      %p170 = scmp.ne.s32.totalorder %s165, %s167
      %p171 = scmp.eq.s32.totalorder %s26, 0
      %p172 = por %p170, %p171
      %p173 = scmp.ne.s32.totalorder %s165, %s167
      %p174 = scmp.eq.s32.totalorder %s31, 1
      %p175 = por %p173, %p174
      %p176 = scmp.ne.s32.totalorder %s167, %s168
      %p177 = scmp.eq.s32.totalorder %s31, 0
      %p178 = por %p176, %p177
      %p179 = scmp.ne.s32.totalorder %s167, %s168
      %p180 = scmp.eq.s32.totalorder %s32, 1
      %p181 = por %p179, %p180
      %p183 = scmp.ne.s32.totalorder %s168, %s182
      %p184 = scmp.eq.s32.totalorder %s32, 0
      %p185 = por %p183, %p184
      %s187 = sadd.s32 %s186, 1
      %p190 = scmp.eq.s32.totalorder %s26, 1
      %p191 = scmp.ne.s32.totalorder %s186, %s188
      %p192 = scmp.eq.s32.totalorder %s26, 0
      %p193 = por %p191, %p192
      %p194 = scmp.ne.s32.totalorder %s186, %s188
      %p195 = scmp.eq.s32.totalorder %s31, 1
      %p196 = por %p194, %p195
      %p197 = scmp.ne.s32.totalorder %s188, %s189
      %p198 = scmp.eq.s32.totalorder %s31, 0
      %p199 = por %p197, %p198
      %p200 = scmp.ne.s32.totalorder %s188, %s189
      %p201 = scmp.eq.s32.totalorder %s32, 1
      %p202 = por %p200, %p201
      %p204 = scmp.ne.s32.totalorder %s189, %s203
      %p205 = scmp.eq.s32.totalorder %s32, 0
      %p206 = por %p204, %p205
      %s208 = sadd.s32 %s207, 1
      %p211 = scmp.eq.s32.totalorder %s26, 1
      %p212 = scmp.ne.s32.totalorder %s207, %s209
      %p213 = scmp.eq.s32.totalorder %s26, 0
      %p214 = por %p212, %p213
      %p215 = scmp.ne.s32.totalorder %s207, %s209
      %p216 = scmp.eq.s32.totalorder %s31, 1
      %p217 = por %p215, %p216
      %p218 = scmp.ne.s32.totalorder %s209, %s210
      %p219 = scmp.eq.s32.totalorder %s31, 0
      %p220 = por %p218, %p219
      %p221 = scmp.ne.s32.totalorder %s209, %s210
      %p222 = scmp.eq.s32.totalorder %s32, 1
      %p223 = por %p221, %p222
      %p225 = scmp.ne.s32.totalorder %s210, %s224
      %p226 = scmp.eq.s32.totalorder %s32, 0
      %p227 = por %p225, %p226
      %s229 = sadd.s32 %s228, 1
      %p232 = scmp.eq.s32.totalorder %s26, 1
      %p233 = scmp.ne.s32.totalorder %s228, %s230
      %p234 = scmp.eq.s32.totalorder %s26, 0
      %p235 = por %p233, %p234
      %p236 = scmp.ne.s32.totalorder %s228, %s230
      %p237 = scmp.eq.s32.totalorder %s31, 1
      %p238 = por %p236, %p237
      %p239 = scmp.ne.s32.totalorder %s230, %s231
      %p240 = scmp.eq.s32.totalorder %s31, 0
      %p241 = por %p239, %p240
      %p242 = scmp.ne.s32.totalorder %s230, %s231
      %p243 = scmp.eq.s32.totalorder %s32, 1
      %p244 = por %p242, %p243
      %p246 = scmp.ne.s32.totalorder %s231, %s245
      %p247 = scmp.eq.s32.totalorder %s32, 0
      %p248 = por %p246, %p247
      %s250 = sadd.s32 %s249, 1
      %p253 = scmp.eq.s32.totalorder %s26, 1
      %p254 = scmp.ne.s32.totalorder %s249, %s251
      %p255 = scmp.eq.s32.totalorder %s26, 0
      %p256 = por %p254, %p255
      %p257 = scmp.ne.s32.totalorder %s249, %s251
      %p258 = scmp.eq.s32.totalorder %s31, 1
      %p259 = por %p257, %p258
      %p260 = scmp.ne.s32.totalorder %s251, %s252
      %p261 = scmp.eq.s32.totalorder %s31, 0
      %p262 = por %p260, %p261
      %p263 = scmp.ne.s32.totalorder %s251, %s252
      %p264 = scmp.eq.s32.totalorder %s32, 1
      %p265 = por %p263, %p264
      %p267 = scmp.ne.s32.totalorder %s252, %s266
      %p268 = scmp.eq.s32.totalorder %s32, 0
      %p269 = por %p267, %p268
      %s271 = sadd.s32 %s270, 1
      %p274 = scmp.eq.s32.totalorder %s26, 1
      %p275 = scmp.ne.s32.totalorder %s270, %s272
      %p276 = scmp.eq.s32.totalorder %s26, 0
      %p277 = por %p275, %p276
      %p278 = scmp.ne.s32.totalorder %s270, %s272
      %p279 = scmp.eq.s32.totalorder %s31, 1
      %p280 = por %p278, %p279
      %p281 = scmp.ne.s32.totalorder %s272, %s273
      %p282 = scmp.eq.s32.totalorder %s31, 0
      %p283 = por %p281, %p282
      %p284 = scmp.ne.s32.totalorder %s272, %s273
      %p285 = scmp.eq.s32.totalorder %s32, 1
      %p286 = por %p284, %p285
      %p288 = scmp.ne.s32.totalorder %s273, %s287
      %p289 = scmp.eq.s32.totalorder %s32, 0
      %p290 = por %p288, %p289
      %s291 = ssub.s32 %s26, %s33
      %p292 = scmp.eq.s32.totalorder %s291, 0
      %s294 = sadd.s32 %s293, 1
      %s295 = scalar_select %p292, %s293, %s294
      %p298 = pneg %p292
      %p299 = scmp.eq.s32.totalorder %s26, 1
      %p300 = por %p298, %p299
      %p301 = scmp.ne.s32.totalorder %s293, %s296
      %p302 = scmp.eq.s32.totalorder %s26, 0
      %p303 = por %p301, %p302
      %p304 = scmp.ne.s32.totalorder %s293, %s296
      %p305 = scmp.eq.s32.totalorder %s31, 1
      %p306 = por %p304, %p305
      %p307 = scmp.ne.s32.totalorder %s296, %s297
      %p308 = scmp.eq.s32.totalorder %s31, 0
      %p309 = por %p307, %p308
      %p310 = scmp.ne.s32.totalorder %s296, %s297
      %p311 = scmp.eq.s32.totalorder %s32, 1
      %p312 = por %p310, %p311
      %p314 = scmp.ne.s32.totalorder %s297, %s313
      %p315 = scmp.eq.s32.totalorder %s32, 0
      %p316 = por %p314, %p315
      %p317 = scmp.le.s32.totalorder 1, %s26
      %p318 = scmp.lt.s32.totalorder %s26, 3
      %p319 = pnand %p317, %p318
      %p320 = pneg %p319
      // Predicated region
      $region9: #{tpu_custom_call.1} parent=5 // pred_check
        _
      $region10: #{tpu_custom_call.1} parent=5 // pred_check_branch
        %322 = sbr.rel (%p319) target = $region12
      $region11: #{tpu_custom_call.1} parent=5 // pred_region
        %s323 = ssub.s32 %s26, 1
        // Predicated region
        $region13: #{tpu_custom_call.1} parent=11 // pred_check
          %p324 = pneg %p73
        $region14: #{tpu_custom_call.1} parent=11 // pred_check_branch
          %326 = sbr.rel (%p324) target = $region16
        $region15: #{tpu_custom_call.1} parent=11 // pred_region
          _
        $region16: #{tpu_custom_call.1} parent=11 // pred_fallthru
          _
        // Predicated region
        $region17: #{tpu_custom_call.1} parent=11 // pred_check
          %p327 = pneg %p94
        $region18: #{tpu_custom_call.1} parent=11 // pred_check_branch
          %329 = sbr.rel (%p327) target = $region20
        $region19: #{tpu_custom_call.1} parent=11 // pred_region
          _
        $region20: #{tpu_custom_call.1} parent=11 // pred_fallthru
          _
        // Predicated region
        $region21: #{tpu_custom_call.1} parent=11 // pred_check
          %p330 = pneg %p115
        $region22: #{tpu_custom_call.1} parent=11 // pred_check_branch
          %332 = sbr.rel (%p330) target = $region24
        $region23: #{tpu_custom_call.1} parent=11 // pred_region
          %s334 = ssub.s32 3072, 3072
          %335 = vsyncadd [#allocation6], %s334
          %s336 = sshll.u32 [#allocation5], 4
          %s337 = int_to_ptr.vmem [resolvable:$true] %s336
          %342 = dma.hbm_to_vmem [thread:$0]  %s3, 3072, %s337, [#allocation6], 192, 192, 12
        $region24: #{tpu_custom_call.1} parent=11 // pred_fallthru
          _
        // Predicated region
        $region25: #{tpu_custom_call.1} parent=11 // pred_check
          %p343 = pneg %p136
        $region26: #{tpu_custom_call.1} parent=11 // pred_check_branch
          %345 = sbr.rel (%p343) target = $region28
        $region27: #{tpu_custom_call.1} parent=11 // pred_region
          %s347 = ssub.s32 1024, 1024
          %348 = vsyncadd [#allocation6], %s347
          %s349 = sshll.u32 [#allocation7], 4
          %s350 = int_to_ptr.vmem [resolvable:$true] %s349
          %355 = dma.hbm_to_vmem [thread:$0]  %s4, 1024, %s350, [#allocation6], 64, 64, 4
        $region28: #{tpu_custom_call.1} parent=11 // pred_fallthru
          _
        // Predicated region
        $region29: #{tpu_custom_call.1} parent=11 // pred_check
          %p356 = pneg %p157
        $region30: #{tpu_custom_call.1} parent=11 // pred_check_branch
          %358 = sbr.rel (%p356) target = $region32
        $region31: #{tpu_custom_call.1} parent=11 // pred_region
          _
        $region32: #{tpu_custom_call.1} parent=11 // pred_fallthru
          _
        // Predicated region
        $region33: #{tpu_custom_call.1} parent=11 // pred_check
          %p359 = pneg %p178
        $region34: #{tpu_custom_call.1} parent=11 // pred_check_branch
          %361 = sbr.rel (%p359) target = $region36
        $region35: #{tpu_custom_call.1} parent=11 // pred_region
          _
        $region36: #{tpu_custom_call.1} parent=11 // pred_fallthru
          _
        // Predicated region
        $region37: #{tpu_custom_call.1} parent=11 // pred_check
          %p362 = pneg %p199
        $region38: #{tpu_custom_call.1} parent=11 // pred_check_branch
          %364 = sbr.rel (%p362) target = $region40
        $region39: #{tpu_custom_call.1} parent=11 // pred_region
          _
        $region40: #{tpu_custom_call.1} parent=11 // pred_fallthru
          _
        // Predicated region
        $region41: #{tpu_custom_call.1} parent=11 // pred_check
          %p365 = pneg %p220
        $region42: #{tpu_custom_call.1} parent=11 // pred_check_branch
          %367 = sbr.rel (%p365) target = $region44
        $region43: #{tpu_custom_call.1} parent=11 // pred_region
          %s369 = ssub.s32 4096, 4096
          %370 = vsyncadd [#allocation9], %s369
          %s371 = sshll.u32 [#allocation8], 4
          %s372 = int_to_ptr.vmem [resolvable:$true] %s371
          %377 = dma.hbm_to_vmem [thread:$0]  %s8, 4096, %s372, [#allocation9], 256, 256, 16
        $region44: #{tpu_custom_call.1} parent=11 // pred_fallthru
          _
        // Predicated region
        $region45: #{tpu_custom_call.1} parent=11 // pred_check
          %p378 = pneg %p241
        $region46: #{tpu_custom_call.1} parent=11 // pred_check_branch
          %380 = sbr.rel (%p378) target = $region48
        $region47: #{tpu_custom_call.1} parent=11 // pred_region
          _
        $region48: #{tpu_custom_call.1} parent=11 // pred_fallthru
          _
        // Predicated region
        $region49: #{tpu_custom_call.1} parent=11 // pred_check
          %p381 = pneg %p262
        $region50: #{tpu_custom_call.1} parent=11 // pred_check_branch
          %383 = sbr.rel (%p381) target = $region52
        $region51: #{tpu_custom_call.1} parent=11 // pred_region
          %s385 = ssub.s32 4096, 4096
          %386 = vsyncadd [#allocation9], %s385
          %s387 = sshll.u32 [#allocation10], 4
          %s388 = int_to_ptr.vmem [resolvable:$true] %s387
          %393 = dma.hbm_to_vmem [thread:$0]  %s10, 4096, %s388, [#allocation9], 64, 64, 4
        $region52: #{tpu_custom_call.1} parent=11 // pred_fallthru
          _
        // Predicated region
        $region53: #{tpu_custom_call.1} parent=11 // pred_check
          %p394 = pneg %p283
        $region54: #{tpu_custom_call.1} parent=11 // pred_check_branch
          %396 = sbr.rel (%p394) target = $region56
        $region55: #{tpu_custom_call.1} parent=11 // pred_region
          _
        $region56: #{tpu_custom_call.1} parent=11 // pred_fallthru
          _
      $region12: #{tpu_custom_call.1} parent=5 // pred_fallthru
        _
      %p397 = scmp.lt.s32.totalorder %s26, 2
      // Predicated region
      $region57: #{tpu_custom_call.1} parent=5 // pred_check
        %p398 = pneg %p397
      $region58: #{tpu_custom_call.1} parent=5 // pred_check_branch
        %400 = sbr.rel (%p398) target = $region60
      $region59: #{tpu_custom_call.1} parent=5 // pred_region
        // Predicated region
        $region61: #{tpu_custom_call.1} parent=59 // pred_check
          %p401 = pneg %p46
        $region62: #{tpu_custom_call.1} parent=59 // pred_check_branch
          %403 = sbr.rel (%p401) target = $region64
        $region63: #{tpu_custom_call.1} parent=59 // pred_region
          %s404 = sand.u32 %s36, 1
          %s405 = scalar_lea.sflag [#allocation3], %s404
          %s406 = sand.u32 %s36, 1
          %s407 = smul.addr %s406, 32
          %s408 = scalar_lea.vmem [#allocation2], %s407
          %s409 = smul.u32 2, %s26
          %s411 = ssub.s32 512, 512
          %412 = vsyncadd %s405, %s411
          %s413 = smul.addr %s409, 2
          %s414 = smul.addr %s413, 128
          %s415 = scalar_lea.hbm %s0, %s414
          %s416 = sshll.u32 %s408, 4
          %s417 = int_to_ptr.vmem [resolvable:$true] %s416
          %422 = dma.hbm_to_vmem [thread:$0]  %s415, 512, %s417, %s405, 128, 128, 8
        $region64: #{tpu_custom_call.1} parent=59 // pred_fallthru
          _
      $region60: #{tpu_custom_call.1} parent=5 // pred_fallthru
        _
      %p423 = scmp.le.s32.totalorder 1, %s26
      %p424 = scmp.lt.s32.totalorder %s26, 3
      %p425 = pnand %p423, %p424
      %p426 = pneg %p425
      // Predicated region
      $region65: #{tpu_custom_call.1} parent=5 // pred_check
        _
      $region66: #{tpu_custom_call.1} parent=5 // pred_check_branch
        %428 = sbr.rel (%p425) target = $region68
      $region67: #{tpu_custom_call.1} parent=5 // pred_region
        %s429 = ssub.s32 %s26, 1
        %s430 = sand.u32 %s39, 1
        %s431 = scalar_lea.sflag [#allocation3], %s430
        %s432 = sand.u32 %s39, 1
        %s433 = smul.addr %s432, 32
        %s434 = scalar_lea.vmem [#allocation2], %s433
        // Predicated region
        $region69: #{tpu_custom_call.1} parent=67 // pred_check
          %p435 = pneg %p52
        $region70: #{tpu_custom_call.1} parent=67 // pred_check_branch
          %437 = sbr.rel (%p435) target = $region72
        $region71: #{tpu_custom_call.1} parent=67 // pred_region
          %438 = dma.done %s431, 512
        $region72: #{tpu_custom_call.1} parent=67 // pred_fallthru
          _
        // Predicated region
        $region73: #{tpu_custom_call.1} parent=67 // pred_check
          %p439 = pneg %p115
        $region74: #{tpu_custom_call.1} parent=67 // pred_check_branch
          %441 = sbr.rel (%p439) target = $region76
        $region75: #{tpu_custom_call.1} parent=67 // pred_region
          %442 = dma.done [#allocation6], 3072
        $region76: #{tpu_custom_call.1} parent=67 // pred_fallthru
          _
        // Predicated region
        $region77: #{tpu_custom_call.1} parent=67 // pred_check
          %p443 = pneg %p136
        $region78: #{tpu_custom_call.1} parent=67 // pred_check_branch
          %445 = sbr.rel (%p443) target = $region80
        $region79: #{tpu_custom_call.1} parent=67 // pred_region
          %446 = dma.done [#allocation6], 1024
        $region80: #{tpu_custom_call.1} parent=67 // pred_fallthru
          _
        // Predicated region
        $region81: #{tpu_custom_call.1} parent=67 // pred_check
          %p447 = pneg %p220
        $region82: #{tpu_custom_call.1} parent=67 // pred_check_branch
          %449 = sbr.rel (%p447) target = $region84
        $region83: #{tpu_custom_call.1} parent=67 // pred_region
          %450 = dma.done [#allocation9], 4096
        $region84: #{tpu_custom_call.1} parent=67 // pred_fallthru
          _
        // Predicated region
        $region85: #{tpu_custom_call.1} parent=67 // pred_check
          %p451 = pneg %p262
        $region86: #{tpu_custom_call.1} parent=67 // pred_check_branch
          %453 = sbr.rel (%p451) target = $region88
        $region87: #{tpu_custom_call.1} parent=67 // pred_region
          %454 = dma.done [#allocation9], 4096
        $region88: #{tpu_custom_call.1} parent=67 // pred_fallthru
          _
        %s455 = sand.u32 %s39, 1
        %s456 = scalar_lea.sflag [#allocation3], %s455
        %s457 = sand.u32 %s39, 1
        %s458 = smul.addr %s457, 32
        %s459 = scalar_lea.vmem [#allocation2], %s458
        %p460 = pneg %p52
        %p461 = pneg %p49
        %p462 = pneg %p73
        %p463 = pneg %p70
        %p464 = pneg %p94
        %p465 = pneg %p91
        %p466 = pneg %p115
        %p467 = pneg %p112
        %p468 = pneg %p136
        %p469 = pneg %p133
        %p470 = pneg %p157
        %p471 = pneg %p154
        %p472 = pneg %p178
        %p473 = pneg %p175
        %p474 = pneg %p199
        %p475 = pneg %p196
        %p476 = pneg %p220
        %p477 = pneg %p217
        %p478 = pneg %p241
        %p479 = pneg %p238
        %p480 = pneg %p262
        %p481 = pneg %p259
        %p482 = pneg %p283
        %p483 = pneg %p280
        %p484 = pneg %p309
        %p485 = pneg %p306
        %s486 = sand.u32 %s296, 1
        %s487 = scalar_lea.sflag [#allocation4], %s486
        %s488 = sand.u32 %s296, 1
        %s489 = smul.addr %s488, 32
        %s490 = scalar_lea.vmem [#allocation11], %s489
        %s491 = smul.u32 2, %s31
        %s492 = smul.u32 2, %s31
        %v494 = vld [vmem:[%s434] sm:$0xff]
        %v495 = vld [vmem:[%s434 + $0x8] sm:$0xff]
        %v496 = vld [vmem:[%s434 + $0x10] sm:$0xff]
        %v497 = vld [vmem:[%s434 + $0x18] sm:$0xff]
        %v498 = vld [vmem:[%s1] sm:$0x1]
        %v499 = vld [vmem:[%s2] sm:$0x1]
        %500 = vadd.xlane.f32.xlu0 %v494
        %v501 = vpop.xlane.xlu0 %500
        %502 = vadd.xlane.f32.xlu0 %v495
        %v503 = vpop.xlane.xlu0 %502
        %504 = vadd.xlane.f32.xlu0 %v496
        %v505 = vpop.xlane.xlu0 %504
        %506 = vadd.xlane.f32.xlu0 %v497
        %v507 = vpop.xlane.xlu0 %506
        %v508 = vrcp.pop 128.0
        %v509 = vmul.f32 %v501, %v508
        %v510 = vmul.f32 %v503, %v508
        %v511 = vmul.f32 %v505, %v508
        %v512 = vmul.f32 %v507, %v508
        %v513 = vsub.f32 %v494, %v509
        %v514 = vsub.f32 %v495, %v510
        %v515 = vsub.f32 %v496, %v511
        %v516 = vsub.f32 %v497, %v512
        %v517 = vmul.f32 %v513, %v513
        %v518 = vmul.f32 %v514, %v514
        %v519 = vmul.f32 %v515, %v515
        %v520 = vmul.f32 %v516, %v516
        %521 = vadd.xlane.f32.xlu0 %v517
        %v522 = vpop.xlane.xlu0 %521
        %523 = vadd.xlane.f32.xlu0 %v518
        %v524 = vpop.xlane.xlu0 %523
        %525 = vadd.xlane.f32.xlu0 %v519
        %v526 = vpop.xlane.xlu0 %525
        %527 = vadd.xlane.f32.xlu0 %v520
        %v528 = vpop.xlane.xlu0 %527
        %v529 = vmul.f32 %v522, %v508
        %v530 = vmul.f32 %v524, %v508
        %v531 = vmul.f32 %v526, %v508
        %v532 = vmul.f32 %v528, %v508
        %v533 = vadd.f32 %v529, 1e-05
        %v534 = vadd.f32 %v530, 1e-05
        %v535 = vadd.f32 %v531, 1e-05
        %v536 = vadd.f32 %v532, 1e-05
        %v537 = vrsqrt.pop %v533
        %v538 = vrsqrt.pop %v534
        %v539 = vrsqrt.pop %v535
        %v540 = vrsqrt.pop %v536
        %v541 = vmul.f32 %v513, %v537
        %v542 = vmul.f32 %v514, %v538
        %v543 = vmul.f32 %v515, %v539
        %v544 = vmul.f32 %v516, %v540
        %v546 = vlaneseq
        %v547 = vshrl.u32 %v546, 7
        %v548 = vsub.s32 0, %v547
        %v549 = vrot.slane %v498, %v548
        %v551 = vmul.f32 %v541, %v549
        %v552 = vmul.f32 %v542, %v549
        %v553 = vmul.f32 %v543, %v549
        %v554 = vmul.f32 %v544, %v549
        %v556 = vlaneseq
        %v557 = vshrl.u32 %v556, 7
        %v558 = vsub.s32 0, %v557
        %v559 = vrot.slane %v499, %v558
        %v561 = vadd.f32 %v551, %v559
        %v562 = vadd.f32 %v552, %v559
        %v563 = vadd.f32 %v553, %v559
        %v564 = vadd.f32 %v554, %v559
        %v565 = vpack.c.bf16 %v562, %v561
        %v566 = vpack.c.bf16 %v564, %v563
        %v567 = vld [vmem:[#allocation5] sm:$0xff]
        %v568 = vld [vmem:[#allocation5 + $0x8] sm:$0xf]
        %v569 = vld [vmem:[#allocation5 + $0xc] sm:$0xff]
        %v570 = vld [vmem:[#allocation5 + $0x14] sm:$0xf]
        %v571 = vld [vmem:[#allocation5 + $0x18] sm:$0xff]
        %v572 = vld [vmem:[#allocation5 + $0x20] sm:$0xf]
        %v573 = vld [vmem:[#allocation5 + $0x24] sm:$0xff]
        %v574 = vld [vmem:[#allocation5 + $0x2c] sm:$0xf]
        %v575 = vld [vmem:[#allocation5 + $0x30] sm:$0xff]
        %v576 = vld [vmem:[#allocation5 + $0x38] sm:$0xf]
        %v577 = vld [vmem:[#allocation5 + $0x3c] sm:$0xff]
        %v578 = vld [vmem:[#allocation5 + $0x44] sm:$0xf]
        %v579 = vld [vmem:[#allocation5 + $0x48] sm:$0xff]
        %v580 = vld [vmem:[#allocation5 + $0x50] sm:$0xf]
        %v581 = vld [vmem:[#allocation5 + $0x54] sm:$0xff]
        %v582 = vld [vmem:[#allocation5 + $0x5c] sm:$0xf]
        %v583 = vld [vmem:[#allocation5 + $0x60] sm:$0xff]
        %v584 = vld [vmem:[#allocation5 + $0x68] sm:$0xf]
        %v585 = vld [vmem:[#allocation5 + $0x6c] sm:$0xff]
        %v586 = vld [vmem:[#allocation5 + $0x74] sm:$0xf]
        %v587 = vld [vmem:[#allocation5 + $0x78] sm:$0xff]
        %v588 = vld [vmem:[#allocation5 + $0x80] sm:$0xf]
        %v589 = vld [vmem:[#allocation5 + $0x84] sm:$0xff]
        %v590 = vld [vmem:[#allocation5 + $0x8c] sm:$0xf]
        %v591 = vld [vmem:[#allocation5 + $0x90] sm:$0xff]
        %v592 = vld [vmem:[#allocation5 + $0x98] sm:$0xf]
        %v593 = vld [vmem:[#allocation5 + $0x9c] sm:$0xff]
        %v594 = vld [vmem:[#allocation5 + $0xa4] sm:$0xf]
        %v595 = vld [vmem:[#allocation5 + $0xa8] sm:$0xff]
        %v596 = vld [vmem:[#allocation5 + $0xb0] sm:$0xf]
        %v597 = vld [vmem:[#allocation5 + $0xb4] sm:$0xff]
        %v598 = vld [vmem:[#allocation5 + $0xbc] sm:$0xf]
        %v631 = vunpack.c.l.b16 %v567
        %v632 = vunpack.c.h.b16 %v567
        %v633 = vunpack.c.l.b16 %v568
        %v634 = vunpack.c.l.b16 %v569
        %v635 = vunpack.c.h.b16 %v569
        %v636 = vunpack.c.l.b16 %v570
        %v637 = vunpack.c.l.b16 %v571
        %v638 = vunpack.c.h.b16 %v571
        %v639 = vunpack.c.l.b16 %v572
        %v640 = vunpack.c.l.b16 %v573
        %v641 = vunpack.c.h.b16 %v573
        %v642 = vunpack.c.l.b16 %v574
        %v643 = vunpack.c.l.b16 %v575
        %v644 = vunpack.c.h.b16 %v575
        %v645 = vunpack.c.l.b16 %v576
        %v646 = vunpack.c.l.b16 %v577
        %v647 = vunpack.c.h.b16 %v577
        %v648 = vunpack.c.l.b16 %v578
        %v649 = vunpack.c.l.b16 %v579
        %v650 = vunpack.c.h.b16 %v579
        %v651 = vunpack.c.l.b16 %v580
        %v652 = vunpack.c.l.b16 %v581
        %v653 = vunpack.c.h.b16 %v581
        %v654 = vunpack.c.l.b16 %v582
        %v655 = vunpack.c.l.b16 %v583
        %v656 = vunpack.c.h.b16 %v583
        %v657 = vunpack.c.l.b16 %v584
        %v658 = vunpack.c.l.b16 %v585
        %v659 = vunpack.c.h.b16 %v585
        %v660 = vunpack.c.l.b16 %v586
        %v661 = vunpack.c.l.b16 %v587
        %v662 = vunpack.c.h.b16 %v587
        %v663 = vunpack.c.l.b16 %v588
        %v664 = vunpack.c.l.b16 %v589
        %v665 = vunpack.c.h.b16 %v589
        %v666 = vunpack.c.l.b16 %v590
        %v667 = vunpack.c.l.b16 %v591
        %v668 = vunpack.c.h.b16 %v591
        %v669 = vunpack.c.l.b16 %v592
        %v670 = vunpack.c.l.b16 %v593
        %v671 = vunpack.c.h.b16 %v593
        %v672 = vunpack.c.l.b16 %v594
        %v673 = vunpack.c.l.b16 %v595
        %v674 = vunpack.c.h.b16 %v595
        %v675 = vunpack.c.l.b16 %v596
        %v676 = vunpack.c.l.b16 %v597
        %v677 = vunpack.c.h.b16 %v597
        %v678 = vunpack.c.l.b16 %v598
        %v679 = vpack.c.b16 %v634, %v631
        %v680 = vpack.c.b16 %v635, %v632
        %v681 = vpack.c.b16 %v636, %v633
        %v682 = vpack.c.b16 %v640, %v637
        %v683 = vpack.c.b16 %v641, %v638
        %v684 = vpack.c.b16 %v642, %v639
        %v685 = vpack.c.b16 %v646, %v643
        %v686 = vpack.c.b16 %v647, %v644
        %v687 = vpack.c.b16 %v648, %v645
        %v688 = vpack.c.b16 %v652, %v649
        %v689 = vpack.c.b16 %v653, %v650
        %v690 = vpack.c.b16 %v654, %v651
        %v691 = vpack.c.b16 %v658, %v655
        %v692 = vpack.c.b16 %v659, %v656
        %v693 = vpack.c.b16 %v660, %v657
        %v694 = vpack.c.b16 %v664, %v661
        %v695 = vpack.c.b16 %v665, %v662
        %v696 = vpack.c.b16 %v666, %v663
        %v697 = vpack.c.b16 %v670, %v667
        %v698 = vpack.c.b16 %v671, %v668
        %v699 = vpack.c.b16 %v672, %v669
        %v700 = vpack.c.b16 %v676, %v673
        %v701 = vpack.c.b16 %v677, %v674
        %v702 = vpack.c.b16 %v678, %v675
        %727 = vmatprep.subr.bf16.mxu0 %v680
        %728 = vmatpush1.bf16.msra.mxu0 %v679
        %729 = vmatprep.subr.bf16.mxu0 %v683
        %730 = vmatpush1.bf16.msra.mxu0 %v682
        %731 = vmatprep.subr.bf16.mxu0 %v686
        %732 = vmatpush1.bf16.msra.mxu0 %v685
        %733 = vmatprep.subr.bf16.mxu0 %v689
        %734 = vmatpush1.bf16.msra.mxu0 %v688
        %735 = vmatprep.subr.bf16.mxu0 %v692
        %736 = vmatpush1.bf16.msra.mxu0 %v691
        %737 = vmatprep.subr.bf16.mxu0 %v695
        %738 = vmatpush1.bf16.msra.mxu0 %v694
        %739 = vmatprep.subr.bf16.mxu0 %v698
        %740 = vmatpush1.bf16.msra.mxu0 %v697
        %741 = vmatprep.subr.bf16.mxu0 %v701
        %742 = vmatpush1.bf16.msra.mxu0 %v700
        %743 = vmatprep.subr.bf16.mxu0 0
        %744 = vmatpush1.bf16.msra.mxu0 0
        %745 = vmatprep.subr.bf16.mxu0 0
        %746 = vmatpush1.bf16.msra.mxu0 0
        %747 = vmatprep.subr.bf16.mxu0 0
        %748 = vmatpush1.bf16.msra.mxu0 0
        %749 = vmatprep.subr.bf16.mxu0 0
        %750 = vmatpush1.bf16.msra.mxu0 0
        %751 = vmatprep.subr.bf16.mxu0 0
        %752 = vmatpush1.bf16.msra.mxu0 0
        %753 = vmatprep.subr.bf16.mxu0 0
        %754 = vmatpush1.bf16.msra.mxu0 0
        %755 = vmatprep.subr.bf16.mxu0 0
        %756 = vmatpush1.bf16.msra.mxu0 0
        %757 = vmatprep.subr.bf16.mxu0 0
        %758 = vmatpush1.bf16.msra.mxu0 0
        %759 = vmatprep.mubr.bf16.mxu0 0
        %760 = vmatmul.mubr.bf16.gmra.mrb[0].mxu0 %v565
        %v761 = vpop.f32.mrb[0].mxu0
        %v762 = vadd.f32 0.0, %v761
        %v763 = vpop.f32.mrb[0].mxu0
        %v764 = vadd.f32 0.0, %v763
        %v765 = vpop.f32.mrb[0].mxu0
        %v766 = vadd.f32 0.0, %v765
        %v767 = vpop.f32.mrb[0].mxu0
        %v768 = vadd.f32 0.0, %v767
        %769 = vmatprep.mubr.bf16.mxu0 0
        %770 = vmatmul.mubr.bf16.gmra.mrb[0].mxu0 %v566
        %v771 = vpop.f32.mrb[0].mxu0
        %v772 = vadd.f32 0.0, %v771
        %v773 = vpop.f32.mrb[0].mxu0
        %v774 = vadd.f32 0.0, %v773
        %v775 = vpop.f32.mrb[0].mxu0
        %v776 = vadd.f32 0.0, %v775
        %v777 = vpop.f32.mrb[0].mxu0
        %v778 = vadd.f32 0.0, %v777
        %779 = vdwg.mxu0
        %780 = vmatprep.subr.bf16.mxu0 0
        %781 = vmatpush1.bf16.msra.mxu0 %v681
        %782 = vmatprep.subr.bf16.mxu0 0
        %783 = vmatpush1.bf16.msra.mxu0 %v684
        %784 = vmatprep.subr.bf16.mxu0 0
        %785 = vmatpush1.bf16.msra.mxu0 %v687
        %786 = vmatprep.subr.bf16.mxu0 0
        %787 = vmatpush1.bf16.msra.mxu0 %v690
        %788 = vmatprep.subr.bf16.mxu0 0
        %789 = vmatpush1.bf16.msra.mxu0 %v693
        %790 = vmatprep.subr.bf16.mxu0 0
        %791 = vmatpush1.bf16.msra.mxu0 %v696
        %792 = vmatprep.subr.bf16.mxu0 0
        %793 = vmatpush1.bf16.msra.mxu0 %v699
        %794 = vmatprep.subr.bf16.mxu0 0
        %795 = vmatpush1.bf16.msra.mxu0 %v702
        %796 = vmatprep.subr.bf16.mxu0 0
        %797 = vmatpush1.bf16.msra.mxu0 0
        %798 = vmatprep.subr.bf16.mxu0 0
        %799 = vmatpush1.bf16.msra.mxu0 0
        %800 = vmatprep.subr.bf16.mxu0 0
        %801 = vmatpush1.bf16.msra.mxu0 0
        %802 = vmatprep.subr.bf16.mxu0 0
        %803 = vmatpush1.bf16.msra.mxu0 0
        %804 = vmatprep.subr.bf16.mxu0 0
        %805 = vmatpush1.bf16.msra.mxu0 0
        %806 = vmatprep.subr.bf16.mxu0 0
        %807 = vmatpush1.bf16.msra.mxu0 0
        %808 = vmatprep.subr.bf16.mxu0 0
        %809 = vmatpush1.bf16.msra.mxu0 0
        %810 = vmatprep.subr.bf16.mxu0 0
        %811 = vmatpush1.bf16.msra.mxu0 0
        %812 = vmatprep.mubr.bf16.mxu0 0
        %813 = vmatmul.mubr.bf16.gmra.mrb[0].mxu0 %v565
        %v814 = vpop.f32.mrb[0].mxu0
        %v815 = vadd.f32 0.0, %v814
        %v816 = vpop.f32.mrb[0].mxu0
        %v817 = vpop.f32.mrb[0].mxu0
        %v818 = vadd.f32 0.0, %v817
        %v819 = vpop.f32.mrb[0].mxu0
        %820 = vmatprep.mubr.bf16.mxu0 0
        %821 = vmatmul.mubr.bf16.gmra.mrb[0].mxu0 %v566
        %v822 = vpop.f32.mrb[0].mxu0
        %v823 = vadd.f32 0.0, %v822
        %v824 = vpop.f32.mrb[0].mxu0
        %v825 = vpop.f32.mrb[0].mxu0
        %v826 = vadd.f32 0.0, %v825
        %v827 = vpop.f32.mrb[0].mxu0
        %828 = vdwg.mxu0
        %833 = vrot.lane.b32.xlu0 %v762, 96
        %v834 = vpop.permute.xlu0 %833
        %835 = vrot.lane.b32.xlu0 %v766, 96
        %v836 = vpop.permute.xlu0 %835
        %837 = vrot.lane.b32.xlu0 %v772, 96
        %v838 = vpop.permute.xlu0 %837
        %839 = vrot.lane.b32.xlu0 %v776, 96
        %v840 = vpop.permute.xlu0 %839
        %845 = vrot.lane.b32.xlu0 %v762, 64
        %v846 = vpop.permute.xlu0 %845
        %847 = vrot.lane.b32.xlu0 %v766, 64
        %v848 = vpop.permute.xlu0 %847
        %849 = vrot.lane.b32.xlu0 %v772, 64
        %v850 = vpop.permute.xlu0 %849
        %851 = vrot.lane.b32.xlu0 %v776, 64
        %v852 = vpop.permute.xlu0 %851
        %857 = vrot.lane.b32.xlu0 %v762, 32
        %v858 = vpop.permute.xlu0 %857
        %859 = vrot.lane.b32.xlu0 %v766, 32
        %v860 = vpop.permute.xlu0 %859
        %861 = vrot.lane.b32.xlu0 %v772, 32
        %v862 = vpop.permute.xlu0 %861
        %863 = vrot.lane.b32.xlu0 %v776, 32
        %v864 = vpop.permute.xlu0 %863
        %v869 = vcombine.low %v762, %v846
        %v870 = vcombine.high %v762, %v846
        %v872 = vunpack.c.l.s4 1983009808
        %v873 = vunpack.c.0.s8 %v872
        %v874 = vlaneseq
        %v875 = vshrl.u32 %v874, 7
        %v876 = vsub.s32 %v873, %v875
        %v877 = vrot.slane %v869, %v876
        %v879 = vunpack.c.l.s4 1983009808
        %v880 = vunpack.c.0.s8 %v879
        %v881 = vlaneseq
        %v882 = vshrl.u32 %v881, 7
        %v883 = vsub.s32 %v880, %v882
        %v884 = vrot.slane %v870, %v883
        %v885 = vcombine.low %v834, %v858
        %v886 = vcombine.high %v834, %v858
        %v888 = vunpack.c.l.s4 1983009808
        %v889 = vunpack.c.0.s8 %v888
        %v890 = vlaneseq
        %v891 = vshrl.u32 %v890, 7
        %v892 = vsub.s32 %v889, %v891
        %v893 = vrot.slane %v885, %v892
        %v895 = vunpack.c.l.s4 1983009808
        %v896 = vunpack.c.0.s8 %v895
        %v897 = vlaneseq
        %v898 = vshrl.u32 %v897, 7
        %v899 = vsub.s32 %v896, %v898
        %v900 = vrot.slane %v886, %v899
        %v901 = vcombine.low %v877, %v893
        %v902 = vcombine.high %v877, %v893
        %v904 = vunpack.c.l.s4 1934713408
        %v905 = vunpack.c.0.s8 %v904
        %v906 = vlaneseq
        %v907 = vshrl.u32 %v906, 7
        %v908 = vsub.s32 %v905, %v907
        %v909 = vrot.slane %v901, %v908
        %v911 = vunpack.c.l.s4 1934713408
        %v912 = vunpack.c.0.s8 %v911
        %v913 = vlaneseq
        %v914 = vshrl.u32 %v913, 7
        %v915 = vsub.s32 %v912, %v914
        %v916 = vrot.slane %v902, %v915
        %v917 = vcombine.low %v884, %v900
        %v918 = vcombine.high %v884, %v900
        %v920 = vunpack.c.l.s4 1934713408
        %v921 = vunpack.c.0.s8 %v920
        %v922 = vlaneseq
        %v923 = vshrl.u32 %v922, 7
        %v924 = vsub.s32 %v921, %v923
        %v925 = vrot.slane %v917, %v924
        %v927 = vunpack.c.l.s4 1934713408
        %v928 = vunpack.c.0.s8 %v927
        %v929 = vlaneseq
        %v930 = vshrl.u32 %v929, 7
        %v931 = vsub.s32 %v928, %v930
        %v932 = vrot.slane %v918, %v931
        %v933 = vcombine.high %v909, 0.0
        %v934 = vcombine.high %v916, 0.0
        %v935 = vcombine.high %v925, 0.0
        %v936 = vcombine.high %v932, 0.0
        %v937 = vcombine.low %v766, %v848
        %v938 = vcombine.high %v766, %v848
        %v940 = vunpack.c.l.s4 1983009808
        %v941 = vunpack.c.0.s8 %v940
        %v942 = vlaneseq
        %v943 = vshrl.u32 %v942, 7
        %v944 = vsub.s32 %v941, %v943
        %v945 = vrot.slane %v937, %v944
        %v947 = vunpack.c.l.s4 1983009808
        %v948 = vunpack.c.0.s8 %v947
        %v949 = vlaneseq
        %v950 = vshrl.u32 %v949, 7
        %v951 = vsub.s32 %v948, %v950
        %v952 = vrot.slane %v938, %v951
        %v953 = vcombine.low %v836, %v860
        %v954 = vcombine.high %v836, %v860
        %v956 = vunpack.c.l.s4 1983009808
        %v957 = vunpack.c.0.s8 %v956
        %v958 = vlaneseq
        %v959 = vshrl.u32 %v958, 7
        %v960 = vsub.s32 %v957, %v959
        %v961 = vrot.slane %v953, %v960
        %v963 = vunpack.c.l.s4 1983009808
        %v964 = vunpack.c.0.s8 %v963
        %v965 = vlaneseq
        %v966 = vshrl.u32 %v965, 7
        %v967 = vsub.s32 %v964, %v966
        %v968 = vrot.slane %v954, %v967
        %v969 = vcombine.low %v945, %v961
        %v970 = vcombine.high %v945, %v961
        %v972 = vunpack.c.l.s4 1934713408
        %v973 = vunpack.c.0.s8 %v972
        %v974 = vlaneseq
        %v975 = vshrl.u32 %v974, 7
        %v976 = vsub.s32 %v973, %v975
        %v977 = vrot.slane %v969, %v976
        %v979 = vunpack.c.l.s4 1934713408
        %v980 = vunpack.c.0.s8 %v979
        %v981 = vlaneseq
        %v982 = vshrl.u32 %v981, 7
        %v983 = vsub.s32 %v980, %v982
        %v984 = vrot.slane %v970, %v983
        %v985 = vcombine.low %v952, %v968
        %v986 = vcombine.high %v952, %v968
        %v988 = vunpack.c.l.s4 1934713408
        %v989 = vunpack.c.0.s8 %v988
        %v990 = vlaneseq
        %v991 = vshrl.u32 %v990, 7
        %v992 = vsub.s32 %v989, %v991
        %v993 = vrot.slane %v985, %v992
        %v995 = vunpack.c.l.s4 1934713408
        %v996 = vunpack.c.0.s8 %v995
        %v997 = vlaneseq
        %v998 = vshrl.u32 %v997, 7
        %v999 = vsub.s32 %v996, %v998
        %v1000 = vrot.slane %v986, %v999
        %v1001 = vcombine.high %v977, 0.0
        %v1002 = vcombine.high %v984, 0.0
        %v1003 = vcombine.high %v993, 0.0
        %v1004 = vcombine.high %v1000, 0.0
        %v1005 = vcombine.low %v772, %v850
        %v1006 = vcombine.high %v772, %v850
        %v1008 = vunpack.c.l.s4 1983009808
        %v1009 = vunpack.c.0.s8 %v1008
        %v1010 = vlaneseq
        %v1011 = vshrl.u32 %v1010, 7
        %v1012 = vsub.s32 %v1009, %v1011
        %v1013 = vrot.slane %v1005, %v1012
        %v1015 = vunpack.c.l.s4 1983009808
        %v1016 = vunpack.c.0.s8 %v1015
        %v1017 = vlaneseq
        %v1018 = vshrl.u32 %v1017, 7
        %v1019 = vsub.s32 %v1016, %v1018
        %v1020 = vrot.slane %v1006, %v1019
        %v1021 = vcombine.low %v838, %v862
        %v1022 = vcombine.high %v838, %v862
        %v1024 = vunpack.c.l.s4 1983009808
        %v1025 = vunpack.c.0.s8 %v1024
        %v1026 = vlaneseq
        %v1027 = vshrl.u32 %v1026, 7
        %v1028 = vsub.s32 %v1025, %v1027
        %v1029 = vrot.slane %v1021, %v1028
        %v1031 = vunpack.c.l.s4 1983009808
        %v1032 = vunpack.c.0.s8 %v1031
        %v1033 = vlaneseq
        %v1034 = vshrl.u32 %v1033, 7
        %v1035 = vsub.s32 %v1032, %v1034
        %v1036 = vrot.slane %v1022, %v1035
        %v1037 = vcombine.low %v1013, %v1029
        %v1038 = vcombine.high %v1013, %v1029
        %v1040 = vunpack.c.l.s4 1934713408
        %v1041 = vunpack.c.0.s8 %v1040
        %v1042 = vlaneseq
        %v1043 = vshrl.u32 %v1042, 7
        %v1044 = vsub.s32 %v1041, %v1043
        %v1045 = vrot.slane %v1037, %v1044
        %v1047 = vunpack.c.l.s4 1934713408
        %v1048 = vunpack.c.0.s8 %v1047
        %v1049 = vlaneseq
        %v1050 = vshrl.u32 %v1049, 7
        %v1051 = vsub.s32 %v1048, %v1050
        %v1052 = vrot.slane %v1038, %v1051
        %v1053 = vcombine.low %v1020, %v1036
        %v1054 = vcombine.high %v1020, %v1036
        %v1056 = vunpack.c.l.s4 1934713408
        %v1057 = vunpack.c.0.s8 %v1056
        %v1058 = vlaneseq
        %v1059 = vshrl.u32 %v1058, 7
        %v1060 = vsub.s32 %v1057, %v1059
        %v1061 = vrot.slane %v1053, %v1060
        %v1063 = vunpack.c.l.s4 1934713408
        %v1064 = vunpack.c.0.s8 %v1063
        %v1065 = vlaneseq
        %v1066 = vshrl.u32 %v1065, 7
        %v1067 = vsub.s32 %v1064, %v1066
        %v1068 = vrot.slane %v1054, %v1067
        %v1069 = vcombine.high %v1045, 0.0
        %v1070 = vcombine.high %v1052, 0.0
        %v1071 = vcombine.high %v1061, 0.0
        %v1072 = vcombine.high %v1068, 0.0
        %v1073 = vcombine.low %v776, %v852
        %v1074 = vcombine.high %v776, %v852
        %v1076 = vunpack.c.l.s4 1983009808
        %v1077 = vunpack.c.0.s8 %v1076
        %v1078 = vlaneseq
        %v1079 = vshrl.u32 %v1078, 7
        %v1080 = vsub.s32 %v1077, %v1079
        %v1081 = vrot.slane %v1073, %v1080
        %v1083 = vunpack.c.l.s4 1983009808
        %v1084 = vunpack.c.0.s8 %v1083
        %v1085 = vlaneseq
        %v1086 = vshrl.u32 %v1085, 7
        %v1087 = vsub.s32 %v1084, %v1086
        %v1088 = vrot.slane %v1074, %v1087
        %v1089 = vcombine.low %v840, %v864
        %v1090 = vcombine.high %v840, %v864
        %v1092 = vunpack.c.l.s4 1983009808
        %v1093 = vunpack.c.0.s8 %v1092
        %v1094 = vlaneseq
        %v1095 = vshrl.u32 %v1094, 7
        %v1096 = vsub.s32 %v1093, %v1095
        %v1097 = vrot.slane %v1089, %v1096
        %v1099 = vunpack.c.l.s4 1983009808
        %v1100 = vunpack.c.0.s8 %v1099
        %v1101 = vlaneseq
        %v1102 = vshrl.u32 %v1101, 7
        %v1103 = vsub.s32 %v1100, %v1102
        %v1104 = vrot.slane %v1090, %v1103
        %v1105 = vcombine.low %v1081, %v1097
        %v1106 = vcombine.high %v1081, %v1097
        %v1108 = vunpack.c.l.s4 1934713408
        %v1109 = vunpack.c.0.s8 %v1108
        %v1110 = vlaneseq
        %v1111 = vshrl.u32 %v1110, 7
        %v1112 = vsub.s32 %v1109, %v1111
        %v1113 = vrot.slane %v1105, %v1112
        %v1115 = vunpack.c.l.s4 1934713408
        %v1116 = vunpack.c.0.s8 %v1115
        %v1117 = vlaneseq
        %v1118 = vshrl.u32 %v1117, 7
        %v1119 = vsub.s32 %v1116, %v1118
        %v1120 = vrot.slane %v1106, %v1119
        %v1121 = vcombine.low %v1088, %v1104
        %v1122 = vcombine.high %v1088, %v1104
        %v1124 = vunpack.c.l.s4 1934713408
        %v1125 = vunpack.c.0.s8 %v1124
        %v1126 = vlaneseq
        %v1127 = vshrl.u32 %v1126, 7
        %v1128 = vsub.s32 %v1125, %v1127
        %v1129 = vrot.slane %v1121, %v1128
        %v1131 = vunpack.c.l.s4 1934713408
        %v1132 = vunpack.c.0.s8 %v1131
        %v1133 = vlaneseq
        %v1134 = vshrl.u32 %v1133, 7
        %v1135 = vsub.s32 %v1132, %v1134
        %v1136 = vrot.slane %v1122, %v1135
        %v1137 = vcombine.high %v1113, 0.0
        %v1138 = vcombine.high %v1120, 0.0
        %v1139 = vcombine.high %v1129, 0.0
        %v1140 = vcombine.high %v1136, 0.0
        %v1141 = vcombine.low %v909, %v916
        %v1143 = vunpack.c.l.s4 1983009808
        %v1144 = vunpack.c.0.s8 %v1143
        %v1145 = vlaneseq
        %v1146 = vshrl.u32 %v1145, 7
        %v1147 = vsub.s32 %v1144, %v1146
        %v1148 = vrot.slane %v1141, %v1147
        %v1149 = vcombine.low %v933, %v934
        %v1151 = vunpack.c.l.s4 1983009808
        %v1152 = vunpack.c.0.s8 %v1151
        %v1153 = vlaneseq
        %v1154 = vshrl.u32 %v1153, 7
        %v1155 = vsub.s32 %v1152, %v1154
        %v1156 = vrot.slane %v1149, %v1155
        %v1157 = vcombine.low %v925, %v932
        %v1159 = vunpack.c.l.s4 1983009808
        %v1160 = vunpack.c.0.s8 %v1159
        %v1161 = vlaneseq
        %v1162 = vshrl.u32 %v1161, 7
        %v1163 = vsub.s32 %v1160, %v1162
        %v1164 = vrot.slane %v1157, %v1163
        %v1165 = vcombine.low %v935, %v936
        %v1167 = vunpack.c.l.s4 1983009808
        %v1168 = vunpack.c.0.s8 %v1167
        %v1169 = vlaneseq
        %v1170 = vshrl.u32 %v1169, 7
        %v1171 = vsub.s32 %v1168, %v1170
        %v1172 = vrot.slane %v1165, %v1171
        %v1173 = vcombine.low %v1148, %v1156
        %v1174 = vcombine.high %v1148, %v1156
        %v1176 = vunpack.c.l.s4 1934713408
        %v1177 = vunpack.c.0.s8 %v1176
        %v1178 = vlaneseq
        %v1179 = vshrl.u32 %v1178, 7
        %v1180 = vsub.s32 %v1177, %v1179
        %v1181 = vrot.slane %v1173, %v1180
        %v1183 = vunpack.c.l.s4 1934713408
        %v1184 = vunpack.c.0.s8 %v1183
        %v1185 = vlaneseq
        %v1186 = vshrl.u32 %v1185, 7
        %v1187 = vsub.s32 %v1184, %v1186
        %v1188 = vrot.slane %v1174, %v1187
        %v1189 = vcombine.low %v1164, %v1172
        %v1190 = vcombine.high %v1164, %v1172
        %v1192 = vunpack.c.l.s4 1934713408
        %v1193 = vunpack.c.0.s8 %v1192
        %v1194 = vlaneseq
        %v1195 = vshrl.u32 %v1194, 7
        %v1196 = vsub.s32 %v1193, %v1195
        %v1197 = vrot.slane %v1189, %v1196
        %v1199 = vunpack.c.l.s4 1934713408
        %v1200 = vunpack.c.0.s8 %v1199
        %v1201 = vlaneseq
        %v1202 = vshrl.u32 %v1201, 7
        %v1203 = vsub.s32 %v1200, %v1202
        %v1204 = vrot.slane %v1190, %v1203
        %v1205 = vcombine.low %v1181, %v1197
        %v1206 = vcombine.high %v1181, %v1197
        %v1207 = vcombine.low %v1188, %v1204
        %v1208 = vcombine.high %v1188, %v1204
        %v1209 = vcombine.low %v977, %v984
        %v1211 = vunpack.c.l.s4 1983009808
        %v1212 = vunpack.c.0.s8 %v1211
        %v1213 = vlaneseq
        %v1214 = vshrl.u32 %v1213, 7
        %v1215 = vsub.s32 %v1212, %v1214
        %v1216 = vrot.slane %v1209, %v1215
        %v1217 = vcombine.low %v1001, %v1002
        %v1219 = vunpack.c.l.s4 1983009808
        %v1220 = vunpack.c.0.s8 %v1219
        %v1221 = vlaneseq
        %v1222 = vshrl.u32 %v1221, 7
        %v1223 = vsub.s32 %v1220, %v1222
        %v1224 = vrot.slane %v1217, %v1223
        %v1225 = vcombine.low %v993, %v1000
        %v1227 = vunpack.c.l.s4 1983009808
        %v1228 = vunpack.c.0.s8 %v1227
        %v1229 = vlaneseq
        %v1230 = vshrl.u32 %v1229, 7
        %v1231 = vsub.s32 %v1228, %v1230
        %v1232 = vrot.slane %v1225, %v1231
        %v1233 = vcombine.low %v1003, %v1004
        %v1235 = vunpack.c.l.s4 1983009808
        %v1236 = vunpack.c.0.s8 %v1235
        %v1237 = vlaneseq
        %v1238 = vshrl.u32 %v1237, 7
        %v1239 = vsub.s32 %v1236, %v1238
        %v1240 = vrot.slane %v1233, %v1239
        %v1241 = vcombine.low %v1216, %v1224
        %v1242 = vcombine.high %v1216, %v1224
        %v1244 = vunpack.c.l.s4 1934713408
        %v1245 = vunpack.c.0.s8 %v1244
        %v1246 = vlaneseq
        %v1247 = vshrl.u32 %v1246, 7
        %v1248 = vsub.s32 %v1245, %v1247
        %v1249 = vrot.slane %v1241, %v1248
        %v1251 = vunpack.c.l.s4 1934713408
        %v1252 = vunpack.c.0.s8 %v1251
        %v1253 = vlaneseq
        %v1254 = vshrl.u32 %v1253, 7
        %v1255 = vsub.s32 %v1252, %v1254
        %v1256 = vrot.slane %v1242, %v1255
        %v1257 = vcombine.low %v1232, %v1240
        %v1258 = vcombine.high %v1232, %v1240
        %v1260 = vunpack.c.l.s4 1934713408
        %v1261 = vunpack.c.0.s8 %v1260
        %v1262 = vlaneseq
        %v1263 = vshrl.u32 %v1262, 7
        %v1264 = vsub.s32 %v1261, %v1263
        %v1265 = vrot.slane %v1257, %v1264
        %v1267 = vunpack.c.l.s4 1934713408
        %v1268 = vunpack.c.0.s8 %v1267
        %v1269 = vlaneseq
        %v1270 = vshrl.u32 %v1269, 7
        %v1271 = vsub.s32 %v1268, %v1270
        %v1272 = vrot.slane %v1258, %v1271
        %v1273 = vcombine.low %v1249, %v1265
        %v1274 = vcombine.high %v1249, %v1265
        %v1275 = vcombine.low %v1256, %v1272
        %v1276 = vcombine.high %v1256, %v1272
        %v1277 = vcombine.low %v1045, %v1052
        %v1279 = vunpack.c.l.s4 1983009808
        %v1280 = vunpack.c.0.s8 %v1279
        %v1281 = vlaneseq
        %v1282 = vshrl.u32 %v1281, 7
        %v1283 = vsub.s32 %v1280, %v1282
        %v1284 = vrot.slane %v1277, %v1283
        %v1285 = vcombine.low %v1069, %v1070
        %v1287 = vunpack.c.l.s4 1983009808
        %v1288 = vunpack.c.0.s8 %v1287
        %v1289 = vlaneseq
        %v1290 = vshrl.u32 %v1289, 7
        %v1291 = vsub.s32 %v1288, %v1290
        %v1292 = vrot.slane %v1285, %v1291
        %v1293 = vcombine.low %v1061, %v1068
        %v1295 = vunpack.c.l.s4 1983009808
        %v1296 = vunpack.c.0.s8 %v1295
        %v1297 = vlaneseq
        %v1298 = vshrl.u32 %v1297, 7
        %v1299 = vsub.s32 %v1296, %v1298
        %v1300 = vrot.slane %v1293, %v1299
        %v1301 = vcombine.low %v1071, %v1072
        %v1303 = vunpack.c.l.s4 1983009808
        %v1304 = vunpack.c.0.s8 %v1303
        %v1305 = vlaneseq
        %v1306 = vshrl.u32 %v1305, 7
        %v1307 = vsub.s32 %v1304, %v1306
        %v1308 = vrot.slane %v1301, %v1307
        %v1309 = vcombine.low %v1284, %v1292
        %v1310 = vcombine.high %v1284, %v1292
        %v1312 = vunpack.c.l.s4 1934713408
        %v1313 = vunpack.c.0.s8 %v1312
        %v1314 = vlaneseq
        %v1315 = vshrl.u32 %v1314, 7
        %v1316 = vsub.s32 %v1313, %v1315
        %v1317 = vrot.slane %v1309, %v1316
        %v1319 = vunpack.c.l.s4 1934713408
        %v1320 = vunpack.c.0.s8 %v1319
        %v1321 = vlaneseq
        %v1322 = vshrl.u32 %v1321, 7
        %v1323 = vsub.s32 %v1320, %v1322
        %v1324 = vrot.slane %v1310, %v1323
        %v1325 = vcombine.low %v1300, %v1308
        %v1326 = vcombine.high %v1300, %v1308
        %v1328 = vunpack.c.l.s4 1934713408
        %v1329 = vunpack.c.0.s8 %v1328
        %v1330 = vlaneseq
        %v1331 = vshrl.u32 %v1330, 7
        %v1332 = vsub.s32 %v1329, %v1331
        %v1333 = vrot.slane %v1325, %v1332
        %v1335 = vunpack.c.l.s4 1934713408
        %v1336 = vunpack.c.0.s8 %v1335
        %v1337 = vlaneseq
        %v1338 = vshrl.u32 %v1337, 7
        %v1339 = vsub.s32 %v1336, %v1338
        %v1340 = vrot.slane %v1326, %v1339
        %v1341 = vcombine.low %v1317, %v1333
        %v1342 = vcombine.high %v1317, %v1333
        %v1343 = vcombine.low %v1324, %v1340
        %v1344 = vcombine.high %v1324, %v1340
        %v1345 = vcombine.low %v1113, %v1120
        %v1347 = vunpack.c.l.s4 1983009808
        %v1348 = vunpack.c.0.s8 %v1347
        %v1349 = vlaneseq
        %v1350 = vshrl.u32 %v1349, 7
        %v1351 = vsub.s32 %v1348, %v1350
        %v1352 = vrot.slane %v1345, %v1351
        %v1353 = vcombine.low %v1137, %v1138
        %v1355 = vunpack.c.l.s4 1983009808
        %v1356 = vunpack.c.0.s8 %v1355
        %v1357 = vlaneseq
        %v1358 = vshrl.u32 %v1357, 7
        %v1359 = vsub.s32 %v1356, %v1358
        %v1360 = vrot.slane %v1353, %v1359
        %v1361 = vcombine.low %v1129, %v1136
        %v1363 = vunpack.c.l.s4 1983009808
        %v1364 = vunpack.c.0.s8 %v1363
        %v1365 = vlaneseq
        %v1366 = vshrl.u32 %v1365, 7
        %v1367 = vsub.s32 %v1364, %v1366
        %v1368 = vrot.slane %v1361, %v1367
        %v1369 = vcombine.low %v1139, %v1140
        %v1371 = vunpack.c.l.s4 1983009808
        %v1372 = vunpack.c.0.s8 %v1371
        %v1373 = vlaneseq
        %v1374 = vshrl.u32 %v1373, 7
        %v1375 = vsub.s32 %v1372, %v1374
        %v1376 = vrot.slane %v1369, %v1375
        %v1377 = vcombine.low %v1352, %v1360
        %v1378 = vcombine.high %v1352, %v1360
        %v1380 = vunpack.c.l.s4 1934713408
        %v1381 = vunpack.c.0.s8 %v1380
        %v1382 = vlaneseq
        %v1383 = vshrl.u32 %v1382, 7
        %v1384 = vsub.s32 %v1381, %v1383
        %v1385 = vrot.slane %v1377, %v1384
        %v1387 = vunpack.c.l.s4 1934713408
        %v1388 = vunpack.c.0.s8 %v1387
        %v1389 = vlaneseq
        %v1390 = vshrl.u32 %v1389, 7
        %v1391 = vsub.s32 %v1388, %v1390
        %v1392 = vrot.slane %v1378, %v1391
        %v1393 = vcombine.low %v1368, %v1376
        %v1394 = vcombine.high %v1368, %v1376
        %v1396 = vunpack.c.l.s4 1934713408
        %v1397 = vunpack.c.0.s8 %v1396
        %v1398 = vlaneseq
        %v1399 = vshrl.u32 %v1398, 7
        %v1400 = vsub.s32 %v1397, %v1399
        %v1401 = vrot.slane %v1393, %v1400
        %v1403 = vunpack.c.l.s4 1934713408
        %v1404 = vunpack.c.0.s8 %v1403
        %v1405 = vlaneseq
        %v1406 = vshrl.u32 %v1405, 7
        %v1407 = vsub.s32 %v1404, %v1406
        %v1408 = vrot.slane %v1394, %v1407
        %v1409 = vcombine.low %v1385, %v1401
        %v1410 = vcombine.high %v1385, %v1401
        %v1411 = vcombine.low %v1392, %v1408
        %v1412 = vcombine.high %v1392, %v1408
        %v1413 = vpack.c.bf16 %v1273, %v1205
        %v1414 = vpack.c.bf16 %v1409, %v1341
        %v1415 = vpack.c.bf16 %v1274, %v1206
        %v1416 = vpack.c.bf16 %v1410, %v1342
        %v1417 = vpack.c.bf16 %v1275, %v1207
        %v1418 = vpack.c.bf16 %v1411, %v1343
        %v1419 = vpack.c.bf16 %v1276, %v1208
        %v1420 = vpack.c.bf16 %v1412, %v1344
        %1425 = vrot.lane.b32.xlu0 %v764, 96
        %v1426 = vpop.permute.xlu0 %1425
        %1427 = vrot.lane.b32.xlu0 %v768, 96
        %v1428 = vpop.permute.xlu0 %1427
        %1429 = vrot.lane.b32.xlu0 %v774, 96
        %v1430 = vpop.permute.xlu0 %1429
        %1431 = vrot.lane.b32.xlu0 %v778, 96
        %v1432 = vpop.permute.xlu0 %1431
        %1437 = vrot.lane.b32.xlu0 %v764, 64
        %v1438 = vpop.permute.xlu0 %1437
        %1439 = vrot.lane.b32.xlu0 %v768, 64
        %v1440 = vpop.permute.xlu0 %1439
        %1441 = vrot.lane.b32.xlu0 %v774, 64
        %v1442 = vpop.permute.xlu0 %1441
        %1443 = vrot.lane.b32.xlu0 %v778, 64
        %v1444 = vpop.permute.xlu0 %1443
        %1449 = vrot.lane.b32.xlu0 %v764, 32
        %v1450 = vpop.permute.xlu0 %1449
        %1451 = vrot.lane.b32.xlu0 %v768, 32
        %v1452 = vpop.permute.xlu0 %1451
        %1453 = vrot.lane.b32.xlu0 %v774, 32
        %v1454 = vpop.permute.xlu0 %1453
        %1455 = vrot.lane.b32.xlu0 %v778, 32
        %v1456 = vpop.permute.xlu0 %1455
        %v1461 = vcombine.low %v764, %v1438
        %v1462 = vcombine.high %v764, %v1438
        %v1464 = vunpack.c.l.s4 1983009808
        %v1465 = vunpack.c.0.s8 %v1464
        %v1466 = vlaneseq
        %v1467 = vshrl.u32 %v1466, 7
        %v1468 = vsub.s32 %v1465, %v1467
        %v1469 = vrot.slane %v1461, %v1468
        %v1471 = vunpack.c.l.s4 1983009808
        %v1472 = vunpack.c.0.s8 %v1471
        %v1473 = vlaneseq
        %v1474 = vshrl.u32 %v1473, 7
        %v1475 = vsub.s32 %v1472, %v1474
        %v1476 = vrot.slane %v1462, %v1475
        %v1477 = vcombine.low %v1426, %v1450
        %v1478 = vcombine.high %v1426, %v1450
        %v1480 = vunpack.c.l.s4 1983009808
        %v1481 = vunpack.c.0.s8 %v1480
        %v1482 = vlaneseq
        %v1483 = vshrl.u32 %v1482, 7
        %v1484 = vsub.s32 %v1481, %v1483
        %v1485 = vrot.slane %v1477, %v1484
        %v1487 = vunpack.c.l.s4 1983009808
        %v1488 = vunpack.c.0.s8 %v1487
        %v1489 = vlaneseq
        %v1490 = vshrl.u32 %v1489, 7
        %v1491 = vsub.s32 %v1488, %v1490
        %v1492 = vrot.slane %v1478, %v1491
        %v1493 = vcombine.low %v1469, %v1485
        %v1494 = vcombine.high %v1469, %v1485
        %v1496 = vunpack.c.l.s4 1934713408
        %v1497 = vunpack.c.0.s8 %v1496
        %v1498 = vlaneseq
        %v1499 = vshrl.u32 %v1498, 7
        %v1500 = vsub.s32 %v1497, %v1499
        %v1501 = vrot.slane %v1493, %v1500
        %v1503 = vunpack.c.l.s4 1934713408
        %v1504 = vunpack.c.0.s8 %v1503
        %v1505 = vlaneseq
        %v1506 = vshrl.u32 %v1505, 7
        %v1507 = vsub.s32 %v1504, %v1506
        %v1508 = vrot.slane %v1494, %v1507
        %v1509 = vcombine.low %v1476, %v1492
        %v1510 = vcombine.high %v1476, %v1492
        %v1512 = vunpack.c.l.s4 1934713408
        %v1513 = vunpack.c.0.s8 %v1512
        %v1514 = vlaneseq
        %v1515 = vshrl.u32 %v1514, 7
        %v1516 = vsub.s32 %v1513, %v1515
        %v1517 = vrot.slane %v1509, %v1516
        %v1519 = vunpack.c.l.s4 1934713408
        %v1520 = vunpack.c.0.s8 %v1519
        %v1521 = vlaneseq
        %v1522 = vshrl.u32 %v1521, 7
        %v1523 = vsub.s32 %v1520, %v1522
        %v1524 = vrot.slane %v1510, %v1523
        %v1525 = vcombine.high %v1501, 0.0
        %v1526 = vcombine.high %v1508, 0.0
        %v1527 = vcombine.high %v1517, 0.0
        %v1528 = vcombine.high %v1524, 0.0
        %v1529 = vcombine.low %v768, %v1440
        %v1530 = vcombine.high %v768, %v1440
        %v1532 = vunpack.c.l.s4 1983009808
        %v1533 = vunpack.c.0.s8 %v1532
        %v1534 = vlaneseq
        %v1535 = vshrl.u32 %v1534, 7
        %v1536 = vsub.s32 %v1533, %v1535
        %v1537 = vrot.slane %v1529, %v1536
        %v1539 = vunpack.c.l.s4 1983009808
        %v1540 = vunpack.c.0.s8 %v1539
        %v1541 = vlaneseq
        %v1542 = vshrl.u32 %v1541, 7
        %v1543 = vsub.s32 %v1540, %v1542
        %v1544 = vrot.slane %v1530, %v1543
        %v1545 = vcombine.low %v1428, %v1452
        %v1546 = vcombine.high %v1428, %v1452
        %v1548 = vunpack.c.l.s4 1983009808
        %v1549 = vunpack.c.0.s8 %v1548
        %v1550 = vlaneseq
        %v1551 = vshrl.u32 %v1550, 7
        %v1552 = vsub.s32 %v1549, %v1551
        %v1553 = vrot.slane %v1545, %v1552
        %v1555 = vunpack.c.l.s4 1983009808
        %v1556 = vunpack.c.0.s8 %v1555
        %v1557 = vlaneseq
        %v1558 = vshrl.u32 %v1557, 7
        %v1559 = vsub.s32 %v1556, %v1558
        %v1560 = vrot.slane %v1546, %v1559
        %v1561 = vcombine.low %v1537, %v1553
        %v1562 = vcombine.high %v1537, %v1553
        %v1564 = vunpack.c.l.s4 1934713408
        %v1565 = vunpack.c.0.s8 %v1564
        %v1566 = vlaneseq
        %v1567 = vshrl.u32 %v1566, 7
        %v1568 = vsub.s32 %v1565, %v1567
        %v1569 = vrot.slane %v1561, %v1568
        %v1571 = vunpack.c.l.s4 1934713408
        %v1572 = vunpack.c.0.s8 %v1571
        %v1573 = vlaneseq
        %v1574 = vshrl.u32 %v1573, 7
        %v1575 = vsub.s32 %v1572, %v1574
        %v1576 = vrot.slane %v1562, %v1575
        %v1577 = vcombine.low %v1544, %v1560
        %v1578 = vcombine.high %v1544, %v1560
        %v1580 = vunpack.c.l.s4 1934713408
        %v1581 = vunpack.c.0.s8 %v1580
        %v1582 = vlaneseq
        %v1583 = vshrl.u32 %v1582, 7
        %v1584 = vsub.s32 %v1581, %v1583
        %v1585 = vrot.slane %v1577, %v1584
        %v1587 = vunpack.c.l.s4 1934713408
        %v1588 = vunpack.c.0.s8 %v1587
        %v1589 = vlaneseq
        %v1590 = vshrl.u32 %v1589, 7
        %v1591 = vsub.s32 %v1588, %v1590
        %v1592 = vrot.slane %v1578, %v1591
        %v1593 = vcombine.high %v1569, 0.0
        %v1594 = vcombine.high %v1576, 0.0
        %v1595 = vcombine.high %v1585, 0.0
        %v1596 = vcombine.high %v1592, 0.0
        %v1597 = vcombine.low %v774, %v1442
        %v1598 = vcombine.high %v774, %v1442
        %v1600 = vunpack.c.l.s4 1983009808
        %v1601 = vunpack.c.0.s8 %v1600
        %v1602 = vlaneseq
        %v1603 = vshrl.u32 %v1602, 7
        %v1604 = vsub.s32 %v1601, %v1603
        %v1605 = vrot.slane %v1597, %v1604
        %v1607 = vunpack.c.l.s4 1983009808
        %v1608 = vunpack.c.0.s8 %v1607
        %v1609 = vlaneseq
        %v1610 = vshrl.u32 %v1609, 7
        %v1611 = vsub.s32 %v1608, %v1610
        %v1612 = vrot.slane %v1598, %v1611
        %v1613 = vcombine.low %v1430, %v1454
        %v1614 = vcombine.high %v1430, %v1454
        %v1616 = vunpack.c.l.s4 1983009808
        %v1617 = vunpack.c.0.s8 %v1616
        %v1618 = vlaneseq
        %v1619 = vshrl.u32 %v1618, 7
        %v1620 = vsub.s32 %v1617, %v1619
        %v1621 = vrot.slane %v1613, %v1620
        %v1623 = vunpack.c.l.s4 1983009808
        %v1624 = vunpack.c.0.s8 %v1623
        %v1625 = vlaneseq
        %v1626 = vshrl.u32 %v1625, 7
        %v1627 = vsub.s32 %v1624, %v1626
        %v1628 = vrot.slane %v1614, %v1627
        %v1629 = vcombine.low %v1605, %v1621
        %v1630 = vcombine.high %v1605, %v1621
        %v1632 = vunpack.c.l.s4 1934713408
        %v1633 = vunpack.c.0.s8 %v1632
        %v1634 = vlaneseq
        %v1635 = vshrl.u32 %v1634, 7
        %v1636 = vsub.s32 %v1633, %v1635
        %v1637 = vrot.slane %v1629, %v1636
        %v1639 = vunpack.c.l.s4 1934713408
        %v1640 = vunpack.c.0.s8 %v1639
        %v1641 = vlaneseq
        %v1642 = vshrl.u32 %v1641, 7
        %v1643 = vsub.s32 %v1640, %v1642
        %v1644 = vrot.slane %v1630, %v1643
        %v1645 = vcombine.low %v1612, %v1628
        %v1646 = vcombine.high %v1612, %v1628
        %v1648 = vunpack.c.l.s4 1934713408
        %v1649 = vunpack.c.0.s8 %v1648
        %v1650 = vlaneseq
        %v1651 = vshrl.u32 %v1650, 7
        %v1652 = vsub.s32 %v1649, %v1651
        %v1653 = vrot.slane %v1645, %v1652
        %v1655 = vunpack.c.l.s4 1934713408
        %v1656 = vunpack.c.0.s8 %v1655
        %v1657 = vlaneseq
        %v1658 = vshrl.u32 %v1657, 7
        %v1659 = vsub.s32 %v1656, %v1658
        %v1660 = vrot.slane %v1646, %v1659
        %v1661 = vcombine.high %v1637, 0.0
        %v1662 = vcombine.high %v1644, 0.0
        %v1663 = vcombine.high %v1653, 0.0
        %v1664 = vcombine.high %v1660, 0.0
        %v1665 = vcombine.low %v778, %v1444
        %v1666 = vcombine.high %v778, %v1444
        %v1668 = vunpack.c.l.s4 1983009808
        %v1669 = vunpack.c.0.s8 %v1668
        %v1670 = vlaneseq
        %v1671 = vshrl.u32 %v1670, 7
        %v1672 = vsub.s32 %v1669, %v1671
        %v1673 = vrot.slane %v1665, %v1672
        %v1675 = vunpack.c.l.s4 1983009808
        %v1676 = vunpack.c.0.s8 %v1675
        %v1677 = vlaneseq
        %v1678 = vshrl.u32 %v1677, 7
        %v1679 = vsub.s32 %v1676, %v1678
        %v1680 = vrot.slane %v1666, %v1679
        %v1681 = vcombine.low %v1432, %v1456
        %v1682 = vcombine.high %v1432, %v1456
        %v1684 = vunpack.c.l.s4 1983009808
        %v1685 = vunpack.c.0.s8 %v1684
        %v1686 = vlaneseq
        %v1687 = vshrl.u32 %v1686, 7
        %v1688 = vsub.s32 %v1685, %v1687
        %v1689 = vrot.slane %v1681, %v1688
        %v1691 = vunpack.c.l.s4 1983009808
        %v1692 = vunpack.c.0.s8 %v1691
        %v1693 = vlaneseq
        %v1694 = vshrl.u32 %v1693, 7
        %v1695 = vsub.s32 %v1692, %v1694
        %v1696 = vrot.slane %v1682, %v1695
        %v1697 = vcombine.low %v1673, %v1689
        %v1698 = vcombine.high %v1673, %v1689
        %v1700 = vunpack.c.l.s4 1934713408
        %v1701 = vunpack.c.0.s8 %v1700
        %v1702 = vlaneseq
        %v1703 = vshrl.u32 %v1702, 7
        %v1704 = vsub.s32 %v1701, %v1703
        %v1705 = vrot.slane %v1697, %v1704
        %v1707 = vunpack.c.l.s4 1934713408
        %v1708 = vunpack.c.0.s8 %v1707
        %v1709 = vlaneseq
        %v1710 = vshrl.u32 %v1709, 7
        %v1711 = vsub.s32 %v1708, %v1710
        %v1712 = vrot.slane %v1698, %v1711
        %v1713 = vcombine.low %v1680, %v1696
        %v1714 = vcombine.high %v1680, %v1696
        %v1716 = vunpack.c.l.s4 1934713408
        %v1717 = vunpack.c.0.s8 %v1716
        %v1718 = vlaneseq
        %v1719 = vshrl.u32 %v1718, 7
        %v1720 = vsub.s32 %v1717, %v1719
        %v1721 = vrot.slane %v1713, %v1720
        %v1723 = vunpack.c.l.s4 1934713408
        %v1724 = vunpack.c.0.s8 %v1723
        %v1725 = vlaneseq
        %v1726 = vshrl.u32 %v1725, 7
        %v1727 = vsub.s32 %v1724, %v1726
        %v1728 = vrot.slane %v1714, %v1727
        %v1729 = vcombine.high %v1705, 0.0
        %v1730 = vcombine.high %v1712, 0.0
        %v1731 = vcombine.high %v1721, 0.0
        %v1732 = vcombine.high %v1728, 0.0
        %v1733 = vcombine.low %v1501, %v1508
        %v1735 = vunpack.c.l.s4 1983009808
        %v1736 = vunpack.c.0.s8 %v1735
        %v1737 = vlaneseq
        %v1738 = vshrl.u32 %v1737, 7
        %v1739 = vsub.s32 %v1736, %v1738
        %v1740 = vrot.slane %v1733, %v1739
        %v1741 = vcombine.low %v1525, %v1526
        %v1743 = vunpack.c.l.s4 1983009808
        %v1744 = vunpack.c.0.s8 %v1743
        %v1745 = vlaneseq
        %v1746 = vshrl.u32 %v1745, 7
        %v1747 = vsub.s32 %v1744, %v1746
        %v1748 = vrot.slane %v1741, %v1747
        %v1749 = vcombine.low %v1517, %v1524
        %v1751 = vunpack.c.l.s4 1983009808
        %v1752 = vunpack.c.0.s8 %v1751
        %v1753 = vlaneseq
        %v1754 = vshrl.u32 %v1753, 7
        %v1755 = vsub.s32 %v1752, %v1754
        %v1756 = vrot.slane %v1749, %v1755
        %v1757 = vcombine.low %v1527, %v1528
        %v1759 = vunpack.c.l.s4 1983009808
        %v1760 = vunpack.c.0.s8 %v1759
        %v1761 = vlaneseq
        %v1762 = vshrl.u32 %v1761, 7
        %v1763 = vsub.s32 %v1760, %v1762
        %v1764 = vrot.slane %v1757, %v1763
        %v1765 = vcombine.low %v1740, %v1748
        %v1766 = vcombine.high %v1740, %v1748
        %v1768 = vunpack.c.l.s4 1934713408
        %v1769 = vunpack.c.0.s8 %v1768
        %v1770 = vlaneseq
        %v1771 = vshrl.u32 %v1770, 7
        %v1772 = vsub.s32 %v1769, %v1771
        %v1773 = vrot.slane %v1765, %v1772
        %v1775 = vunpack.c.l.s4 1934713408
        %v1776 = vunpack.c.0.s8 %v1775
        %v1777 = vlaneseq
        %v1778 = vshrl.u32 %v1777, 7
        %v1779 = vsub.s32 %v1776, %v1778
        %v1780 = vrot.slane %v1766, %v1779
        %v1781 = vcombine.low %v1756, %v1764
        %v1782 = vcombine.high %v1756, %v1764
        %v1784 = vunpack.c.l.s4 1934713408
        %v1785 = vunpack.c.0.s8 %v1784
        %v1786 = vlaneseq
        %v1787 = vshrl.u32 %v1786, 7
        %v1788 = vsub.s32 %v1785, %v1787
        %v1789 = vrot.slane %v1781, %v1788
        %v1791 = vunpack.c.l.s4 1934713408
        %v1792 = vunpack.c.0.s8 %v1791
        %v1793 = vlaneseq
        %v1794 = vshrl.u32 %v1793, 7
        %v1795 = vsub.s32 %v1792, %v1794
        %v1796 = vrot.slane %v1782, %v1795
        %v1797 = vcombine.low %v1773, %v1789
        %v1798 = vcombine.high %v1773, %v1789
        %v1799 = vcombine.low %v1780, %v1796
        %v1800 = vcombine.high %v1780, %v1796
        %v1801 = vcombine.low %v1569, %v1576
        %v1803 = vunpack.c.l.s4 1983009808
        %v1804 = vunpack.c.0.s8 %v1803
        %v1805 = vlaneseq
        %v1806 = vshrl.u32 %v1805, 7
        %v1807 = vsub.s32 %v1804, %v1806
        %v1808 = vrot.slane %v1801, %v1807
        %v1809 = vcombine.low %v1593, %v1594
        %v1811 = vunpack.c.l.s4 1983009808
        %v1812 = vunpack.c.0.s8 %v1811
        %v1813 = vlaneseq
        %v1814 = vshrl.u32 %v1813, 7
        %v1815 = vsub.s32 %v1812, %v1814
        %v1816 = vrot.slane %v1809, %v1815
        %v1817 = vcombine.low %v1585, %v1592
        %v1819 = vunpack.c.l.s4 1983009808
        %v1820 = vunpack.c.0.s8 %v1819
        %v1821 = vlaneseq
        %v1822 = vshrl.u32 %v1821, 7
        %v1823 = vsub.s32 %v1820, %v1822
        %v1824 = vrot.slane %v1817, %v1823
        %v1825 = vcombine.low %v1595, %v1596
        %v1827 = vunpack.c.l.s4 1983009808
        %v1828 = vunpack.c.0.s8 %v1827
        %v1829 = vlaneseq
        %v1830 = vshrl.u32 %v1829, 7
        %v1831 = vsub.s32 %v1828, %v1830
        %v1832 = vrot.slane %v1825, %v1831
        %v1833 = vcombine.low %v1808, %v1816
        %v1834 = vcombine.high %v1808, %v1816
        %v1836 = vunpack.c.l.s4 1934713408
        %v1837 = vunpack.c.0.s8 %v1836
        %v1838 = vlaneseq
        %v1839 = vshrl.u32 %v1838, 7
        %v1840 = vsub.s32 %v1837, %v1839
        %v1841 = vrot.slane %v1833, %v1840
        %v1843 = vunpack.c.l.s4 1934713408
        %v1844 = vunpack.c.0.s8 %v1843
        %v1845 = vlaneseq
        %v1846 = vshrl.u32 %v1845, 7
        %v1847 = vsub.s32 %v1844, %v1846
        %v1848 = vrot.slane %v1834, %v1847
        %v1849 = vcombine.low %v1824, %v1832
        %v1850 = vcombine.high %v1824, %v1832
        %v1852 = vunpack.c.l.s4 1934713408
        %v1853 = vunpack.c.0.s8 %v1852
        %v1854 = vlaneseq
        %v1855 = vshrl.u32 %v1854, 7
        %v1856 = vsub.s32 %v1853, %v1855
        %v1857 = vrot.slane %v1849, %v1856
        %v1859 = vunpack.c.l.s4 1934713408
        %v1860 = vunpack.c.0.s8 %v1859
        %v1861 = vlaneseq
        %v1862 = vshrl.u32 %v1861, 7
        %v1863 = vsub.s32 %v1860, %v1862
        %v1864 = vrot.slane %v1850, %v1863
        %v1865 = vcombine.low %v1841, %v1857
        %v1866 = vcombine.high %v1841, %v1857
        %v1867 = vcombine.low %v1848, %v1864
        %v1868 = vcombine.high %v1848, %v1864
        %v1869 = vcombine.low %v1637, %v1644
        %v1871 = vunpack.c.l.s4 1983009808
        %v1872 = vunpack.c.0.s8 %v1871
        %v1873 = vlaneseq
        %v1874 = vshrl.u32 %v1873, 7
        %v1875 = vsub.s32 %v1872, %v1874
        %v1876 = vrot.slane %v1869, %v1875
        %v1877 = vcombine.low %v1661, %v1662
        %v1879 = vunpack.c.l.s4 1983009808
        %v1880 = vunpack.c.0.s8 %v1879
        %v1881 = vlaneseq
        %v1882 = vshrl.u32 %v1881, 7
        %v1883 = vsub.s32 %v1880, %v1882
        %v1884 = vrot.slane %v1877, %v1883
        %v1885 = vcombine.low %v1653, %v1660
        %v1887 = vunpack.c.l.s4 1983009808
        %v1888 = vunpack.c.0.s8 %v1887
        %v1889 = vlaneseq
        %v1890 = vshrl.u32 %v1889, 7
        %v1891 = vsub.s32 %v1888, %v1890
        %v1892 = vrot.slane %v1885, %v1891
        %v1893 = vcombine.low %v1663, %v1664
        %v1895 = vunpack.c.l.s4 1983009808
        %v1896 = vunpack.c.0.s8 %v1895
        %v1897 = vlaneseq
        %v1898 = vshrl.u32 %v1897, 7
        %v1899 = vsub.s32 %v1896, %v1898
        %v1900 = vrot.slane %v1893, %v1899
        %v1901 = vcombine.low %v1876, %v1884
        %v1902 = vcombine.high %v1876, %v1884
        %v1904 = vunpack.c.l.s4 1934713408
        %v1905 = vunpack.c.0.s8 %v1904
        %v1906 = vlaneseq
        %v1907 = vshrl.u32 %v1906, 7
        %v1908 = vsub.s32 %v1905, %v1907
        %v1909 = vrot.slane %v1901, %v1908
        %v1911 = vunpack.c.l.s4 1934713408
        %v1912 = vunpack.c.0.s8 %v1911
        %v1913 = vlaneseq
        %v1914 = vshrl.u32 %v1913, 7
        %v1915 = vsub.s32 %v1912, %v1914
        %v1916 = vrot.slane %v1902, %v1915
        %v1917 = vcombine.low %v1892, %v1900
        %v1918 = vcombine.high %v1892, %v1900
        %v1920 = vunpack.c.l.s4 1934713408
        %v1921 = vunpack.c.0.s8 %v1920
        %v1922 = vlaneseq
        %v1923 = vshrl.u32 %v1922, 7
        %v1924 = vsub.s32 %v1921, %v1923
        %v1925 = vrot.slane %v1917, %v1924
        %v1927 = vunpack.c.l.s4 1934713408
        %v1928 = vunpack.c.0.s8 %v1927
        %v1929 = vlaneseq
        %v1930 = vshrl.u32 %v1929, 7
        %v1931 = vsub.s32 %v1928, %v1930
        %v1932 = vrot.slane %v1918, %v1931
        %v1933 = vcombine.low %v1909, %v1925
        %v1934 = vcombine.high %v1909, %v1925
        %v1935 = vcombine.low %v1916, %v1932
        %v1936 = vcombine.high %v1916, %v1932
        %v1937 = vcombine.low %v1705, %v1712
        %v1939 = vunpack.c.l.s4 1983009808
        %v1940 = vunpack.c.0.s8 %v1939
        %v1941 = vlaneseq
        %v1942 = vshrl.u32 %v1941, 7
        %v1943 = vsub.s32 %v1940, %v1942
        %v1944 = vrot.slane %v1937, %v1943
        %v1945 = vcombine.low %v1729, %v1730
        %v1947 = vunpack.c.l.s4 1983009808
        %v1948 = vunpack.c.0.s8 %v1947
        %v1949 = vlaneseq
        %v1950 = vshrl.u32 %v1949, 7
        %v1951 = vsub.s32 %v1948, %v1950
        %v1952 = vrot.slane %v1945, %v1951
        %v1953 = vcombine.low %v1721, %v1728
        %v1955 = vunpack.c.l.s4 1983009808
        %v1956 = vunpack.c.0.s8 %v1955
        %v1957 = vlaneseq
        %v1958 = vshrl.u32 %v1957, 7
        %v1959 = vsub.s32 %v1956, %v1958
        %v1960 = vrot.slane %v1953, %v1959
        %v1961 = vcombine.low %v1731, %v1732
        %v1963 = vunpack.c.l.s4 1983009808
        %v1964 = vunpack.c.0.s8 %v1963
        %v1965 = vlaneseq
        %v1966 = vshrl.u32 %v1965, 7
        %v1967 = vsub.s32 %v1964, %v1966
        %v1968 = vrot.slane %v1961, %v1967
        %v1969 = vcombine.low %v1944, %v1952
        %v1970 = vcombine.high %v1944, %v1952
        %v1972 = vunpack.c.l.s4 1934713408
        %v1973 = vunpack.c.0.s8 %v1972
        %v1974 = vlaneseq
        %v1975 = vshrl.u32 %v1974, 7
        %v1976 = vsub.s32 %v1973, %v1975
        %v1977 = vrot.slane %v1969, %v1976
        %v1979 = vunpack.c.l.s4 1934713408
        %v1980 = vunpack.c.0.s8 %v1979
        %v1981 = vlaneseq
        %v1982 = vshrl.u32 %v1981, 7
        %v1983 = vsub.s32 %v1980, %v1982
        %v1984 = vrot.slane %v1970, %v1983
        %v1985 = vcombine.low %v1960, %v1968
        %v1986 = vcombine.high %v1960, %v1968
        %v1988 = vunpack.c.l.s4 1934713408
        %v1989 = vunpack.c.0.s8 %v1988
        %v1990 = vlaneseq
        %v1991 = vshrl.u32 %v1990, 7
        %v1992 = vsub.s32 %v1989, %v1991
        %v1993 = vrot.slane %v1985, %v1992
        %v1995 = vunpack.c.l.s4 1934713408
        %v1996 = vunpack.c.0.s8 %v1995
        %v1997 = vlaneseq
        %v1998 = vshrl.u32 %v1997, 7
        %v1999 = vsub.s32 %v1996, %v1998
        %v2000 = vrot.slane %v1986, %v1999
        %v2001 = vcombine.low %v1977, %v1993
        %v2002 = vcombine.high %v1977, %v1993
        %v2003 = vcombine.low %v1984, %v2000
        %v2004 = vcombine.high %v1984, %v2000
        %v2005 = vpack.c.bf16 %v1865, %v1797
        %v2006 = vpack.c.bf16 %v2001, %v1933
        %v2007 = vpack.c.bf16 %v1866, %v1798
        %v2008 = vpack.c.bf16 %v2002, %v1934
        %v2009 = vpack.c.bf16 %v1867, %v1799
        %v2010 = vpack.c.bf16 %v2003, %v1935
        %v2011 = vpack.c.bf16 %v1868, %v1800
        %v2012 = vpack.c.bf16 %v2004, %v1936
        %2017 = vrot.lane.b32.xlu0 %v815, 96
        %v2018 = vpop.permute.xlu0 %2017
        %2019 = vrot.lane.b32.xlu0 %v818, 96
        %v2020 = vpop.permute.xlu0 %2019
        %2021 = vrot.lane.b32.xlu0 %v823, 96
        %v2022 = vpop.permute.xlu0 %2021
        %2023 = vrot.lane.b32.xlu0 %v826, 96
        %v2024 = vpop.permute.xlu0 %2023
        %2029 = vrot.lane.b32.xlu0 %v815, 64
        %v2030 = vpop.permute.xlu0 %2029
        %2031 = vrot.lane.b32.xlu0 %v818, 64
        %v2032 = vpop.permute.xlu0 %2031
        %2033 = vrot.lane.b32.xlu0 %v823, 64
        %v2034 = vpop.permute.xlu0 %2033
        %2035 = vrot.lane.b32.xlu0 %v826, 64
        %v2036 = vpop.permute.xlu0 %2035
        %2041 = vrot.lane.b32.xlu0 %v815, 32
        %v2042 = vpop.permute.xlu0 %2041
        %2043 = vrot.lane.b32.xlu0 %v818, 32
        %v2044 = vpop.permute.xlu0 %2043
        %2045 = vrot.lane.b32.xlu0 %v823, 32
        %v2046 = vpop.permute.xlu0 %2045
        %2047 = vrot.lane.b32.xlu0 %v826, 32
        %v2048 = vpop.permute.xlu0 %2047
        %v2053 = vcombine.low %v815, %v2030
        %v2054 = vcombine.high %v815, %v2030
        %v2056 = vunpack.c.l.s4 1983009808
        %v2057 = vunpack.c.0.s8 %v2056
        %v2058 = vlaneseq
        %v2059 = vshrl.u32 %v2058, 7
        %v2060 = vsub.s32 %v2057, %v2059
        %v2061 = vrot.slane %v2053, %v2060
        %v2063 = vunpack.c.l.s4 1983009808
        %v2064 = vunpack.c.0.s8 %v2063
        %v2065 = vlaneseq
        %v2066 = vshrl.u32 %v2065, 7
        %v2067 = vsub.s32 %v2064, %v2066
        %v2068 = vrot.slane %v2054, %v2067
        %v2069 = vcombine.low %v2018, %v2042
        %v2070 = vcombine.high %v2018, %v2042
        %v2072 = vunpack.c.l.s4 1983009808
        %v2073 = vunpack.c.0.s8 %v2072
        %v2074 = vlaneseq
        %v2075 = vshrl.u32 %v2074, 7
        %v2076 = vsub.s32 %v2073, %v2075
        %v2077 = vrot.slane %v2069, %v2076
        %v2079 = vunpack.c.l.s4 1983009808
        %v2080 = vunpack.c.0.s8 %v2079
        %v2081 = vlaneseq
        %v2082 = vshrl.u32 %v2081, 7
        %v2083 = vsub.s32 %v2080, %v2082
        %v2084 = vrot.slane %v2070, %v2083
        %v2085 = vcombine.low %v2061, %v2077
        %v2086 = vcombine.high %v2061, %v2077
        %v2088 = vunpack.c.l.s4 1934713408
        %v2089 = vunpack.c.0.s8 %v2088
        %v2090 = vlaneseq
        %v2091 = vshrl.u32 %v2090, 7
        %v2092 = vsub.s32 %v2089, %v2091
        %v2093 = vrot.slane %v2085, %v2092
        %v2095 = vunpack.c.l.s4 1934713408
        %v2096 = vunpack.c.0.s8 %v2095
        %v2097 = vlaneseq
        %v2098 = vshrl.u32 %v2097, 7
        %v2099 = vsub.s32 %v2096, %v2098
        %v2100 = vrot.slane %v2086, %v2099
        %v2101 = vcombine.low %v2068, %v2084
        %v2102 = vcombine.high %v2068, %v2084
        %v2104 = vunpack.c.l.s4 1934713408
        %v2105 = vunpack.c.0.s8 %v2104
        %v2106 = vlaneseq
        %v2107 = vshrl.u32 %v2106, 7
        %v2108 = vsub.s32 %v2105, %v2107
        %v2109 = vrot.slane %v2101, %v2108
        %v2111 = vunpack.c.l.s4 1934713408
        %v2112 = vunpack.c.0.s8 %v2111
        %v2113 = vlaneseq
        %v2114 = vshrl.u32 %v2113, 7
        %v2115 = vsub.s32 %v2112, %v2114
        %v2116 = vrot.slane %v2102, %v2115
        %v2117 = vcombine.high %v2093, 0.0
        %v2118 = vcombine.high %v2100, 0.0
        %v2119 = vcombine.high %v2109, 0.0
        %v2120 = vcombine.high %v2116, 0.0
        %v2121 = vcombine.low %v818, %v2032
        %v2122 = vcombine.high %v818, %v2032
        %v2124 = vunpack.c.l.s4 1983009808
        %v2125 = vunpack.c.0.s8 %v2124
        %v2126 = vlaneseq
        %v2127 = vshrl.u32 %v2126, 7
        %v2128 = vsub.s32 %v2125, %v2127
        %v2129 = vrot.slane %v2121, %v2128
        %v2131 = vunpack.c.l.s4 1983009808
        %v2132 = vunpack.c.0.s8 %v2131
        %v2133 = vlaneseq
        %v2134 = vshrl.u32 %v2133, 7
        %v2135 = vsub.s32 %v2132, %v2134
        %v2136 = vrot.slane %v2122, %v2135
        %v2137 = vcombine.low %v2020, %v2044
        %v2138 = vcombine.high %v2020, %v2044
        %v2140 = vunpack.c.l.s4 1983009808
        %v2141 = vunpack.c.0.s8 %v2140
        %v2142 = vlaneseq
        %v2143 = vshrl.u32 %v2142, 7
        %v2144 = vsub.s32 %v2141, %v2143
        %v2145 = vrot.slane %v2137, %v2144
        %v2147 = vunpack.c.l.s4 1983009808
        %v2148 = vunpack.c.0.s8 %v2147
        %v2149 = vlaneseq
        %v2150 = vshrl.u32 %v2149, 7
        %v2151 = vsub.s32 %v2148, %v2150
        %v2152 = vrot.slane %v2138, %v2151
        %v2153 = vcombine.low %v2129, %v2145
        %v2154 = vcombine.high %v2129, %v2145
        %v2156 = vunpack.c.l.s4 1934713408
        %v2157 = vunpack.c.0.s8 %v2156
        %v2158 = vlaneseq
        %v2159 = vshrl.u32 %v2158, 7
        %v2160 = vsub.s32 %v2157, %v2159
        %v2161 = vrot.slane %v2153, %v2160
        %v2163 = vunpack.c.l.s4 1934713408
        %v2164 = vunpack.c.0.s8 %v2163
        %v2165 = vlaneseq
        %v2166 = vshrl.u32 %v2165, 7
        %v2167 = vsub.s32 %v2164, %v2166
        %v2168 = vrot.slane %v2154, %v2167
        %v2169 = vcombine.low %v2136, %v2152
        %v2170 = vcombine.high %v2136, %v2152
        %v2172 = vunpack.c.l.s4 1934713408
        %v2173 = vunpack.c.0.s8 %v2172
        %v2174 = vlaneseq
        %v2175 = vshrl.u32 %v2174, 7
        %v2176 = vsub.s32 %v2173, %v2175
        %v2177 = vrot.slane %v2169, %v2176
        %v2179 = vunpack.c.l.s4 1934713408
        %v2180 = vunpack.c.0.s8 %v2179
        %v2181 = vlaneseq
        %v2182 = vshrl.u32 %v2181, 7
        %v2183 = vsub.s32 %v2180, %v2182
        %v2184 = vrot.slane %v2170, %v2183
        %v2185 = vcombine.high %v2161, 0.0
        %v2186 = vcombine.high %v2168, 0.0
        %v2187 = vcombine.high %v2177, 0.0
        %v2188 = vcombine.high %v2184, 0.0
        %v2189 = vcombine.low %v823, %v2034
        %v2190 = vcombine.high %v823, %v2034
        %v2192 = vunpack.c.l.s4 1983009808
        %v2193 = vunpack.c.0.s8 %v2192
        %v2194 = vlaneseq
        %v2195 = vshrl.u32 %v2194, 7
        %v2196 = vsub.s32 %v2193, %v2195
        %v2197 = vrot.slane %v2189, %v2196
        %v2199 = vunpack.c.l.s4 1983009808
        %v2200 = vunpack.c.0.s8 %v2199
        %v2201 = vlaneseq
        %v2202 = vshrl.u32 %v2201, 7
        %v2203 = vsub.s32 %v2200, %v2202
        %v2204 = vrot.slane %v2190, %v2203
        %v2205 = vcombine.low %v2022, %v2046
        %v2206 = vcombine.high %v2022, %v2046
        %v2208 = vunpack.c.l.s4 1983009808
        %v2209 = vunpack.c.0.s8 %v2208
        %v2210 = vlaneseq
        %v2211 = vshrl.u32 %v2210, 7
        %v2212 = vsub.s32 %v2209, %v2211
        %v2213 = vrot.slane %v2205, %v2212
        %v2215 = vunpack.c.l.s4 1983009808
        %v2216 = vunpack.c.0.s8 %v2215
        %v2217 = vlaneseq
        %v2218 = vshrl.u32 %v2217, 7
        %v2219 = vsub.s32 %v2216, %v2218
        %v2220 = vrot.slane %v2206, %v2219
        %v2221 = vcombine.low %v2197, %v2213
        %v2222 = vcombine.high %v2197, %v2213
        %v2224 = vunpack.c.l.s4 1934713408
        %v2225 = vunpack.c.0.s8 %v2224
        %v2226 = vlaneseq
        %v2227 = vshrl.u32 %v2226, 7
        %v2228 = vsub.s32 %v2225, %v2227
        %v2229 = vrot.slane %v2221, %v2228
        %v2231 = vunpack.c.l.s4 1934713408
        %v2232 = vunpack.c.0.s8 %v2231
        %v2233 = vlaneseq
        %v2234 = vshrl.u32 %v2233, 7
        %v2235 = vsub.s32 %v2232, %v2234
        %v2236 = vrot.slane %v2222, %v2235
        %v2237 = vcombine.low %v2204, %v2220
        %v2238 = vcombine.high %v2204, %v2220
        %v2240 = vunpack.c.l.s4 1934713408
        %v2241 = vunpack.c.0.s8 %v2240
        %v2242 = vlaneseq
        %v2243 = vshrl.u32 %v2242, 7
        %v2244 = vsub.s32 %v2241, %v2243
        %v2245 = vrot.slane %v2237, %v2244
        %v2247 = vunpack.c.l.s4 1934713408
        %v2248 = vunpack.c.0.s8 %v2247
        %v2249 = vlaneseq
        %v2250 = vshrl.u32 %v2249, 7
        %v2251 = vsub.s32 %v2248, %v2250
        %v2252 = vrot.slane %v2238, %v2251
        %v2253 = vcombine.high %v2229, 0.0
        %v2254 = vcombine.high %v2236, 0.0
        %v2255 = vcombine.high %v2245, 0.0
        %v2256 = vcombine.high %v2252, 0.0
        %v2257 = vcombine.low %v826, %v2036
        %v2258 = vcombine.high %v826, %v2036
        %v2260 = vunpack.c.l.s4 1983009808
        %v2261 = vunpack.c.0.s8 %v2260
        %v2262 = vlaneseq
        %v2263 = vshrl.u32 %v2262, 7
        %v2264 = vsub.s32 %v2261, %v2263
        %v2265 = vrot.slane %v2257, %v2264
        %v2267 = vunpack.c.l.s4 1983009808
        %v2268 = vunpack.c.0.s8 %v2267
        %v2269 = vlaneseq
        %v2270 = vshrl.u32 %v2269, 7
        %v2271 = vsub.s32 %v2268, %v2270
        %v2272 = vrot.slane %v2258, %v2271
        %v2273 = vcombine.low %v2024, %v2048
        %v2274 = vcombine.high %v2024, %v2048
        %v2276 = vunpack.c.l.s4 1983009808
        %v2277 = vunpack.c.0.s8 %v2276
        %v2278 = vlaneseq
        %v2279 = vshrl.u32 %v2278, 7
        %v2280 = vsub.s32 %v2277, %v2279
        %v2281 = vrot.slane %v2273, %v2280
        %v2283 = vunpack.c.l.s4 1983009808
        %v2284 = vunpack.c.0.s8 %v2283
        %v2285 = vlaneseq
        %v2286 = vshrl.u32 %v2285, 7
        %v2287 = vsub.s32 %v2284, %v2286
        %v2288 = vrot.slane %v2274, %v2287
        %v2289 = vcombine.low %v2265, %v2281
        %v2290 = vcombine.high %v2265, %v2281
        %v2292 = vunpack.c.l.s4 1934713408
        %v2293 = vunpack.c.0.s8 %v2292
        %v2294 = vlaneseq
        %v2295 = vshrl.u32 %v2294, 7
        %v2296 = vsub.s32 %v2293, %v2295
        %v2297 = vrot.slane %v2289, %v2296
        %v2299 = vunpack.c.l.s4 1934713408
        %v2300 = vunpack.c.0.s8 %v2299
        %v2301 = vlaneseq
        %v2302 = vshrl.u32 %v2301, 7
        %v2303 = vsub.s32 %v2300, %v2302
        %v2304 = vrot.slane %v2290, %v2303
        %v2305 = vcombine.low %v2272, %v2288
        %v2306 = vcombine.high %v2272, %v2288
        %v2308 = vunpack.c.l.s4 1934713408
        %v2309 = vunpack.c.0.s8 %v2308
        %v2310 = vlaneseq
        %v2311 = vshrl.u32 %v2310, 7
        %v2312 = vsub.s32 %v2309, %v2311
        %v2313 = vrot.slane %v2305, %v2312
        %v2315 = vunpack.c.l.s4 1934713408
        %v2316 = vunpack.c.0.s8 %v2315
        %v2317 = vlaneseq
        %v2318 = vshrl.u32 %v2317, 7
        %v2319 = vsub.s32 %v2316, %v2318
        %v2320 = vrot.slane %v2306, %v2319
        %v2321 = vcombine.high %v2297, 0.0
        %v2322 = vcombine.high %v2304, 0.0
        %v2323 = vcombine.high %v2313, 0.0
        %v2324 = vcombine.high %v2320, 0.0
        %v2325 = vcombine.low %v2093, %v2100
        %v2327 = vunpack.c.l.s4 1983009808
        %v2328 = vunpack.c.0.s8 %v2327
        %v2329 = vlaneseq
        %v2330 = vshrl.u32 %v2329, 7
        %v2331 = vsub.s32 %v2328, %v2330
        %v2332 = vrot.slane %v2325, %v2331
        %v2333 = vcombine.low %v2117, %v2118
        %v2335 = vunpack.c.l.s4 1983009808
        %v2336 = vunpack.c.0.s8 %v2335
        %v2337 = vlaneseq
        %v2338 = vshrl.u32 %v2337, 7
        %v2339 = vsub.s32 %v2336, %v2338
        %v2340 = vrot.slane %v2333, %v2339
        %v2341 = vcombine.low %v2109, %v2116
        %v2343 = vunpack.c.l.s4 1983009808
        %v2344 = vunpack.c.0.s8 %v2343
        %v2345 = vlaneseq
        %v2346 = vshrl.u32 %v2345, 7
        %v2347 = vsub.s32 %v2344, %v2346
        %v2348 = vrot.slane %v2341, %v2347
        %v2349 = vcombine.low %v2119, %v2120
        %v2351 = vunpack.c.l.s4 1983009808
        %v2352 = vunpack.c.0.s8 %v2351
        %v2353 = vlaneseq
        %v2354 = vshrl.u32 %v2353, 7
        %v2355 = vsub.s32 %v2352, %v2354
        %v2356 = vrot.slane %v2349, %v2355
        %v2357 = vcombine.low %v2332, %v2340
        %v2358 = vcombine.high %v2332, %v2340
        %v2360 = vunpack.c.l.s4 1934713408
        %v2361 = vunpack.c.0.s8 %v2360
        %v2362 = vlaneseq
        %v2363 = vshrl.u32 %v2362, 7
        %v2364 = vsub.s32 %v2361, %v2363
        %v2365 = vrot.slane %v2357, %v2364
        %v2367 = vunpack.c.l.s4 1934713408
        %v2368 = vunpack.c.0.s8 %v2367
        %v2369 = vlaneseq
        %v2370 = vshrl.u32 %v2369, 7
        %v2371 = vsub.s32 %v2368, %v2370
        %v2372 = vrot.slane %v2358, %v2371
        %v2373 = vcombine.low %v2348, %v2356
        %v2374 = vcombine.high %v2348, %v2356
        %v2376 = vunpack.c.l.s4 1934713408
        %v2377 = vunpack.c.0.s8 %v2376
        %v2378 = vlaneseq
        %v2379 = vshrl.u32 %v2378, 7
        %v2380 = vsub.s32 %v2377, %v2379
        %v2381 = vrot.slane %v2373, %v2380
        %v2383 = vunpack.c.l.s4 1934713408
        %v2384 = vunpack.c.0.s8 %v2383
        %v2385 = vlaneseq
        %v2386 = vshrl.u32 %v2385, 7
        %v2387 = vsub.s32 %v2384, %v2386
        %v2388 = vrot.slane %v2374, %v2387
        %v2389 = vcombine.low %v2365, %v2381
        %v2390 = vcombine.high %v2365, %v2381
        %v2391 = vcombine.low %v2372, %v2388
        %v2392 = vcombine.high %v2372, %v2388
        %v2393 = vcombine.low %v2161, %v2168
        %v2395 = vunpack.c.l.s4 1983009808
        %v2396 = vunpack.c.0.s8 %v2395
        %v2397 = vlaneseq
        %v2398 = vshrl.u32 %v2397, 7
        %v2399 = vsub.s32 %v2396, %v2398
        %v2400 = vrot.slane %v2393, %v2399
        %v2401 = vcombine.low %v2185, %v2186
        %v2403 = vunpack.c.l.s4 1983009808
        %v2404 = vunpack.c.0.s8 %v2403
        %v2405 = vlaneseq
        %v2406 = vshrl.u32 %v2405, 7
        %v2407 = vsub.s32 %v2404, %v2406
        %v2408 = vrot.slane %v2401, %v2407
        %v2409 = vcombine.low %v2177, %v2184
        %v2411 = vunpack.c.l.s4 1983009808
        %v2412 = vunpack.c.0.s8 %v2411
        %v2413 = vlaneseq
        %v2414 = vshrl.u32 %v2413, 7
        %v2415 = vsub.s32 %v2412, %v2414
        %v2416 = vrot.slane %v2409, %v2415
        %v2417 = vcombine.low %v2187, %v2188
        %v2419 = vunpack.c.l.s4 1983009808
        %v2420 = vunpack.c.0.s8 %v2419
        %v2421 = vlaneseq
        %v2422 = vshrl.u32 %v2421, 7
        %v2423 = vsub.s32 %v2420, %v2422
        %v2424 = vrot.slane %v2417, %v2423
        %v2425 = vcombine.low %v2400, %v2408
        %v2426 = vcombine.high %v2400, %v2408
        %v2428 = vunpack.c.l.s4 1934713408
        %v2429 = vunpack.c.0.s8 %v2428
        %v2430 = vlaneseq
        %v2431 = vshrl.u32 %v2430, 7
        %v2432 = vsub.s32 %v2429, %v2431
        %v2433 = vrot.slane %v2425, %v2432
        %v2435 = vunpack.c.l.s4 1934713408
        %v2436 = vunpack.c.0.s8 %v2435
        %v2437 = vlaneseq
        %v2438 = vshrl.u32 %v2437, 7
        %v2439 = vsub.s32 %v2436, %v2438
        %v2440 = vrot.slane %v2426, %v2439
        %v2441 = vcombine.low %v2416, %v2424
        %v2442 = vcombine.high %v2416, %v2424
        %v2444 = vunpack.c.l.s4 1934713408
        %v2445 = vunpack.c.0.s8 %v2444
        %v2446 = vlaneseq
        %v2447 = vshrl.u32 %v2446, 7
        %v2448 = vsub.s32 %v2445, %v2447
        %v2449 = vrot.slane %v2441, %v2448
        %v2451 = vunpack.c.l.s4 1934713408
        %v2452 = vunpack.c.0.s8 %v2451
        %v2453 = vlaneseq
        %v2454 = vshrl.u32 %v2453, 7
        %v2455 = vsub.s32 %v2452, %v2454
        %v2456 = vrot.slane %v2442, %v2455
        %v2457 = vcombine.low %v2433, %v2449
        %v2458 = vcombine.high %v2433, %v2449
        %v2459 = vcombine.low %v2440, %v2456
        %v2460 = vcombine.high %v2440, %v2456
        %v2461 = vcombine.low %v2229, %v2236
        %v2463 = vunpack.c.l.s4 1983009808
        %v2464 = vunpack.c.0.s8 %v2463
        %v2465 = vlaneseq
        %v2466 = vshrl.u32 %v2465, 7
        %v2467 = vsub.s32 %v2464, %v2466
        %v2468 = vrot.slane %v2461, %v2467
        %v2469 = vcombine.low %v2253, %v2254
        %v2471 = vunpack.c.l.s4 1983009808
        %v2472 = vunpack.c.0.s8 %v2471
        %v2473 = vlaneseq
        %v2474 = vshrl.u32 %v2473, 7
        %v2475 = vsub.s32 %v2472, %v2474
        %v2476 = vrot.slane %v2469, %v2475
        %v2477 = vcombine.low %v2245, %v2252
        %v2479 = vunpack.c.l.s4 1983009808
        %v2480 = vunpack.c.0.s8 %v2479
        %v2481 = vlaneseq
        %v2482 = vshrl.u32 %v2481, 7
        %v2483 = vsub.s32 %v2480, %v2482
        %v2484 = vrot.slane %v2477, %v2483
        %v2485 = vcombine.low %v2255, %v2256
        %v2487 = vunpack.c.l.s4 1983009808
        %v2488 = vunpack.c.0.s8 %v2487
        %v2489 = vlaneseq
        %v2490 = vshrl.u32 %v2489, 7
        %v2491 = vsub.s32 %v2488, %v2490
        %v2492 = vrot.slane %v2485, %v2491
        %v2493 = vcombine.low %v2468, %v2476
        %v2494 = vcombine.high %v2468, %v2476
        %v2496 = vunpack.c.l.s4 1934713408
        %v2497 = vunpack.c.0.s8 %v2496
        %v2498 = vlaneseq
        %v2499 = vshrl.u32 %v2498, 7
        %v2500 = vsub.s32 %v2497, %v2499
        %v2501 = vrot.slane %v2493, %v2500
        %v2503 = vunpack.c.l.s4 1934713408
        %v2504 = vunpack.c.0.s8 %v2503
        %v2505 = vlaneseq
        %v2506 = vshrl.u32 %v2505, 7
        %v2507 = vsub.s32 %v2504, %v2506
        %v2508 = vrot.slane %v2494, %v2507
        %v2509 = vcombine.low %v2484, %v2492
        %v2510 = vcombine.high %v2484, %v2492
        %v2512 = vunpack.c.l.s4 1934713408
        %v2513 = vunpack.c.0.s8 %v2512
        %v2514 = vlaneseq
        %v2515 = vshrl.u32 %v2514, 7
        %v2516 = vsub.s32 %v2513, %v2515
        %v2517 = vrot.slane %v2509, %v2516
        %v2519 = vunpack.c.l.s4 1934713408
        %v2520 = vunpack.c.0.s8 %v2519
        %v2521 = vlaneseq
        %v2522 = vshrl.u32 %v2521, 7
        %v2523 = vsub.s32 %v2520, %v2522
        %v2524 = vrot.slane %v2510, %v2523
        %v2525 = vcombine.low %v2501, %v2517
        %v2526 = vcombine.high %v2501, %v2517
        %v2527 = vcombine.low %v2508, %v2524
        %v2528 = vcombine.high %v2508, %v2524
        %v2529 = vcombine.low %v2297, %v2304
        %v2531 = vunpack.c.l.s4 1983009808
        %v2532 = vunpack.c.0.s8 %v2531
        %v2533 = vlaneseq
        %v2534 = vshrl.u32 %v2533, 7
        %v2535 = vsub.s32 %v2532, %v2534
        %v2536 = vrot.slane %v2529, %v2535
        %v2537 = vcombine.low %v2321, %v2322
        %v2539 = vunpack.c.l.s4 1983009808
        %v2540 = vunpack.c.0.s8 %v2539
        %v2541 = vlaneseq
        %v2542 = vshrl.u32 %v2541, 7
        %v2543 = vsub.s32 %v2540, %v2542
        %v2544 = vrot.slane %v2537, %v2543
        %v2545 = vcombine.low %v2313, %v2320
        %v2547 = vunpack.c.l.s4 1983009808
        %v2548 = vunpack.c.0.s8 %v2547
        %v2549 = vlaneseq
        %v2550 = vshrl.u32 %v2549, 7
        %v2551 = vsub.s32 %v2548, %v2550
        %v2552 = vrot.slane %v2545, %v2551
        %v2553 = vcombine.low %v2323, %v2324
        %v2555 = vunpack.c.l.s4 1983009808
        %v2556 = vunpack.c.0.s8 %v2555
        %v2557 = vlaneseq
        %v2558 = vshrl.u32 %v2557, 7
        %v2559 = vsub.s32 %v2556, %v2558
        %v2560 = vrot.slane %v2553, %v2559
        %v2561 = vcombine.low %v2536, %v2544
        %v2562 = vcombine.high %v2536, %v2544
        %v2564 = vunpack.c.l.s4 1934713408
        %v2565 = vunpack.c.0.s8 %v2564
        %v2566 = vlaneseq
        %v2567 = vshrl.u32 %v2566, 7
        %v2568 = vsub.s32 %v2565, %v2567
        %v2569 = vrot.slane %v2561, %v2568
        %v2571 = vunpack.c.l.s4 1934713408
        %v2572 = vunpack.c.0.s8 %v2571
        %v2573 = vlaneseq
        %v2574 = vshrl.u32 %v2573, 7
        %v2575 = vsub.s32 %v2572, %v2574
        %v2576 = vrot.slane %v2562, %v2575
        %v2577 = vcombine.low %v2552, %v2560
        %v2578 = vcombine.high %v2552, %v2560
        %v2580 = vunpack.c.l.s4 1934713408
        %v2581 = vunpack.c.0.s8 %v2580
        %v2582 = vlaneseq
        %v2583 = vshrl.u32 %v2582, 7
        %v2584 = vsub.s32 %v2581, %v2583
        %v2585 = vrot.slane %v2577, %v2584
        %v2587 = vunpack.c.l.s4 1934713408
        %v2588 = vunpack.c.0.s8 %v2587
        %v2589 = vlaneseq
        %v2590 = vshrl.u32 %v2589, 7
        %v2591 = vsub.s32 %v2588, %v2590
        %v2592 = vrot.slane %v2578, %v2591
        %v2593 = vcombine.low %v2569, %v2585
        %v2594 = vcombine.high %v2569, %v2585
        %v2595 = vcombine.low %v2576, %v2592
        %v2596 = vcombine.high %v2576, %v2592
        %v2597 = vpack.c.bf16 %v2457, %v2389
        %v2598 = vpack.c.bf16 %v2593, %v2525
        %v2599 = vpack.c.bf16 %v2458, %v2390
        %v2600 = vpack.c.bf16 %v2594, %v2526
        %v2601 = vpack.c.bf16 %v2459, %v2391
        %v2602 = vpack.c.bf16 %v2595, %v2527
        %v2603 = vpack.c.bf16 %v2460, %v2392
        %v2604 = vpack.c.bf16 %v2596, %v2528
        %vm2605 = vcmask 261120
        %v2607 = vsel %vm2605, %v1413, 0
        %v2610 = vsel %vm2605, %v2005, 0
        %2612 = vmatprep.subr.bf16.mxu0 0
        %2613 = vmatpush1.bf16.xpose.msra.mxu0 %v2610
        %2614 = vmatprep.subr.bf16.mxu0 0
        %2615 = vmatpush1.bf16.xpose.msra.mxu0 0
        %2616 = vmatprep.subr.bf16.mxu0 0
        %2617 = vmatpush1.bf16.xpose.msra.mxu0 0
        %2618 = vmatprep.subr.bf16.mxu0 0
        %2619 = vmatpush1.bf16.xpose.msra.mxu0 0
        %2620 = vmatprep.subr.bf16.mxu0 0
        %2621 = vmatpush1.bf16.xpose.msra.mxu0 0
        %2622 = vmatprep.subr.bf16.mxu0 0
        %2623 = vmatpush1.bf16.xpose.msra.mxu0 0
        %2624 = vmatprep.subr.bf16.mxu0 0
        %2625 = vmatpush1.bf16.xpose.msra.mxu0 0
        %2626 = vmatprep.subr.bf16.mxu0 0
        %2627 = vmatpush1.bf16.xpose.msra.mxu0 0
        %2628 = vmatprep.subr.bf16.mxu0 0
        %2629 = vmatpush1.bf16.xpose.msra.mxu0 0
        %2630 = vmatprep.subr.bf16.mxu0 0
        %2631 = vmatpush1.bf16.xpose.msra.mxu0 0
        %2632 = vmatprep.subr.bf16.mxu0 0
        %2633 = vmatpush1.bf16.xpose.msra.mxu0 0
        %2634 = vmatprep.subr.bf16.mxu0 0
        %2635 = vmatpush1.bf16.xpose.msra.mxu0 0
        %2636 = vmatprep.subr.bf16.mxu0 0
        %2637 = vmatpush1.bf16.xpose.msra.mxu0 0
        %2638 = vmatprep.subr.bf16.mxu0 0
        %2639 = vmatpush1.bf16.xpose.msra.mxu0 0
        %2640 = vmatprep.subr.bf16.mxu0 0
        %2641 = vmatpush1.bf16.xpose.msra.mxu0 0
        %2642 = vmatprep.subr.bf16.mxu0 0
        %2643 = vmatpush1.bf16.xpose.msra.mxu0 0
        %2644 = vmatprep.mubr.bf16.mxu0 0
        %2645 = vmatmul.mubr.bf16.gmra.mrb[0].mxu0 %v2607
        %v2646 = vpop.f32.mrb[0].mxu0
        %v2647 = vadd.f32 0.0, %v2646
        %v2648 = vpop.f32.mrb[0].mxu0
        %v2649 = vpop.f32.mrb[0].mxu0
        %v2650 = vadd.f32 0.0, %v2649
        %v2651 = vpop.f32.mrb[0].mxu0
        %2652 = vdwg.mxu0
        %v2654 = vsel %vm2605, %v1414, 0
        %v2657 = vsel %vm2605, %v2006, 0
        %2659 = vmatprep.subr.bf16.mxu0 0
        %2660 = vmatpush1.bf16.xpose.msra.mxu0 %v2657
        %2661 = vmatprep.subr.bf16.mxu0 0
        %2662 = vmatpush1.bf16.xpose.msra.mxu0 0
        %2663 = vmatprep.subr.bf16.mxu0 0
        %2664 = vmatpush1.bf16.xpose.msra.mxu0 0
        %2665 = vmatprep.subr.bf16.mxu0 0
        %2666 = vmatpush1.bf16.xpose.msra.mxu0 0
        %2667 = vmatprep.subr.bf16.mxu0 0
        %2668 = vmatpush1.bf16.xpose.msra.mxu0 0
        %2669 = vmatprep.subr.bf16.mxu0 0
        %2670 = vmatpush1.bf16.xpose.msra.mxu0 0
        %2671 = vmatprep.subr.bf16.mxu0 0
        %2672 = vmatpush1.bf16.xpose.msra.mxu0 0
        %2673 = vmatprep.subr.bf16.mxu0 0
        %2674 = vmatpush1.bf16.xpose.msra.mxu0 0
        %2675 = vmatprep.subr.bf16.mxu0 0
        %2676 = vmatpush1.bf16.xpose.msra.mxu0 0
        %2677 = vmatprep.subr.bf16.mxu0 0
        %2678 = vmatpush1.bf16.xpose.msra.mxu0 0
        %2679 = vmatprep.subr.bf16.mxu0 0
        %2680 = vmatpush1.bf16.xpose.msra.mxu0 0
        %2681 = vmatprep.subr.bf16.mxu0 0
        %2682 = vmatpush1.bf16.xpose.msra.mxu0 0
        %2683 = vmatprep.subr.bf16.mxu0 0
        %2684 = vmatpush1.bf16.xpose.msra.mxu0 0
        %2685 = vmatprep.subr.bf16.mxu0 0
        %2686 = vmatpush1.bf16.xpose.msra.mxu0 0
        %2687 = vmatprep.subr.bf16.mxu0 0
        %2688 = vmatpush1.bf16.xpose.msra.mxu0 0
        %2689 = vmatprep.subr.bf16.mxu0 0
        %2690 = vmatpush1.bf16.xpose.msra.mxu0 0
        %2691 = vmatprep.mubr.bf16.mxu0 0
        %2692 = vmatmul.mubr.bf16.gmra.mrb[0].mxu0 %v2654
        %v2693 = vpop.f32.mrb[0].mxu0
        %v2694 = vadd.f32 0.0, %v2693
        %v2695 = vpop.f32.mrb[0].mxu0
        %v2696 = vpop.f32.mrb[0].mxu0
        %v2697 = vadd.f32 0.0, %v2696
        %v2698 = vpop.f32.mrb[0].mxu0
        %2699 = vdwg.mxu0
        %v2701 = vsel %vm2605, %v1415, 0
        %v2704 = vsel %vm2605, %v2007, 0
        %2706 = vmatprep.subr.bf16.mxu0 0
        %2707 = vmatpush1.bf16.xpose.msra.mxu0 %v2704
        %2708 = vmatprep.subr.bf16.mxu0 0
        %2709 = vmatpush1.bf16.xpose.msra.mxu0 0
        %2710 = vmatprep.subr.bf16.mxu0 0
        %2711 = vmatpush1.bf16.xpose.msra.mxu0 0
        %2712 = vmatprep.subr.bf16.mxu0 0
        %2713 = vmatpush1.bf16.xpose.msra.mxu0 0
        %2714 = vmatprep.subr.bf16.mxu0 0
        %2715 = vmatpush1.bf16.xpose.msra.mxu0 0
        %2716 = vmatprep.subr.bf16.mxu0 0
        %2717 = vmatpush1.bf16.xpose.msra.mxu0 0
        %2718 = vmatprep.subr.bf16.mxu0 0
        %2719 = vmatpush1.bf16.xpose.msra.mxu0 0
        %2720 = vmatprep.subr.bf16.mxu0 0
        %2721 = vmatpush1.bf16.xpose.msra.mxu0 0
        %2722 = vmatprep.subr.bf16.mxu0 0
        %2723 = vmatpush1.bf16.xpose.msra.mxu0 0
        %2724 = vmatprep.subr.bf16.mxu0 0
        %2725 = vmatpush1.bf16.xpose.msra.mxu0 0
        %2726 = vmatprep.subr.bf16.mxu0 0
        %2727 = vmatpush1.bf16.xpose.msra.mxu0 0
        %2728 = vmatprep.subr.bf16.mxu0 0
        %2729 = vmatpush1.bf16.xpose.msra.mxu0 0
        %2730 = vmatprep.subr.bf16.mxu0 0
        %2731 = vmatpush1.bf16.xpose.msra.mxu0 0
        %2732 = vmatprep.subr.bf16.mxu0 0
        %2733 = vmatpush1.bf16.xpose.msra.mxu0 0
        %2734 = vmatprep.subr.bf16.mxu0 0
        %2735 = vmatpush1.bf16.xpose.msra.mxu0 0
        %2736 = vmatprep.subr.bf16.mxu0 0
        %2737 = vmatpush1.bf16.xpose.msra.mxu0 0
        %2738 = vmatprep.mubr.bf16.mxu0 0
        %2739 = vmatmul.mubr.bf16.gmra.mrb[0].mxu0 %v2701
        %v2740 = vpop.f32.mrb[0].mxu0
        %v2741 = vadd.f32 0.0, %v2740
        %v2742 = vpop.f32.mrb[0].mxu0
        %v2743 = vpop.f32.mrb[0].mxu0
        %v2744 = vadd.f32 0.0, %v2743
        %v2745 = vpop.f32.mrb[0].mxu0
        %2746 = vdwg.mxu0
        %v2748 = vsel %vm2605, %v1416, 0
        %v2751 = vsel %vm2605, %v2008, 0
        %2753 = vmatprep.subr.bf16.mxu0 0
        %2754 = vmatpush1.bf16.xpose.msra.mxu0 %v2751
        %2755 = vmatprep.subr.bf16.mxu0 0
        %2756 = vmatpush1.bf16.xpose.msra.mxu0 0
        %2757 = vmatprep.subr.bf16.mxu0 0
        %2758 = vmatpush1.bf16.xpose.msra.mxu0 0
        %2759 = vmatprep.subr.bf16.mxu0 0
        %2760 = vmatpush1.bf16.xpose.msra.mxu0 0
        %2761 = vmatprep.subr.bf16.mxu0 0
        %2762 = vmatpush1.bf16.xpose.msra.mxu0 0
        %2763 = vmatprep.subr.bf16.mxu0 0
        %2764 = vmatpush1.bf16.xpose.msra.mxu0 0
        %2765 = vmatprep.subr.bf16.mxu0 0
        %2766 = vmatpush1.bf16.xpose.msra.mxu0 0
        %2767 = vmatprep.subr.bf16.mxu0 0
        %2768 = vmatpush1.bf16.xpose.msra.mxu0 0
        %2769 = vmatprep.subr.bf16.mxu0 0
        %2770 = vmatpush1.bf16.xpose.msra.mxu0 0
        %2771 = vmatprep.subr.bf16.mxu0 0
        %2772 = vmatpush1.bf16.xpose.msra.mxu0 0
        %2773 = vmatprep.subr.bf16.mxu0 0
        %2774 = vmatpush1.bf16.xpose.msra.mxu0 0
        %2775 = vmatprep.subr.bf16.mxu0 0
        %2776 = vmatpush1.bf16.xpose.msra.mxu0 0
        %2777 = vmatprep.subr.bf16.mxu0 0
        %2778 = vmatpush1.bf16.xpose.msra.mxu0 0
        %2779 = vmatprep.subr.bf16.mxu0 0
        %2780 = vmatpush1.bf16.xpose.msra.mxu0 0
        %2781 = vmatprep.subr.bf16.mxu0 0
        %2782 = vmatpush1.bf16.xpose.msra.mxu0 0
        %2783 = vmatprep.subr.bf16.mxu0 0
        %2784 = vmatpush1.bf16.xpose.msra.mxu0 0
        %2785 = vmatprep.mubr.bf16.mxu0 0
        %2786 = vmatmul.mubr.bf16.gmra.mrb[0].mxu0 %v2748
        %v2787 = vpop.f32.mrb[0].mxu0
        %v2788 = vadd.f32 0.0, %v2787
        %v2789 = vpop.f32.mrb[0].mxu0
        %v2790 = vpop.f32.mrb[0].mxu0
        %v2791 = vadd.f32 0.0, %v2790
        %v2792 = vpop.f32.mrb[0].mxu0
        %2793 = vdwg.mxu0
        %v2795 = vsel %vm2605, %v1417, 0
        %v2798 = vsel %vm2605, %v2009, 0
        %2800 = vmatprep.subr.bf16.mxu0 0
        %2801 = vmatpush1.bf16.xpose.msra.mxu0 %v2798
        %2802 = vmatprep.subr.bf16.mxu0 0
        %2803 = vmatpush1.bf16.xpose.msra.mxu0 0
        %2804 = vmatprep.subr.bf16.mxu0 0
        %2805 = vmatpush1.bf16.xpose.msra.mxu0 0
        %2806 = vmatprep.subr.bf16.mxu0 0
        %2807 = vmatpush1.bf16.xpose.msra.mxu0 0
        %2808 = vmatprep.subr.bf16.mxu0 0
        %2809 = vmatpush1.bf16.xpose.msra.mxu0 0
        %2810 = vmatprep.subr.bf16.mxu0 0
        %2811 = vmatpush1.bf16.xpose.msra.mxu0 0
        %2812 = vmatprep.subr.bf16.mxu0 0
        %2813 = vmatpush1.bf16.xpose.msra.mxu0 0
        %2814 = vmatprep.subr.bf16.mxu0 0
        %2815 = vmatpush1.bf16.xpose.msra.mxu0 0
        %2816 = vmatprep.subr.bf16.mxu0 0
        %2817 = vmatpush1.bf16.xpose.msra.mxu0 0
        %2818 = vmatprep.subr.bf16.mxu0 0
        %2819 = vmatpush1.bf16.xpose.msra.mxu0 0
        %2820 = vmatprep.subr.bf16.mxu0 0
        %2821 = vmatpush1.bf16.xpose.msra.mxu0 0
        %2822 = vmatprep.subr.bf16.mxu0 0
        %2823 = vmatpush1.bf16.xpose.msra.mxu0 0
        %2824 = vmatprep.subr.bf16.mxu0 0
        %2825 = vmatpush1.bf16.xpose.msra.mxu0 0
        %2826 = vmatprep.subr.bf16.mxu0 0
        %2827 = vmatpush1.bf16.xpose.msra.mxu0 0
        %2828 = vmatprep.subr.bf16.mxu0 0
        %2829 = vmatpush1.bf16.xpose.msra.mxu0 0
        %2830 = vmatprep.subr.bf16.mxu0 0
        %2831 = vmatpush1.bf16.xpose.msra.mxu0 0
        %2832 = vmatprep.mubr.bf16.mxu0 0
        %2833 = vmatmul.mubr.bf16.gmra.mrb[0].mxu0 %v2795
        %v2834 = vpop.f32.mrb[0].mxu0
        %v2835 = vadd.f32 0.0, %v2834
        %v2836 = vpop.f32.mrb[0].mxu0
        %v2837 = vpop.f32.mrb[0].mxu0
        %v2838 = vadd.f32 0.0, %v2837
        %v2839 = vpop.f32.mrb[0].mxu0
        %2840 = vdwg.mxu0
        %v2842 = vsel %vm2605, %v1418, 0
        %v2845 = vsel %vm2605, %v2010, 0
        %2847 = vmatprep.subr.bf16.mxu0 0
        %2848 = vmatpush1.bf16.xpose.msra.mxu0 %v2845
        %2849 = vmatprep.subr.bf16.mxu0 0
        %2850 = vmatpush1.bf16.xpose.msra.mxu0 0
        %2851 = vmatprep.subr.bf16.mxu0 0
        %2852 = vmatpush1.bf16.xpose.msra.mxu0 0
        %2853 = vmatprep.subr.bf16.mxu0 0
        %2854 = vmatpush1.bf16.xpose.msra.mxu0 0
        %2855 = vmatprep.subr.bf16.mxu0 0
        %2856 = vmatpush1.bf16.xpose.msra.mxu0 0
        %2857 = vmatprep.subr.bf16.mxu0 0
        %2858 = vmatpush1.bf16.xpose.msra.mxu0 0
        %2859 = vmatprep.subr.bf16.mxu0 0
        %2860 = vmatpush1.bf16.xpose.msra.mxu0 0
        %2861 = vmatprep.subr.bf16.mxu0 0
        %2862 = vmatpush1.bf16.xpose.msra.mxu0 0
        %2863 = vmatprep.subr.bf16.mxu0 0
        %2864 = vmatpush1.bf16.xpose.msra.mxu0 0
        %2865 = vmatprep.subr.bf16.mxu0 0
        %2866 = vmatpush1.bf16.xpose.msra.mxu0 0
        %2867 = vmatprep.subr.bf16.mxu0 0
        %2868 = vmatpush1.bf16.xpose.msra.mxu0 0
        %2869 = vmatprep.subr.bf16.mxu0 0
        %2870 = vmatpush1.bf16.xpose.msra.mxu0 0
        %2871 = vmatprep.subr.bf16.mxu0 0
        %2872 = vmatpush1.bf16.xpose.msra.mxu0 0
        %2873 = vmatprep.subr.bf16.mxu0 0
        %2874 = vmatpush1.bf16.xpose.msra.mxu0 0
        %2875 = vmatprep.subr.bf16.mxu0 0
        %2876 = vmatpush1.bf16.xpose.msra.mxu0 0
        %2877 = vmatprep.subr.bf16.mxu0 0
        %2878 = vmatpush1.bf16.xpose.msra.mxu0 0
        %2879 = vmatprep.mubr.bf16.mxu0 0
        %2880 = vmatmul.mubr.bf16.gmra.mrb[0].mxu0 %v2842
        %v2881 = vpop.f32.mrb[0].mxu0
        %v2882 = vadd.f32 0.0, %v2881
        %v2883 = vpop.f32.mrb[0].mxu0
        %v2884 = vpop.f32.mrb[0].mxu0
        %v2885 = vadd.f32 0.0, %v2884
        %v2886 = vpop.f32.mrb[0].mxu0
        %2887 = vdwg.mxu0
        %v2889 = vsel %vm2605, %v1419, 0
        %v2892 = vsel %vm2605, %v2011, 0
        %2894 = vmatprep.subr.bf16.mxu0 0
        %2895 = vmatpush1.bf16.xpose.msra.mxu0 %v2892
        %2896 = vmatprep.subr.bf16.mxu0 0
        %2897 = vmatpush1.bf16.xpose.msra.mxu0 0
        %2898 = vmatprep.subr.bf16.mxu0 0
        %2899 = vmatpush1.bf16.xpose.msra.mxu0 0
        %2900 = vmatprep.subr.bf16.mxu0 0
        %2901 = vmatpush1.bf16.xpose.msra.mxu0 0
        %2902 = vmatprep.subr.bf16.mxu0 0
        %2903 = vmatpush1.bf16.xpose.msra.mxu0 0
        %2904 = vmatprep.subr.bf16.mxu0 0
        %2905 = vmatpush1.bf16.xpose.msra.mxu0 0
        %2906 = vmatprep.subr.bf16.mxu0 0
        %2907 = vmatpush1.bf16.xpose.msra.mxu0 0
        %2908 = vmatprep.subr.bf16.mxu0 0
        %2909 = vmatpush1.bf16.xpose.msra.mxu0 0
        %2910 = vmatprep.subr.bf16.mxu0 0
        %2911 = vmatpush1.bf16.xpose.msra.mxu0 0
        %2912 = vmatprep.subr.bf16.mxu0 0
        %2913 = vmatpush1.bf16.xpose.msra.mxu0 0
        %2914 = vmatprep.subr.bf16.mxu0 0
        %2915 = vmatpush1.bf16.xpose.msra.mxu0 0
        %2916 = vmatprep.subr.bf16.mxu0 0
        %2917 = vmatpush1.bf16.xpose.msra.mxu0 0
        %2918 = vmatprep.subr.bf16.mxu0 0
        %2919 = vmatpush1.bf16.xpose.msra.mxu0 0
        %2920 = vmatprep.subr.bf16.mxu0 0
        %2921 = vmatpush1.bf16.xpose.msra.mxu0 0
        %2922 = vmatprep.subr.bf16.mxu0 0
        %2923 = vmatpush1.bf16.xpose.msra.mxu0 0
        %2924 = vmatprep.subr.bf16.mxu0 0
        %2925 = vmatpush1.bf16.xpose.msra.mxu0 0
        %2926 = vmatprep.mubr.bf16.mxu0 0
        %2927 = vmatmul.mubr.bf16.gmra.mrb[0].mxu0 %v2889
        %v2928 = vpop.f32.mrb[0].mxu0
        %v2929 = vadd.f32 0.0, %v2928
        %v2930 = vpop.f32.mrb[0].mxu0
        %v2931 = vpop.f32.mrb[0].mxu0
        %v2932 = vadd.f32 0.0, %v2931
        %v2933 = vpop.f32.mrb[0].mxu0
        %2934 = vdwg.mxu0
        %v2936 = vsel %vm2605, %v1420, 0
        %v2939 = vsel %vm2605, %v2012, 0
        %2941 = vmatprep.subr.bf16.mxu0 0
        %2942 = vmatpush1.bf16.xpose.msra.mxu0 %v2939
        %2943 = vmatprep.subr.bf16.mxu0 0
        %2944 = vmatpush1.bf16.xpose.msra.mxu0 0
        %2945 = vmatprep.subr.bf16.mxu0 0
        %2946 = vmatpush1.bf16.xpose.msra.mxu0 0
        %2947 = vmatprep.subr.bf16.mxu0 0
        %2948 = vmatpush1.bf16.xpose.msra.mxu0 0
        %2949 = vmatprep.subr.bf16.mxu0 0
        %2950 = vmatpush1.bf16.xpose.msra.mxu0 0
        %2951 = vmatprep.subr.bf16.mxu0 0
        %2952 = vmatpush1.bf16.xpose.msra.mxu0 0
        %2953 = vmatprep.subr.bf16.mxu0 0
        %2954 = vmatpush1.bf16.xpose.msra.mxu0 0
        %2955 = vmatprep.subr.bf16.mxu0 0
        %2956 = vmatpush1.bf16.xpose.msra.mxu0 0
        %2957 = vmatprep.subr.bf16.mxu0 0
        %2958 = vmatpush1.bf16.xpose.msra.mxu0 0
        %2959 = vmatprep.subr.bf16.mxu0 0
        %2960 = vmatpush1.bf16.xpose.msra.mxu0 0
        %2961 = vmatprep.subr.bf16.mxu0 0
        %2962 = vmatpush1.bf16.xpose.msra.mxu0 0
        %2963 = vmatprep.subr.bf16.mxu0 0
        %2964 = vmatpush1.bf16.xpose.msra.mxu0 0
        %2965 = vmatprep.subr.bf16.mxu0 0
        %2966 = vmatpush1.bf16.xpose.msra.mxu0 0
        %2967 = vmatprep.subr.bf16.mxu0 0
        %2968 = vmatpush1.bf16.xpose.msra.mxu0 0
        %2969 = vmatprep.subr.bf16.mxu0 0
        %2970 = vmatpush1.bf16.xpose.msra.mxu0 0
        %2971 = vmatprep.subr.bf16.mxu0 0
        %2972 = vmatpush1.bf16.xpose.msra.mxu0 0
        %2973 = vmatprep.mubr.bf16.mxu0 0
        %2974 = vmatmul.mubr.bf16.gmra.mrb[0].mxu0 %v2936
        %v2975 = vpop.f32.mrb[0].mxu0
        %v2976 = vadd.f32 0.0, %v2975
        %v2977 = vpop.f32.mrb[0].mxu0
        %v2978 = vpop.f32.mrb[0].mxu0
        %v2979 = vadd.f32 0.0, %v2978
        %v2980 = vpop.f32.mrb[0].mxu0
        %2981 = vdwg.mxu0
        %vm2982 = vcmask 130048
        %v2983 = vsel %vm2982, %v2647, -inf
        %2984 = vmax.xlane.f32.xlu0 %v2983
        %v2985 = vpop.xlane.xlu0 %2984
        %v2986 = vsel %vm2982, %v2650, -inf
        %2987 = vmax.xlane.f32.xlu0 %v2986
        %v2988 = vpop.xlane.xlu0 %2987
        %v2989 = vsel %vm2982, %v2694, -inf
        %2990 = vmax.xlane.f32.xlu0 %v2989
        %v2991 = vpop.xlane.xlu0 %2990
        %v2992 = vsel %vm2982, %v2697, -inf
        %2993 = vmax.xlane.f32.xlu0 %v2992
        %v2994 = vpop.xlane.xlu0 %2993
        %v2995 = vsel %vm2982, %v2741, -inf
        %2996 = vmax.xlane.f32.xlu0 %v2995
        %v2997 = vpop.xlane.xlu0 %2996
        %v2998 = vsel %vm2982, %v2744, -inf
        %2999 = vmax.xlane.f32.xlu0 %v2998
        %v3000 = vpop.xlane.xlu0 %2999
        %v3001 = vsel %vm2982, %v2788, -inf
        %3002 = vmax.xlane.f32.xlu0 %v3001
        %v3003 = vpop.xlane.xlu0 %3002
        %v3004 = vsel %vm2982, %v2791, -inf
        %3005 = vmax.xlane.f32.xlu0 %v3004
        %v3006 = vpop.xlane.xlu0 %3005
        %v3007 = vsel %vm2982, %v2835, -inf
        %3008 = vmax.xlane.f32.xlu0 %v3007
        %v3009 = vpop.xlane.xlu0 %3008
        %v3010 = vsel %vm2982, %v2838, -inf
        %3011 = vmax.xlane.f32.xlu0 %v3010
        %v3012 = vpop.xlane.xlu0 %3011
        %v3013 = vsel %vm2982, %v2882, -inf
        %3014 = vmax.xlane.f32.xlu0 %v3013
        %v3015 = vpop.xlane.xlu0 %3014
        %v3016 = vsel %vm2982, %v2885, -inf
        %3017 = vmax.xlane.f32.xlu0 %v3016
        %v3018 = vpop.xlane.xlu0 %3017
        %v3019 = vsel %vm2982, %v2929, -inf
        %3020 = vmax.xlane.f32.xlu0 %v3019
        %v3021 = vpop.xlane.xlu0 %3020
        %v3022 = vsel %vm2982, %v2932, -inf
        %3023 = vmax.xlane.f32.xlu0 %v3022
        %v3024 = vpop.xlane.xlu0 %3023
        %v3025 = vsel %vm2982, %v2976, -inf
        %3026 = vmax.xlane.f32.xlu0 %v3025
        %v3027 = vpop.xlane.xlu0 %3026
        %v3028 = vsel %vm2982, %v2979, -inf
        %3029 = vmax.xlane.f32.xlu0 %v3028
        %v3030 = vpop.xlane.xlu0 %3029
        %v3031 = vsub.f32 %v2647, %v2985
        %v3032 = vsub.f32 %v2650, %v2988
        %v3033 = vsub.f32 %v2694, %v2991
        %v3034 = vsub.f32 %v2697, %v2994
        %v3035 = vsub.f32 %v2741, %v2997
        %v3036 = vsub.f32 %v2744, %v3000
        %v3037 = vsub.f32 %v2788, %v3003
        %v3038 = vsub.f32 %v2791, %v3006
        %v3039 = vsub.f32 %v2835, %v3009
        %v3040 = vsub.f32 %v2838, %v3012
        %v3041 = vsub.f32 %v2882, %v3015
        %v3042 = vsub.f32 %v2885, %v3018
        %v3043 = vsub.f32 %v2929, %v3021
        %v3044 = vsub.f32 %v2932, %v3024
        %v3045 = vsub.f32 %v2976, %v3027
        %v3046 = vsub.f32 %v2979, %v3030
        %v3047 = vmul.f32 %v3031, 1.442695
        %v3048 = vpow.pop %v3047
        %v3049 = vmul.f32 %v3032, 1.442695
        %v3050 = vpow.pop %v3049
        %v3051 = vmul.f32 %v3033, 1.442695
        %v3052 = vpow.pop %v3051
        %v3053 = vmul.f32 %v3034, 1.442695
        %v3054 = vpow.pop %v3053
        %v3055 = vmul.f32 %v3035, 1.442695
        %v3056 = vpow.pop %v3055
        %v3057 = vmul.f32 %v3036, 1.442695
        %v3058 = vpow.pop %v3057
        %v3059 = vmul.f32 %v3037, 1.442695
        %v3060 = vpow.pop %v3059
        %v3061 = vmul.f32 %v3038, 1.442695
        %v3062 = vpow.pop %v3061
        %v3063 = vmul.f32 %v3039, 1.442695
        %v3064 = vpow.pop %v3063
        %v3065 = vmul.f32 %v3040, 1.442695
        %v3066 = vpow.pop %v3065
        %v3067 = vmul.f32 %v3041, 1.442695
        %v3068 = vpow.pop %v3067
        %v3069 = vmul.f32 %v3042, 1.442695
        %v3070 = vpow.pop %v3069
        %v3071 = vmul.f32 %v3043, 1.442695
        %v3072 = vpow.pop %v3071
        %v3073 = vmul.f32 %v3044, 1.442695
        %v3074 = vpow.pop %v3073
        %v3075 = vmul.f32 %v3045, 1.442695
        %v3076 = vpow.pop %v3075
        %v3077 = vmul.f32 %v3046, 1.442695
        %v3078 = vpow.pop %v3077
        %v3079 = vsel %vm2982, %v3048, 0.0
        %3080 = vadd.xlane.f32.xlu0 %v3079
        %v3081 = vpop.xlane.xlu0 %3080
        %v3082 = vsel %vm2982, %v3050, 0.0
        %3083 = vadd.xlane.f32.xlu0 %v3082
        %v3084 = vpop.xlane.xlu0 %3083
        %v3085 = vsel %vm2982, %v3052, 0.0
        %3086 = vadd.xlane.f32.xlu0 %v3085
        %v3087 = vpop.xlane.xlu0 %3086
        %v3088 = vsel %vm2982, %v3054, 0.0
        %3089 = vadd.xlane.f32.xlu0 %v3088
        %v3090 = vpop.xlane.xlu0 %3089
        %v3091 = vsel %vm2982, %v3056, 0.0
        %3092 = vadd.xlane.f32.xlu0 %v3091
        %v3093 = vpop.xlane.xlu0 %3092
        %v3094 = vsel %vm2982, %v3058, 0.0
        %3095 = vadd.xlane.f32.xlu0 %v3094
        %v3096 = vpop.xlane.xlu0 %3095
        %v3097 = vsel %vm2982, %v3060, 0.0
        %3098 = vadd.xlane.f32.xlu0 %v3097
        %v3099 = vpop.xlane.xlu0 %3098
        %v3100 = vsel %vm2982, %v3062, 0.0
        %3101 = vadd.xlane.f32.xlu0 %v3100
        %v3102 = vpop.xlane.xlu0 %3101
        %v3103 = vsel %vm2982, %v3064, 0.0
        %3104 = vadd.xlane.f32.xlu0 %v3103
        %v3105 = vpop.xlane.xlu0 %3104
        %v3106 = vsel %vm2982, %v3066, 0.0
        %3107 = vadd.xlane.f32.xlu0 %v3106
        %v3108 = vpop.xlane.xlu0 %3107
        %v3109 = vsel %vm2982, %v3068, 0.0
        %3110 = vadd.xlane.f32.xlu0 %v3109
        %v3111 = vpop.xlane.xlu0 %3110
        %v3112 = vsel %vm2982, %v3070, 0.0
        %3113 = vadd.xlane.f32.xlu0 %v3112
        %v3114 = vpop.xlane.xlu0 %3113
        %v3115 = vsel %vm2982, %v3072, 0.0
        %3116 = vadd.xlane.f32.xlu0 %v3115
        %v3117 = vpop.xlane.xlu0 %3116
        %v3118 = vsel %vm2982, %v3074, 0.0
        %3119 = vadd.xlane.f32.xlu0 %v3118
        %v3120 = vpop.xlane.xlu0 %3119
        %v3121 = vsel %vm2982, %v3076, 0.0
        %3122 = vadd.xlane.f32.xlu0 %v3121
        %v3123 = vpop.xlane.xlu0 %3122
        %v3124 = vsel %vm2982, %v3078, 0.0
        %3125 = vadd.xlane.f32.xlu0 %v3124
        %v3126 = vpop.xlane.xlu0 %3125
        %v3127 = vrcp.pop %v3081
        %v3128 = vrcp.pop %v3084
        %v3129 = vrcp.pop %v3087
        %v3130 = vrcp.pop %v3090
        %v3131 = vrcp.pop %v3093
        %v3132 = vrcp.pop %v3096
        %v3133 = vrcp.pop %v3099
        %v3134 = vrcp.pop %v3102
        %v3135 = vrcp.pop %v3105
        %v3136 = vrcp.pop %v3108
        %v3137 = vrcp.pop %v3111
        %v3138 = vrcp.pop %v3114
        %v3139 = vrcp.pop %v3117
        %v3140 = vrcp.pop %v3120
        %v3141 = vrcp.pop %v3123
        %v3142 = vrcp.pop %v3126
        %v3143 = vmul.f32 %v3048, %v3127
        %v3144 = vmul.f32 %v3050, %v3128
        %v3145 = vmul.f32 %v3052, %v3129
        %v3146 = vmul.f32 %v3054, %v3130
        %v3147 = vmul.f32 %v3056, %v3131
        %v3148 = vmul.f32 %v3058, %v3132
        %v3149 = vmul.f32 %v3060, %v3133
        %v3150 = vmul.f32 %v3062, %v3134
        %v3151 = vmul.f32 %v3064, %v3135
        %v3152 = vmul.f32 %v3066, %v3136
        %v3153 = vmul.f32 %v3068, %v3137
        %v3154 = vmul.f32 %v3070, %v3138
        %v3155 = vmul.f32 %v3072, %v3139
        %v3156 = vmul.f32 %v3074, %v3140
        %v3157 = vmul.f32 %v3076, %v3141
        %v3158 = vmul.f32 %v3078, %v3142
        %v3159 = vpack.c.bf16 %v3144, %v3143
        %v3160 = vpack.c.bf16 %v3146, %v3145
        %v3161 = vpack.c.bf16 %v3148, %v3147
        %v3162 = vpack.c.bf16 %v3150, %v3149
        %v3163 = vpack.c.bf16 %v3152, %v3151
        %v3164 = vpack.c.bf16 %v3154, %v3153
        %v3165 = vpack.c.bf16 %v3156, %v3155
        %v3166 = vpack.c.bf16 %v3158, %v3157
        %v3168 = vsel %vm2982, %v3159, 0
        %3170 = vmatprep.subr.bf16.mxu0 0
        %3171 = vmatpush1.bf16.msra.mxu0 %v2597
        %3172 = vmatprep.subr.bf16.mxu0 0
        %3173 = vmatpush1.bf16.msra.mxu0 0
        %3174 = vmatprep.subr.bf16.mxu0 0
        %3175 = vmatpush1.bf16.msra.mxu0 0
        %3176 = vmatprep.subr.bf16.mxu0 0
        %3177 = vmatpush1.bf16.msra.mxu0 0
        %3178 = vmatprep.subr.bf16.mxu0 0
        %3179 = vmatpush1.bf16.msra.mxu0 0
        %3180 = vmatprep.subr.bf16.mxu0 0
        %3181 = vmatpush1.bf16.msra.mxu0 0
        %3182 = vmatprep.subr.bf16.mxu0 0
        %3183 = vmatpush1.bf16.msra.mxu0 0
        %3184 = vmatprep.subr.bf16.mxu0 0
        %3185 = vmatpush1.bf16.msra.mxu0 0
        %3186 = vmatprep.subr.bf16.mxu0 0
        %3187 = vmatpush1.bf16.msra.mxu0 0
        %3188 = vmatprep.subr.bf16.mxu0 0
        %3189 = vmatpush1.bf16.msra.mxu0 0
        %3190 = vmatprep.subr.bf16.mxu0 0
        %3191 = vmatpush1.bf16.msra.mxu0 0
        %3192 = vmatprep.subr.bf16.mxu0 0
        %3193 = vmatpush1.bf16.msra.mxu0 0
        %3194 = vmatprep.subr.bf16.mxu0 0
        %3195 = vmatpush1.bf16.msra.mxu0 0
        %3196 = vmatprep.subr.bf16.mxu0 0
        %3197 = vmatpush1.bf16.msra.mxu0 0
        %3198 = vmatprep.subr.bf16.mxu0 0
        %3199 = vmatpush1.bf16.msra.mxu0 0
        %3200 = vmatprep.subr.bf16.mxu0 0
        %3201 = vmatpush1.bf16.msra.mxu0 0
        %3202 = vmatprep.mubr.bf16.mxu0 0
        %3203 = vmatmul.mubr.bf16.gmra.mrb[0].mxu0 %v3168
        %v3204 = vpop.f32.mrb[0].mxu0
        %v3205 = vadd.f32 0.0, %v3204
        %v3206 = vpop.f32.mrb[0].mxu0
        %v3207 = vpop.f32.mrb[0].mxu0
        %v3208 = vadd.f32 0.0, %v3207
        %v3209 = vpop.f32.mrb[0].mxu0
        %3210 = vdwg.mxu0
        %v3212 = vsel %vm2982, %v3160, 0
        %3214 = vmatprep.subr.bf16.mxu0 0
        %3215 = vmatpush1.bf16.msra.mxu0 %v2598
        %3216 = vmatprep.subr.bf16.mxu0 0
        %3217 = vmatpush1.bf16.msra.mxu0 0
        %3218 = vmatprep.subr.bf16.mxu0 0
        %3219 = vmatpush1.bf16.msra.mxu0 0
        %3220 = vmatprep.subr.bf16.mxu0 0
        %3221 = vmatpush1.bf16.msra.mxu0 0
        %3222 = vmatprep.subr.bf16.mxu0 0
        %3223 = vmatpush1.bf16.msra.mxu0 0
        %3224 = vmatprep.subr.bf16.mxu0 0
        %3225 = vmatpush1.bf16.msra.mxu0 0
        %3226 = vmatprep.subr.bf16.mxu0 0
        %3227 = vmatpush1.bf16.msra.mxu0 0
        %3228 = vmatprep.subr.bf16.mxu0 0
        %3229 = vmatpush1.bf16.msra.mxu0 0
        %3230 = vmatprep.subr.bf16.mxu0 0
        %3231 = vmatpush1.bf16.msra.mxu0 0
        %3232 = vmatprep.subr.bf16.mxu0 0
        %3233 = vmatpush1.bf16.msra.mxu0 0
        %3234 = vmatprep.subr.bf16.mxu0 0
        %3235 = vmatpush1.bf16.msra.mxu0 0
        %3236 = vmatprep.subr.bf16.mxu0 0
        %3237 = vmatpush1.bf16.msra.mxu0 0
        %3238 = vmatprep.subr.bf16.mxu0 0
        %3239 = vmatpush1.bf16.msra.mxu0 0
        %3240 = vmatprep.subr.bf16.mxu0 0
        %3241 = vmatpush1.bf16.msra.mxu0 0
        %3242 = vmatprep.subr.bf16.mxu0 0
        %3243 = vmatpush1.bf16.msra.mxu0 0
        %3244 = vmatprep.subr.bf16.mxu0 0
        %3245 = vmatpush1.bf16.msra.mxu0 0
        %3246 = vmatprep.mubr.bf16.mxu0 0
        %3247 = vmatmul.mubr.bf16.gmra.mrb[0].mxu0 %v3212
        %v3248 = vpop.f32.mrb[0].mxu0
        %v3249 = vadd.f32 0.0, %v3248
        %v3250 = vpop.f32.mrb[0].mxu0
        %v3251 = vpop.f32.mrb[0].mxu0
        %v3252 = vadd.f32 0.0, %v3251
        %v3253 = vpop.f32.mrb[0].mxu0
        %3254 = vdwg.mxu0
        %v3256 = vsel %vm2982, %v3161, 0
        %3258 = vmatprep.subr.bf16.mxu0 0
        %3259 = vmatpush1.bf16.msra.mxu0 %v2599
        %3260 = vmatprep.subr.bf16.mxu0 0
        %3261 = vmatpush1.bf16.msra.mxu0 0
        %3262 = vmatprep.subr.bf16.mxu0 0
        %3263 = vmatpush1.bf16.msra.mxu0 0
        %3264 = vmatprep.subr.bf16.mxu0 0
        %3265 = vmatpush1.bf16.msra.mxu0 0
        %3266 = vmatprep.subr.bf16.mxu0 0
        %3267 = vmatpush1.bf16.msra.mxu0 0
        %3268 = vmatprep.subr.bf16.mxu0 0
        %3269 = vmatpush1.bf16.msra.mxu0 0
        %3270 = vmatprep.subr.bf16.mxu0 0
        %3271 = vmatpush1.bf16.msra.mxu0 0
        %3272 = vmatprep.subr.bf16.mxu0 0
        %3273 = vmatpush1.bf16.msra.mxu0 0
        %3274 = vmatprep.subr.bf16.mxu0 0
        %3275 = vmatpush1.bf16.msra.mxu0 0
        %3276 = vmatprep.subr.bf16.mxu0 0
        %3277 = vmatpush1.bf16.msra.mxu0 0
        %3278 = vmatprep.subr.bf16.mxu0 0
        %3279 = vmatpush1.bf16.msra.mxu0 0
        %3280 = vmatprep.subr.bf16.mxu0 0
        %3281 = vmatpush1.bf16.msra.mxu0 0
        %3282 = vmatprep.subr.bf16.mxu0 0
        %3283 = vmatpush1.bf16.msra.mxu0 0
        %3284 = vmatprep.subr.bf16.mxu0 0
        %3285 = vmatpush1.bf16.msra.mxu0 0
        %3286 = vmatprep.subr.bf16.mxu0 0
        %3287 = vmatpush1.bf16.msra.mxu0 0
        %3288 = vmatprep.subr.bf16.mxu0 0
        %3289 = vmatpush1.bf16.msra.mxu0 0
        %3290 = vmatprep.mubr.bf16.mxu0 0
        %3291 = vmatmul.mubr.bf16.gmra.mrb[0].mxu0 %v3256
        %v3292 = vpop.f32.mrb[0].mxu0
        %v3293 = vadd.f32 0.0, %v3292
        %v3294 = vpop.f32.mrb[0].mxu0
        %v3295 = vpop.f32.mrb[0].mxu0
        %v3296 = vadd.f32 0.0, %v3295
        %v3297 = vpop.f32.mrb[0].mxu0
        %3298 = vdwg.mxu0
        %v3300 = vsel %vm2982, %v3162, 0
        %3302 = vmatprep.subr.bf16.mxu0 0
        %3303 = vmatpush1.bf16.msra.mxu0 %v2600
        %3304 = vmatprep.subr.bf16.mxu0 0
        %3305 = vmatpush1.bf16.msra.mxu0 0
        %3306 = vmatprep.subr.bf16.mxu0 0
        %3307 = vmatpush1.bf16.msra.mxu0 0
        %3308 = vmatprep.subr.bf16.mxu0 0
        %3309 = vmatpush1.bf16.msra.mxu0 0
        %3310 = vmatprep.subr.bf16.mxu0 0
        %3311 = vmatpush1.bf16.msra.mxu0 0
        %3312 = vmatprep.subr.bf16.mxu0 0
        %3313 = vmatpush1.bf16.msra.mxu0 0
        %3314 = vmatprep.subr.bf16.mxu0 0
        %3315 = vmatpush1.bf16.msra.mxu0 0
        %3316 = vmatprep.subr.bf16.mxu0 0
        %3317 = vmatpush1.bf16.msra.mxu0 0
        %3318 = vmatprep.subr.bf16.mxu0 0
        %3319 = vmatpush1.bf16.msra.mxu0 0
        %3320 = vmatprep.subr.bf16.mxu0 0
        %3321 = vmatpush1.bf16.msra.mxu0 0
        %3322 = vmatprep.subr.bf16.mxu0 0
        %3323 = vmatpush1.bf16.msra.mxu0 0
        %3324 = vmatprep.subr.bf16.mxu0 0
        %3325 = vmatpush1.bf16.msra.mxu0 0
        %3326 = vmatprep.subr.bf16.mxu0 0
        %3327 = vmatpush1.bf16.msra.mxu0 0
        %3328 = vmatprep.subr.bf16.mxu0 0
        %3329 = vmatpush1.bf16.msra.mxu0 0
        %3330 = vmatprep.subr.bf16.mxu0 0
        %3331 = vmatpush1.bf16.msra.mxu0 0
        %3332 = vmatprep.subr.bf16.mxu0 0
        %3333 = vmatpush1.bf16.msra.mxu0 0
        %3334 = vmatprep.mubr.bf16.mxu0 0
        %3335 = vmatmul.mubr.bf16.gmra.mrb[0].mxu0 %v3300
        %v3336 = vpop.f32.mrb[0].mxu0
        %v3337 = vadd.f32 0.0, %v3336
        %v3338 = vpop.f32.mrb[0].mxu0
        %v3339 = vpop.f32.mrb[0].mxu0
        %v3340 = vadd.f32 0.0, %v3339
        %v3341 = vpop.f32.mrb[0].mxu0
        %3342 = vdwg.mxu0
        %v3344 = vsel %vm2982, %v3163, 0
        %3346 = vmatprep.subr.bf16.mxu0 0
        %3347 = vmatpush1.bf16.msra.mxu0 %v2601
        %3348 = vmatprep.subr.bf16.mxu0 0
        %3349 = vmatpush1.bf16.msra.mxu0 0
        %3350 = vmatprep.subr.bf16.mxu0 0
        %3351 = vmatpush1.bf16.msra.mxu0 0
        %3352 = vmatprep.subr.bf16.mxu0 0
        %3353 = vmatpush1.bf16.msra.mxu0 0
        %3354 = vmatprep.subr.bf16.mxu0 0
        %3355 = vmatpush1.bf16.msra.mxu0 0
        %3356 = vmatprep.subr.bf16.mxu0 0
        %3357 = vmatpush1.bf16.msra.mxu0 0
        %3358 = vmatprep.subr.bf16.mxu0 0
        %3359 = vmatpush1.bf16.msra.mxu0 0
        %3360 = vmatprep.subr.bf16.mxu0 0
        %3361 = vmatpush1.bf16.msra.mxu0 0
        %3362 = vmatprep.subr.bf16.mxu0 0
        %3363 = vmatpush1.bf16.msra.mxu0 0
        %3364 = vmatprep.subr.bf16.mxu0 0
        %3365 = vmatpush1.bf16.msra.mxu0 0
        %3366 = vmatprep.subr.bf16.mxu0 0
        %3367 = vmatpush1.bf16.msra.mxu0 0
        %3368 = vmatprep.subr.bf16.mxu0 0
        %3369 = vmatpush1.bf16.msra.mxu0 0
        %3370 = vmatprep.subr.bf16.mxu0 0
        %3371 = vmatpush1.bf16.msra.mxu0 0
        %3372 = vmatprep.subr.bf16.mxu0 0
        %3373 = vmatpush1.bf16.msra.mxu0 0
        %3374 = vmatprep.subr.bf16.mxu0 0
        %3375 = vmatpush1.bf16.msra.mxu0 0
        %3376 = vmatprep.subr.bf16.mxu0 0
        %3377 = vmatpush1.bf16.msra.mxu0 0
        %3378 = vmatprep.mubr.bf16.mxu0 0
        %3379 = vmatmul.mubr.bf16.gmra.mrb[0].mxu0 %v3344
        %v3380 = vpop.f32.mrb[0].mxu0
        %v3381 = vadd.f32 0.0, %v3380
        %v3382 = vpop.f32.mrb[0].mxu0
        %v3383 = vpop.f32.mrb[0].mxu0
        %v3384 = vadd.f32 0.0, %v3383
        %v3385 = vpop.f32.mrb[0].mxu0
        %3386 = vdwg.mxu0
        %v3388 = vsel %vm2982, %v3164, 0
        %3390 = vmatprep.subr.bf16.mxu0 0
        %3391 = vmatpush1.bf16.msra.mxu0 %v2602
        %3392 = vmatprep.subr.bf16.mxu0 0
        %3393 = vmatpush1.bf16.msra.mxu0 0
        %3394 = vmatprep.subr.bf16.mxu0 0
        %3395 = vmatpush1.bf16.msra.mxu0 0
        %3396 = vmatprep.subr.bf16.mxu0 0
        %3397 = vmatpush1.bf16.msra.mxu0 0
        %3398 = vmatprep.subr.bf16.mxu0 0
        %3399 = vmatpush1.bf16.msra.mxu0 0
        %3400 = vmatprep.subr.bf16.mxu0 0
        %3401 = vmatpush1.bf16.msra.mxu0 0
        %3402 = vmatprep.subr.bf16.mxu0 0
        %3403 = vmatpush1.bf16.msra.mxu0 0
        %3404 = vmatprep.subr.bf16.mxu0 0
        %3405 = vmatpush1.bf16.msra.mxu0 0
        %3406 = vmatprep.subr.bf16.mxu0 0
        %3407 = vmatpush1.bf16.msra.mxu0 0
        %3408 = vmatprep.subr.bf16.mxu0 0
        %3409 = vmatpush1.bf16.msra.mxu0 0
        %3410 = vmatprep.subr.bf16.mxu0 0
        %3411 = vmatpush1.bf16.msra.mxu0 0
        %3412 = vmatprep.subr.bf16.mxu0 0
        %3413 = vmatpush1.bf16.msra.mxu0 0
        %3414 = vmatprep.subr.bf16.mxu0 0
        %3415 = vmatpush1.bf16.msra.mxu0 0
        %3416 = vmatprep.subr.bf16.mxu0 0
        %3417 = vmatpush1.bf16.msra.mxu0 0
        %3418 = vmatprep.subr.bf16.mxu0 0
        %3419 = vmatpush1.bf16.msra.mxu0 0
        %3420 = vmatprep.subr.bf16.mxu0 0
        %3421 = vmatpush1.bf16.msra.mxu0 0
        %3422 = vmatprep.mubr.bf16.mxu0 0
        %3423 = vmatmul.mubr.bf16.gmra.mrb[0].mxu0 %v3388
        %v3424 = vpop.f32.mrb[0].mxu0
        %v3425 = vadd.f32 0.0, %v3424
        %v3426 = vpop.f32.mrb[0].mxu0
        %v3427 = vpop.f32.mrb[0].mxu0
        %v3428 = vadd.f32 0.0, %v3427
        %v3429 = vpop.f32.mrb[0].mxu0
        %3430 = vdwg.mxu0
        %v3432 = vsel %vm2982, %v3165, 0
        %3434 = vmatprep.subr.bf16.mxu0 0
        %3435 = vmatpush1.bf16.msra.mxu0 %v2603
        %3436 = vmatprep.subr.bf16.mxu0 0
        %3437 = vmatpush1.bf16.msra.mxu0 0
        %3438 = vmatprep.subr.bf16.mxu0 0
        %3439 = vmatpush1.bf16.msra.mxu0 0
        %3440 = vmatprep.subr.bf16.mxu0 0
        %3441 = vmatpush1.bf16.msra.mxu0 0
        %3442 = vmatprep.subr.bf16.mxu0 0
        %3443 = vmatpush1.bf16.msra.mxu0 0
        %3444 = vmatprep.subr.bf16.mxu0 0
        %3445 = vmatpush1.bf16.msra.mxu0 0
        %3446 = vmatprep.subr.bf16.mxu0 0
        %3447 = vmatpush1.bf16.msra.mxu0 0
        %3448 = vmatprep.subr.bf16.mxu0 0
        %3449 = vmatpush1.bf16.msra.mxu0 0
        %3450 = vmatprep.subr.bf16.mxu0 0
        %3451 = vmatpush1.bf16.msra.mxu0 0
        %3452 = vmatprep.subr.bf16.mxu0 0
        %3453 = vmatpush1.bf16.msra.mxu0 0
        %3454 = vmatprep.subr.bf16.mxu0 0
        %3455 = vmatpush1.bf16.msra.mxu0 0
        %3456 = vmatprep.subr.bf16.mxu0 0
        %3457 = vmatpush1.bf16.msra.mxu0 0
        %3458 = vmatprep.subr.bf16.mxu0 0
        %3459 = vmatpush1.bf16.msra.mxu0 0
        %3460 = vmatprep.subr.bf16.mxu0 0
        %3461 = vmatpush1.bf16.msra.mxu0 0
        %3462 = vmatprep.subr.bf16.mxu0 0
        %3463 = vmatpush1.bf16.msra.mxu0 0
        %3464 = vmatprep.subr.bf16.mxu0 0
        %3465 = vmatpush1.bf16.msra.mxu0 0
        %3466 = vmatprep.mubr.bf16.mxu0 0
        %3467 = vmatmul.mubr.bf16.gmra.mrb[0].mxu0 %v3432
        %v3468 = vpop.f32.mrb[0].mxu0
        %v3469 = vadd.f32 0.0, %v3468
        %v3470 = vpop.f32.mrb[0].mxu0
        %v3471 = vpop.f32.mrb[0].mxu0
        %v3472 = vadd.f32 0.0, %v3471
        %v3473 = vpop.f32.mrb[0].mxu0
        %3474 = vdwg.mxu0
        %v3476 = vsel %vm2982, %v3166, 0
        %3478 = vmatprep.subr.bf16.mxu0 0
        %3479 = vmatpush1.bf16.msra.mxu0 %v2604
        %3480 = vmatprep.subr.bf16.mxu0 0
        %3481 = vmatpush1.bf16.msra.mxu0 0
        %3482 = vmatprep.subr.bf16.mxu0 0
        %3483 = vmatpush1.bf16.msra.mxu0 0
        %3484 = vmatprep.subr.bf16.mxu0 0
        %3485 = vmatpush1.bf16.msra.mxu0 0
        %3486 = vmatprep.subr.bf16.mxu0 0
        %3487 = vmatpush1.bf16.msra.mxu0 0
        %3488 = vmatprep.subr.bf16.mxu0 0
        %3489 = vmatpush1.bf16.msra.mxu0 0
        %3490 = vmatprep.subr.bf16.mxu0 0
        %3491 = vmatpush1.bf16.msra.mxu0 0
        %3492 = vmatprep.subr.bf16.mxu0 0
        %3493 = vmatpush1.bf16.msra.mxu0 0
        %3494 = vmatprep.subr.bf16.mxu0 0
        %3495 = vmatpush1.bf16.msra.mxu0 0
        %3496 = vmatprep.subr.bf16.mxu0 0
        %3497 = vmatpush1.bf16.msra.mxu0 0
        %3498 = vmatprep.subr.bf16.mxu0 0
        %3499 = vmatpush1.bf16.msra.mxu0 0
        %3500 = vmatprep.subr.bf16.mxu0 0
        %3501 = vmatpush1.bf16.msra.mxu0 0
        %3502 = vmatprep.subr.bf16.mxu0 0
        %3503 = vmatpush1.bf16.msra.mxu0 0
        %3504 = vmatprep.subr.bf16.mxu0 0
        %3505 = vmatpush1.bf16.msra.mxu0 0
        %3506 = vmatprep.subr.bf16.mxu0 0
        %3507 = vmatpush1.bf16.msra.mxu0 0
        %3508 = vmatprep.subr.bf16.mxu0 0
        %3509 = vmatpush1.bf16.msra.mxu0 0
        %3510 = vmatprep.mubr.bf16.mxu0 0
        %3511 = vmatmul.mubr.bf16.gmra.mrb[0].mxu0 %v3476
        %v3512 = vpop.f32.mrb[0].mxu0
        %v3513 = vadd.f32 0.0, %v3512
        %v3514 = vpop.f32.mrb[0].mxu0
        %v3515 = vpop.f32.mrb[0].mxu0
        %v3516 = vadd.f32 0.0, %v3515
        %v3517 = vpop.f32.mrb[0].mxu0
        %3518 = vdwg.mxu0
        %v3519 = vcombine.low %v3205, %v3381
        %v3520 = vcombine.high %v3205, %v3381
        %v3522 = vunpack.c.l.s4 1983009808
        %v3523 = vunpack.c.0.s8 %v3522
        %v3524 = vlaneseq
        %v3525 = vshrl.u32 %v3524, 7
        %v3526 = vsub.s32 %v3523, %v3525
        %v3527 = vrot.slane %v3519, %v3526
        %v3529 = vunpack.c.l.s4 1983009808
        %v3530 = vunpack.c.0.s8 %v3529
        %v3531 = vlaneseq
        %v3532 = vshrl.u32 %v3531, 7
        %v3533 = vsub.s32 %v3530, %v3532
        %v3534 = vrot.slane %v3520, %v3533
        %v3535 = vcombine.low %v3293, %v3469
        %v3536 = vcombine.high %v3293, %v3469
        %v3538 = vunpack.c.l.s4 1983009808
        %v3539 = vunpack.c.0.s8 %v3538
        %v3540 = vlaneseq
        %v3541 = vshrl.u32 %v3540, 7
        %v3542 = vsub.s32 %v3539, %v3541
        %v3543 = vrot.slane %v3535, %v3542
        %v3545 = vunpack.c.l.s4 1983009808
        %v3546 = vunpack.c.0.s8 %v3545
        %v3547 = vlaneseq
        %v3548 = vshrl.u32 %v3547, 7
        %v3549 = vsub.s32 %v3546, %v3548
        %v3550 = vrot.slane %v3536, %v3549
        %v3551 = vcombine.low %v3527, %v3543
        %v3552 = vcombine.high %v3527, %v3543
        %v3554 = vunpack.c.l.s4 1934713408
        %v3555 = vunpack.c.0.s8 %v3554
        %v3556 = vlaneseq
        %v3557 = vshrl.u32 %v3556, 7
        %v3558 = vsub.s32 %v3555, %v3557
        %v3559 = vrot.slane %v3551, %v3558
        %v3561 = vunpack.c.l.s4 1934713408
        %v3562 = vunpack.c.0.s8 %v3561
        %v3563 = vlaneseq
        %v3564 = vshrl.u32 %v3563, 7
        %v3565 = vsub.s32 %v3562, %v3564
        %v3566 = vrot.slane %v3552, %v3565
        %v3567 = vcombine.low %v3534, %v3550
        %v3568 = vcombine.high %v3534, %v3550
        %v3570 = vunpack.c.l.s4 1934713408
        %v3571 = vunpack.c.0.s8 %v3570
        %v3572 = vlaneseq
        %v3573 = vshrl.u32 %v3572, 7
        %v3574 = vsub.s32 %v3571, %v3573
        %v3575 = vrot.slane %v3567, %v3574
        %v3577 = vunpack.c.l.s4 1934713408
        %v3578 = vunpack.c.0.s8 %v3577
        %v3579 = vlaneseq
        %v3580 = vshrl.u32 %v3579, 7
        %v3581 = vsub.s32 %v3578, %v3580
        %v3582 = vrot.slane %v3568, %v3581
        %v3583 = vcombine.high %v3559, 0.0
        %v3584 = vcombine.high %v3566, 0.0
        %v3585 = vcombine.high %v3575, 0.0
        %v3586 = vcombine.high %v3582, 0.0
        %v3587 = vcombine.low %v3208, %v3384
        %v3588 = vcombine.high %v3208, %v3384
        %v3590 = vunpack.c.l.s4 1983009808
        %v3591 = vunpack.c.0.s8 %v3590
        %v3592 = vlaneseq
        %v3593 = vshrl.u32 %v3592, 7
        %v3594 = vsub.s32 %v3591, %v3593
        %v3595 = vrot.slane %v3587, %v3594
        %v3597 = vunpack.c.l.s4 1983009808
        %v3598 = vunpack.c.0.s8 %v3597
        %v3599 = vlaneseq
        %v3600 = vshrl.u32 %v3599, 7
        %v3601 = vsub.s32 %v3598, %v3600
        %v3602 = vrot.slane %v3588, %v3601
        %v3603 = vcombine.low %v3296, %v3472
        %v3604 = vcombine.high %v3296, %v3472
        %v3606 = vunpack.c.l.s4 1983009808
        %v3607 = vunpack.c.0.s8 %v3606
        %v3608 = vlaneseq
        %v3609 = vshrl.u32 %v3608, 7
        %v3610 = vsub.s32 %v3607, %v3609
        %v3611 = vrot.slane %v3603, %v3610
        %v3613 = vunpack.c.l.s4 1983009808
        %v3614 = vunpack.c.0.s8 %v3613
        %v3615 = vlaneseq
        %v3616 = vshrl.u32 %v3615, 7
        %v3617 = vsub.s32 %v3614, %v3616
        %v3618 = vrot.slane %v3604, %v3617
        %v3619 = vcombine.low %v3595, %v3611
        %v3620 = vcombine.high %v3595, %v3611
        %v3622 = vunpack.c.l.s4 1934713408
        %v3623 = vunpack.c.0.s8 %v3622
        %v3624 = vlaneseq
        %v3625 = vshrl.u32 %v3624, 7
        %v3626 = vsub.s32 %v3623, %v3625
        %v3627 = vrot.slane %v3619, %v3626
        %v3629 = vunpack.c.l.s4 1934713408
        %v3630 = vunpack.c.0.s8 %v3629
        %v3631 = vlaneseq
        %v3632 = vshrl.u32 %v3631, 7
        %v3633 = vsub.s32 %v3630, %v3632
        %v3634 = vrot.slane %v3620, %v3633
        %v3635 = vcombine.low %v3602, %v3618
        %v3636 = vcombine.high %v3602, %v3618
        %v3638 = vunpack.c.l.s4 1934713408
        %v3639 = vunpack.c.0.s8 %v3638
        %v3640 = vlaneseq
        %v3641 = vshrl.u32 %v3640, 7
        %v3642 = vsub.s32 %v3639, %v3641
        %v3643 = vrot.slane %v3635, %v3642
        %v3645 = vunpack.c.l.s4 1934713408
        %v3646 = vunpack.c.0.s8 %v3645
        %v3647 = vlaneseq
        %v3648 = vshrl.u32 %v3647, 7
        %v3649 = vsub.s32 %v3646, %v3648
        %v3650 = vrot.slane %v3636, %v3649
        %v3651 = vcombine.high %v3627, 0.0
        %v3652 = vcombine.high %v3634, 0.0
        %v3653 = vcombine.high %v3643, 0.0
        %v3654 = vcombine.high %v3650, 0.0
        %v3655 = vcombine.low %v3249, %v3425
        %v3656 = vcombine.high %v3249, %v3425
        %v3658 = vunpack.c.l.s4 1983009808
        %v3659 = vunpack.c.0.s8 %v3658
        %v3660 = vlaneseq
        %v3661 = vshrl.u32 %v3660, 7
        %v3662 = vsub.s32 %v3659, %v3661
        %v3663 = vrot.slane %v3655, %v3662
        %v3665 = vunpack.c.l.s4 1983009808
        %v3666 = vunpack.c.0.s8 %v3665
        %v3667 = vlaneseq
        %v3668 = vshrl.u32 %v3667, 7
        %v3669 = vsub.s32 %v3666, %v3668
        %v3670 = vrot.slane %v3656, %v3669
        %v3671 = vcombine.low %v3337, %v3513
        %v3672 = vcombine.high %v3337, %v3513
        %v3674 = vunpack.c.l.s4 1983009808
        %v3675 = vunpack.c.0.s8 %v3674
        %v3676 = vlaneseq
        %v3677 = vshrl.u32 %v3676, 7
        %v3678 = vsub.s32 %v3675, %v3677
        %v3679 = vrot.slane %v3671, %v3678
        %v3681 = vunpack.c.l.s4 1983009808
        %v3682 = vunpack.c.0.s8 %v3681
        %v3683 = vlaneseq
        %v3684 = vshrl.u32 %v3683, 7
        %v3685 = vsub.s32 %v3682, %v3684
        %v3686 = vrot.slane %v3672, %v3685
        %v3687 = vcombine.low %v3663, %v3679
        %v3688 = vcombine.high %v3663, %v3679
        %v3690 = vunpack.c.l.s4 1934713408
        %v3691 = vunpack.c.0.s8 %v3690
        %v3692 = vlaneseq
        %v3693 = vshrl.u32 %v3692, 7
        %v3694 = vsub.s32 %v3691, %v3693
        %v3695 = vrot.slane %v3687, %v3694
        %v3697 = vunpack.c.l.s4 1934713408
        %v3698 = vunpack.c.0.s8 %v3697
        %v3699 = vlaneseq
        %v3700 = vshrl.u32 %v3699, 7
        %v3701 = vsub.s32 %v3698, %v3700
        %v3702 = vrot.slane %v3688, %v3701
        %v3703 = vcombine.low %v3670, %v3686
        %v3704 = vcombine.high %v3670, %v3686
        %v3706 = vunpack.c.l.s4 1934713408
        %v3707 = vunpack.c.0.s8 %v3706
        %v3708 = vlaneseq
        %v3709 = vshrl.u32 %v3708, 7
        %v3710 = vsub.s32 %v3707, %v3709
        %v3711 = vrot.slane %v3703, %v3710
        %v3713 = vunpack.c.l.s4 1934713408
        %v3714 = vunpack.c.0.s8 %v3713
        %v3715 = vlaneseq
        %v3716 = vshrl.u32 %v3715, 7
        %v3717 = vsub.s32 %v3714, %v3716
        %v3718 = vrot.slane %v3704, %v3717
        %v3719 = vcombine.high %v3695, 0.0
        %v3720 = vcombine.high %v3702, 0.0
        %v3721 = vcombine.high %v3711, 0.0
        %v3722 = vcombine.high %v3718, 0.0
        %v3723 = vcombine.low %v3252, %v3428
        %v3724 = vcombine.high %v3252, %v3428
        %v3726 = vunpack.c.l.s4 1983009808
        %v3727 = vunpack.c.0.s8 %v3726
        %v3728 = vlaneseq
        %v3729 = vshrl.u32 %v3728, 7
        %v3730 = vsub.s32 %v3727, %v3729
        %v3731 = vrot.slane %v3723, %v3730
        %v3733 = vunpack.c.l.s4 1983009808
        %v3734 = vunpack.c.0.s8 %v3733
        %v3735 = vlaneseq
        %v3736 = vshrl.u32 %v3735, 7
        %v3737 = vsub.s32 %v3734, %v3736
        %v3738 = vrot.slane %v3724, %v3737
        %v3739 = vcombine.low %v3340, %v3516
        %v3740 = vcombine.high %v3340, %v3516
        %v3742 = vunpack.c.l.s4 1983009808
        %v3743 = vunpack.c.0.s8 %v3742
        %v3744 = vlaneseq
        %v3745 = vshrl.u32 %v3744, 7
        %v3746 = vsub.s32 %v3743, %v3745
        %v3747 = vrot.slane %v3739, %v3746
        %v3749 = vunpack.c.l.s4 1983009808
        %v3750 = vunpack.c.0.s8 %v3749
        %v3751 = vlaneseq
        %v3752 = vshrl.u32 %v3751, 7
        %v3753 = vsub.s32 %v3750, %v3752
        %v3754 = vrot.slane %v3740, %v3753
        %v3755 = vcombine.low %v3731, %v3747
        %v3756 = vcombine.high %v3731, %v3747
        %v3758 = vunpack.c.l.s4 1934713408
        %v3759 = vunpack.c.0.s8 %v3758
        %v3760 = vlaneseq
        %v3761 = vshrl.u32 %v3760, 7
        %v3762 = vsub.s32 %v3759, %v3761
        %v3763 = vrot.slane %v3755, %v3762
        %v3765 = vunpack.c.l.s4 1934713408
        %v3766 = vunpack.c.0.s8 %v3765
        %v3767 = vlaneseq
        %v3768 = vshrl.u32 %v3767, 7
        %v3769 = vsub.s32 %v3766, %v3768
        %v3770 = vrot.slane %v3756, %v3769
        %v3771 = vcombine.low %v3738, %v3754
        %v3772 = vcombine.high %v3738, %v3754
        %v3774 = vunpack.c.l.s4 1934713408
        %v3775 = vunpack.c.0.s8 %v3774
        %v3776 = vlaneseq
        %v3777 = vshrl.u32 %v3776, 7
        %v3778 = vsub.s32 %v3775, %v3777
        %v3779 = vrot.slane %v3771, %v3778
        %v3781 = vunpack.c.l.s4 1934713408
        %v3782 = vunpack.c.0.s8 %v3781
        %v3783 = vlaneseq
        %v3784 = vshrl.u32 %v3783, 7
        %v3785 = vsub.s32 %v3782, %v3784
        %v3786 = vrot.slane %v3772, %v3785
        %v3787 = vcombine.high %v3763, 0.0
        %v3788 = vcombine.high %v3770, 0.0
        %v3789 = vcombine.high %v3779, 0.0
        %v3790 = vcombine.high %v3786, 0.0
        %v3791 = vcombine.low %v3559, %v3566
        %v3793 = vunpack.c.l.s4 1983009808
        %v3794 = vunpack.c.0.s8 %v3793
        %v3795 = vlaneseq
        %v3796 = vshrl.u32 %v3795, 7
        %v3797 = vsub.s32 %v3794, %v3796
        %v3798 = vrot.slane %v3791, %v3797
        %v3799 = vcombine.low %v3583, %v3584
        %v3801 = vunpack.c.l.s4 1983009808
        %v3802 = vunpack.c.0.s8 %v3801
        %v3803 = vlaneseq
        %v3804 = vshrl.u32 %v3803, 7
        %v3805 = vsub.s32 %v3802, %v3804
        %v3806 = vrot.slane %v3799, %v3805
        %v3807 = vcombine.low %v3575, %v3582
        %v3809 = vunpack.c.l.s4 1983009808
        %v3810 = vunpack.c.0.s8 %v3809
        %v3811 = vlaneseq
        %v3812 = vshrl.u32 %v3811, 7
        %v3813 = vsub.s32 %v3810, %v3812
        %v3814 = vrot.slane %v3807, %v3813
        %v3815 = vcombine.low %v3585, %v3586
        %v3817 = vunpack.c.l.s4 1983009808
        %v3818 = vunpack.c.0.s8 %v3817
        %v3819 = vlaneseq
        %v3820 = vshrl.u32 %v3819, 7
        %v3821 = vsub.s32 %v3818, %v3820
        %v3822 = vrot.slane %v3815, %v3821
        %v3823 = vcombine.low %v3798, %v3806
        %v3824 = vcombine.high %v3798, %v3806
        %v3826 = vunpack.c.l.s4 1934713408
        %v3827 = vunpack.c.0.s8 %v3826
        %v3828 = vlaneseq
        %v3829 = vshrl.u32 %v3828, 7
        %v3830 = vsub.s32 %v3827, %v3829
        %v3831 = vrot.slane %v3823, %v3830
        %v3833 = vunpack.c.l.s4 1934713408
        %v3834 = vunpack.c.0.s8 %v3833
        %v3835 = vlaneseq
        %v3836 = vshrl.u32 %v3835, 7
        %v3837 = vsub.s32 %v3834, %v3836
        %v3838 = vrot.slane %v3824, %v3837
        %v3839 = vcombine.low %v3814, %v3822
        %v3840 = vcombine.high %v3814, %v3822
        %v3842 = vunpack.c.l.s4 1934713408
        %v3843 = vunpack.c.0.s8 %v3842
        %v3844 = vlaneseq
        %v3845 = vshrl.u32 %v3844, 7
        %v3846 = vsub.s32 %v3843, %v3845
        %v3847 = vrot.slane %v3839, %v3846
        %v3849 = vunpack.c.l.s4 1934713408
        %v3850 = vunpack.c.0.s8 %v3849
        %v3851 = vlaneseq
        %v3852 = vshrl.u32 %v3851, 7
        %v3853 = vsub.s32 %v3850, %v3852
        %v3854 = vrot.slane %v3840, %v3853
        %v3855 = vcombine.low %v3831, %v3847
        %v3856 = vcombine.high %v3831, %v3847
        %v3857 = vcombine.low %v3838, %v3854
        %v3858 = vcombine.high %v3838, %v3854
        %v3859 = vcombine.low %v3627, %v3634
        %v3861 = vunpack.c.l.s4 1983009808
        %v3862 = vunpack.c.0.s8 %v3861
        %v3863 = vlaneseq
        %v3864 = vshrl.u32 %v3863, 7
        %v3865 = vsub.s32 %v3862, %v3864
        %v3866 = vrot.slane %v3859, %v3865
        %v3867 = vcombine.low %v3651, %v3652
        %v3869 = vunpack.c.l.s4 1983009808
        %v3870 = vunpack.c.0.s8 %v3869
        %v3871 = vlaneseq
        %v3872 = vshrl.u32 %v3871, 7
        %v3873 = vsub.s32 %v3870, %v3872
        %v3874 = vrot.slane %v3867, %v3873
        %v3875 = vcombine.low %v3643, %v3650
        %v3877 = vunpack.c.l.s4 1983009808
        %v3878 = vunpack.c.0.s8 %v3877
        %v3879 = vlaneseq
        %v3880 = vshrl.u32 %v3879, 7
        %v3881 = vsub.s32 %v3878, %v3880
        %v3882 = vrot.slane %v3875, %v3881
        %v3883 = vcombine.low %v3653, %v3654
        %v3885 = vunpack.c.l.s4 1983009808
        %v3886 = vunpack.c.0.s8 %v3885
        %v3887 = vlaneseq
        %v3888 = vshrl.u32 %v3887, 7
        %v3889 = vsub.s32 %v3886, %v3888
        %v3890 = vrot.slane %v3883, %v3889
        %v3891 = vcombine.low %v3866, %v3874
        %v3892 = vcombine.high %v3866, %v3874
        %v3894 = vunpack.c.l.s4 1934713408
        %v3895 = vunpack.c.0.s8 %v3894
        %v3896 = vlaneseq
        %v3897 = vshrl.u32 %v3896, 7
        %v3898 = vsub.s32 %v3895, %v3897
        %v3899 = vrot.slane %v3891, %v3898
        %v3901 = vunpack.c.l.s4 1934713408
        %v3902 = vunpack.c.0.s8 %v3901
        %v3903 = vlaneseq
        %v3904 = vshrl.u32 %v3903, 7
        %v3905 = vsub.s32 %v3902, %v3904
        %v3906 = vrot.slane %v3892, %v3905
        %v3907 = vcombine.low %v3882, %v3890
        %v3908 = vcombine.high %v3882, %v3890
        %v3910 = vunpack.c.l.s4 1934713408
        %v3911 = vunpack.c.0.s8 %v3910
        %v3912 = vlaneseq
        %v3913 = vshrl.u32 %v3912, 7
        %v3914 = vsub.s32 %v3911, %v3913
        %v3915 = vrot.slane %v3907, %v3914
        %v3917 = vunpack.c.l.s4 1934713408
        %v3918 = vunpack.c.0.s8 %v3917
        %v3919 = vlaneseq
        %v3920 = vshrl.u32 %v3919, 7
        %v3921 = vsub.s32 %v3918, %v3920
        %v3922 = vrot.slane %v3908, %v3921
        %v3923 = vcombine.low %v3899, %v3915
        %v3924 = vcombine.high %v3899, %v3915
        %v3925 = vcombine.low %v3906, %v3922
        %v3926 = vcombine.high %v3906, %v3922
        %v3927 = vcombine.low %v3695, %v3702
        %v3929 = vunpack.c.l.s4 1983009808
        %v3930 = vunpack.c.0.s8 %v3929
        %v3931 = vlaneseq
        %v3932 = vshrl.u32 %v3931, 7
        %v3933 = vsub.s32 %v3930, %v3932
        %v3934 = vrot.slane %v3927, %v3933
        %v3935 = vcombine.low %v3719, %v3720
        %v3937 = vunpack.c.l.s4 1983009808
        %v3938 = vunpack.c.0.s8 %v3937
        %v3939 = vlaneseq
        %v3940 = vshrl.u32 %v3939, 7
        %v3941 = vsub.s32 %v3938, %v3940
        %v3942 = vrot.slane %v3935, %v3941
        %v3943 = vcombine.low %v3711, %v3718
        %v3945 = vunpack.c.l.s4 1983009808
        %v3946 = vunpack.c.0.s8 %v3945
        %v3947 = vlaneseq
        %v3948 = vshrl.u32 %v3947, 7
        %v3949 = vsub.s32 %v3946, %v3948
        %v3950 = vrot.slane %v3943, %v3949
        %v3951 = vcombine.low %v3721, %v3722
        %v3953 = vunpack.c.l.s4 1983009808
        %v3954 = vunpack.c.0.s8 %v3953
        %v3955 = vlaneseq
        %v3956 = vshrl.u32 %v3955, 7
        %v3957 = vsub.s32 %v3954, %v3956
        %v3958 = vrot.slane %v3951, %v3957
        %v3959 = vcombine.low %v3934, %v3942
        %v3960 = vcombine.high %v3934, %v3942
        %v3962 = vunpack.c.l.s4 1934713408
        %v3963 = vunpack.c.0.s8 %v3962
        %v3964 = vlaneseq
        %v3965 = vshrl.u32 %v3964, 7
        %v3966 = vsub.s32 %v3963, %v3965
        %v3967 = vrot.slane %v3959, %v3966
        %v3969 = vunpack.c.l.s4 1934713408
        %v3970 = vunpack.c.0.s8 %v3969
        %v3971 = vlaneseq
        %v3972 = vshrl.u32 %v3971, 7
        %v3973 = vsub.s32 %v3970, %v3972
        %v3974 = vrot.slane %v3960, %v3973
        %v3975 = vcombine.low %v3950, %v3958
        %v3976 = vcombine.high %v3950, %v3958
        %v3978 = vunpack.c.l.s4 1934713408
        %v3979 = vunpack.c.0.s8 %v3978
        %v3980 = vlaneseq
        %v3981 = vshrl.u32 %v3980, 7
        %v3982 = vsub.s32 %v3979, %v3981
        %v3983 = vrot.slane %v3975, %v3982
        %v3985 = vunpack.c.l.s4 1934713408
        %v3986 = vunpack.c.0.s8 %v3985
        %v3987 = vlaneseq
        %v3988 = vshrl.u32 %v3987, 7
        %v3989 = vsub.s32 %v3986, %v3988
        %v3990 = vrot.slane %v3976, %v3989
        %v3991 = vcombine.low %v3967, %v3983
        %v3992 = vcombine.high %v3967, %v3983
        %v3993 = vcombine.low %v3974, %v3990
        %v3994 = vcombine.high %v3974, %v3990
        %v3995 = vcombine.low %v3763, %v3770
        %v3997 = vunpack.c.l.s4 1983009808
        %v3998 = vunpack.c.0.s8 %v3997
        %v3999 = vlaneseq
        %v4000 = vshrl.u32 %v3999, 7
        %v4001 = vsub.s32 %v3998, %v4000
        %v4002 = vrot.slane %v3995, %v4001
        %v4003 = vcombine.low %v3787, %v3788
        %v4005 = vunpack.c.l.s4 1983009808
        %v4006 = vunpack.c.0.s8 %v4005
        %v4007 = vlaneseq
        %v4008 = vshrl.u32 %v4007, 7
        %v4009 = vsub.s32 %v4006, %v4008
        %v4010 = vrot.slane %v4003, %v4009
        %v4011 = vcombine.low %v3779, %v3786
        %v4013 = vunpack.c.l.s4 1983009808
        %v4014 = vunpack.c.0.s8 %v4013
        %v4015 = vlaneseq
        %v4016 = vshrl.u32 %v4015, 7
        %v4017 = vsub.s32 %v4014, %v4016
        %v4018 = vrot.slane %v4011, %v4017
        %v4019 = vcombine.low %v3789, %v3790
        %v4021 = vunpack.c.l.s4 1983009808
        %v4022 = vunpack.c.0.s8 %v4021
        %v4023 = vlaneseq
        %v4024 = vshrl.u32 %v4023, 7
        %v4025 = vsub.s32 %v4022, %v4024
        %v4026 = vrot.slane %v4019, %v4025
        %v4027 = vcombine.low %v4002, %v4010
        %v4028 = vcombine.high %v4002, %v4010
        %v4030 = vunpack.c.l.s4 1934713408
        %v4031 = vunpack.c.0.s8 %v4030
        %v4032 = vlaneseq
        %v4033 = vshrl.u32 %v4032, 7
        %v4034 = vsub.s32 %v4031, %v4033
        %v4035 = vrot.slane %v4027, %v4034
        %v4037 = vunpack.c.l.s4 1934713408
        %v4038 = vunpack.c.0.s8 %v4037
        %v4039 = vlaneseq
        %v4040 = vshrl.u32 %v4039, 7
        %v4041 = vsub.s32 %v4038, %v4040
        %v4042 = vrot.slane %v4028, %v4041
        %v4043 = vcombine.low %v4018, %v4026
        %v4044 = vcombine.high %v4018, %v4026
        %v4046 = vunpack.c.l.s4 1934713408
        %v4047 = vunpack.c.0.s8 %v4046
        %v4048 = vlaneseq
        %v4049 = vshrl.u32 %v4048, 7
        %v4050 = vsub.s32 %v4047, %v4049
        %v4051 = vrot.slane %v4043, %v4050
        %v4053 = vunpack.c.l.s4 1934713408
        %v4054 = vunpack.c.0.s8 %v4053
        %v4055 = vlaneseq
        %v4056 = vshrl.u32 %v4055, 7
        %v4057 = vsub.s32 %v4054, %v4056
        %v4058 = vrot.slane %v4044, %v4057
        %v4059 = vcombine.low %v4035, %v4051
        %v4060 = vcombine.high %v4035, %v4051
        %v4061 = vcombine.low %v4042, %v4058
        %v4062 = vcombine.high %v4042, %v4058
        %4067 = vrot.lane.b32.xlu0 %v3856, 32
        %v4068 = vpop.permute.xlu0 %4067
        %4069 = vrot.lane.b32.xlu0 %v3924, 32
        %v4070 = vpop.permute.xlu0 %4069
        %4071 = vrot.lane.b32.xlu0 %v3992, 32
        %v4072 = vpop.permute.xlu0 %4071
        %4073 = vrot.lane.b32.xlu0 %v4060, 32
        %v4074 = vpop.permute.xlu0 %4073
        %4083 = vrot.lane.b32.xlu0 %v3857, 64
        %v4084 = vpop.permute.xlu0 %4083
        %4085 = vrot.lane.b32.xlu0 %v3925, 64
        %v4086 = vpop.permute.xlu0 %4085
        %4087 = vrot.lane.b32.xlu0 %v3993, 64
        %v4088 = vpop.permute.xlu0 %4087
        %4089 = vrot.lane.b32.xlu0 %v4061, 64
        %v4090 = vpop.permute.xlu0 %4089
        %4099 = vrot.lane.b32.xlu0 %v3858, 96
        %v4100 = vpop.permute.xlu0 %4099
        %4101 = vrot.lane.b32.xlu0 %v3926, 96
        %v4102 = vpop.permute.xlu0 %4101
        %4103 = vrot.lane.b32.xlu0 %v3994, 96
        %v4104 = vpop.permute.xlu0 %4103
        %4105 = vrot.lane.b32.xlu0 %v4062, 96
        %v4106 = vpop.permute.xlu0 %4105
        %v4111 = vsel %vm2605, %v3855, %v4068
        %v4112 = vsel %vm2605, %v3923, %v4070
        %v4113 = vsel %vm2605, %v3991, %v4072
        %v4114 = vsel %vm2605, %v4059, %v4074
        %vm4115 = vcmask 523264
        %v4116 = vsel %vm4115, %v4111, %v4084
        %v4117 = vsel %vm4115, %v4112, %v4086
        %v4118 = vsel %vm4115, %v4113, %v4088
        %v4119 = vsel %vm4115, %v4114, %v4090
        %vm4120 = vcmask 785408
        %v4121 = vsel %vm4120, %v4116, %v4100
        %v4122 = vsel %vm4120, %v4117, %v4102
        %v4123 = vsel %vm4120, %v4118, %v4104
        %v4124 = vsel %vm4120, %v4119, %v4106
        %v4125 = vpack.c.bf16 %v4122, %v4121
        %v4126 = vpack.c.bf16 %v4124, %v4123
        %v4127 = vld [vmem:[#allocation7] sm:$0xf]
        %v4128 = vld [vmem:[#allocation7 + $0x4] sm:$0xf]
        %v4129 = vld [vmem:[#allocation7 + $0x8] sm:$0xf]
        %v4130 = vld [vmem:[#allocation7 + $0xc] sm:$0xf]
        %v4131 = vld [vmem:[#allocation7 + $0x10] sm:$0xf]
        %v4132 = vld [vmem:[#allocation7 + $0x14] sm:$0xf]
        %v4133 = vld [vmem:[#allocation7 + $0x18] sm:$0xf]
        %v4134 = vld [vmem:[#allocation7 + $0x1c] sm:$0xf]
        %v4135 = vld [vmem:[#allocation7 + $0x20] sm:$0xf]
        %v4136 = vld [vmem:[#allocation7 + $0x24] sm:$0xf]
        %v4137 = vld [vmem:[#allocation7 + $0x28] sm:$0xf]
        %v4138 = vld [vmem:[#allocation7 + $0x2c] sm:$0xf]
        %v4139 = vld [vmem:[#allocation7 + $0x30] sm:$0xf]
        %v4140 = vld [vmem:[#allocation7 + $0x34] sm:$0xf]
        %v4141 = vld [vmem:[#allocation7 + $0x38] sm:$0xf]
        %v4142 = vld [vmem:[#allocation7 + $0x3c] sm:$0xf]
        %v4143 = vld [vmem:[%s5] sm:$0x1]
        %v4145 = vlaneseq
        %v4146 = vshrl.u32 %v4145, 7
        %v4147 = vsub.s32 0, %v4146
        %v4148 = vrot.slane %v4143, %v4147
        %v4166 = vunpack.c.l.b16 %v4127
        %v4167 = vunpack.c.l.b16 %v4128
        %v4168 = vunpack.c.l.b16 %v4129
        %v4169 = vunpack.c.l.b16 %v4130
        %v4170 = vunpack.c.l.b16 %v4131
        %v4171 = vunpack.c.l.b16 %v4132
        %v4172 = vunpack.c.l.b16 %v4133
        %v4173 = vunpack.c.l.b16 %v4134
        %v4174 = vunpack.c.l.b16 %v4135
        %v4175 = vunpack.c.l.b16 %v4136
        %v4176 = vunpack.c.l.b16 %v4137
        %v4177 = vunpack.c.l.b16 %v4138
        %v4178 = vunpack.c.l.b16 %v4139
        %v4179 = vunpack.c.l.b16 %v4140
        %v4180 = vunpack.c.l.b16 %v4141
        %v4181 = vunpack.c.l.b16 %v4142
        %v4182 = vpack.c.b16 %v4167, %v4166
        %v4183 = vpack.c.b16 %v4169, %v4168
        %v4184 = vpack.c.b16 %v4171, %v4170
        %v4185 = vpack.c.b16 %v4173, %v4172
        %v4186 = vpack.c.b16 %v4175, %v4174
        %v4187 = vpack.c.b16 %v4177, %v4176
        %v4188 = vpack.c.b16 %v4179, %v4178
        %v4189 = vpack.c.b16 %v4181, %v4180
        %4198 = vmatprep.subr.bf16.mxu0 0
        %4199 = vmatpush1.bf16.msra.mxu0 %v4182
        %4200 = vmatprep.subr.bf16.mxu0 0
        %4201 = vmatpush1.bf16.msra.mxu0 %v4183
        %4202 = vmatprep.subr.bf16.mxu0 0
        %4203 = vmatpush1.bf16.msra.mxu0 %v4184
        %4204 = vmatprep.subr.bf16.mxu0 0
        %4205 = vmatpush1.bf16.msra.mxu0 %v4185
        %4206 = vmatprep.subr.bf16.mxu0 0
        %4207 = vmatpush1.bf16.msra.mxu0 %v4186
        %4208 = vmatprep.subr.bf16.mxu0 0
        %4209 = vmatpush1.bf16.msra.mxu0 %v4187
        %4210 = vmatprep.subr.bf16.mxu0 0
        %4211 = vmatpush1.bf16.msra.mxu0 %v4188
        %4212 = vmatprep.subr.bf16.mxu0 0
        %4213 = vmatpush1.bf16.msra.mxu0 %v4189
        %4214 = vmatprep.subr.bf16.mxu0 0
        %4215 = vmatpush1.bf16.msra.mxu0 0
        %4216 = vmatprep.subr.bf16.mxu0 0
        %4217 = vmatpush1.bf16.msra.mxu0 0
        %4218 = vmatprep.subr.bf16.mxu0 0
        %4219 = vmatpush1.bf16.msra.mxu0 0
        %4220 = vmatprep.subr.bf16.mxu0 0
        %4221 = vmatpush1.bf16.msra.mxu0 0
        %4222 = vmatprep.subr.bf16.mxu0 0
        %4223 = vmatpush1.bf16.msra.mxu0 0
        %4224 = vmatprep.subr.bf16.mxu0 0
        %4225 = vmatpush1.bf16.msra.mxu0 0
        %4226 = vmatprep.subr.bf16.mxu0 0
        %4227 = vmatpush1.bf16.msra.mxu0 0
        %4228 = vmatprep.subr.bf16.mxu0 0
        %4229 = vmatpush1.bf16.msra.mxu0 0
        %4230 = vmatprep.mubr.bf16.mxu0 0
        %4231 = vmatmul.mubr.bf16.gmra.mrb[0].mxu0 %v4125
        %v4232 = vpop.f32.mrb[0].mxu0
        %v4233 = vadd.f32 %v4148, %v4232
        %v4234 = vpop.f32.mrb[0].mxu0
        %v4235 = vpop.f32.mrb[0].mxu0
        %v4236 = vadd.f32 %v4148, %v4235
        %v4237 = vpop.f32.mrb[0].mxu0
        %4238 = vmatprep.mubr.bf16.mxu0 0
        %4239 = vmatmul.mubr.bf16.gmra.mrb[0].mxu0 %v4126
        %v4240 = vpop.f32.mrb[0].mxu0
        %v4241 = vadd.f32 %v4148, %v4240
        %v4242 = vpop.f32.mrb[0].mxu0
        %v4243 = vpop.f32.mrb[0].mxu0
        %v4244 = vadd.f32 %v4148, %v4243
        %v4245 = vpop.f32.mrb[0].mxu0
        %4246 = vdwg.mxu0
        %v4247 = vadd.f32 %v494, %v4233
        %v4248 = vadd.f32 %v495, %v4236
        %v4249 = vadd.f32 %v496, %v4241
        %v4250 = vadd.f32 %v497, %v4244
        %v4251 = vld [vmem:[%s6] sm:$0x1]
        %v4252 = vld [vmem:[%s7] sm:$0x1]
        %4253 = vadd.xlane.f32.xlu0 %v4247
        %v4254 = vpop.xlane.xlu0 %4253
        %4255 = vadd.xlane.f32.xlu0 %v4248
        %v4256 = vpop.xlane.xlu0 %4255
        %4257 = vadd.xlane.f32.xlu0 %v4249
        %v4258 = vpop.xlane.xlu0 %4257
        %4259 = vadd.xlane.f32.xlu0 %v4250
        %v4260 = vpop.xlane.xlu0 %4259
        %v4261 = vmul.f32 %v4254, %v508
        %v4262 = vmul.f32 %v4256, %v508
        %v4263 = vmul.f32 %v4258, %v508
        %v4264 = vmul.f32 %v4260, %v508
        %v4265 = vsub.f32 %v4247, %v4261
        %v4266 = vsub.f32 %v4248, %v4262
        %v4267 = vsub.f32 %v4249, %v4263
        %v4268 = vsub.f32 %v4250, %v4264
        %v4269 = vmul.f32 %v4265, %v4265
        %v4270 = vmul.f32 %v4266, %v4266
        %v4271 = vmul.f32 %v4267, %v4267
        %v4272 = vmul.f32 %v4268, %v4268
        %4273 = vadd.xlane.f32.xlu0 %v4269
        %v4274 = vpop.xlane.xlu0 %4273
        %4275 = vadd.xlane.f32.xlu0 %v4270
        %v4276 = vpop.xlane.xlu0 %4275
        %4277 = vadd.xlane.f32.xlu0 %v4271
        %v4278 = vpop.xlane.xlu0 %4277
        %4279 = vadd.xlane.f32.xlu0 %v4272
        %v4280 = vpop.xlane.xlu0 %4279
        %v4281 = vmul.f32 %v4274, %v508
        %v4282 = vmul.f32 %v4276, %v508
        %v4283 = vmul.f32 %v4278, %v508
        %v4284 = vmul.f32 %v4280, %v508
        %v4285 = vadd.f32 %v4281, 1e-05
        %v4286 = vadd.f32 %v4282, 1e-05
        %v4287 = vadd.f32 %v4283, 1e-05
        %v4288 = vadd.f32 %v4284, 1e-05
        %v4289 = vrsqrt.pop %v4285
        %v4290 = vrsqrt.pop %v4286
        %v4291 = vrsqrt.pop %v4287
        %v4292 = vrsqrt.pop %v4288
        %v4293 = vmul.f32 %v4265, %v4289
        %v4294 = vmul.f32 %v4266, %v4290
        %v4295 = vmul.f32 %v4267, %v4291
        %v4296 = vmul.f32 %v4268, %v4292
        %v4298 = vlaneseq
        %v4299 = vshrl.u32 %v4298, 7
        %v4300 = vsub.s32 0, %v4299
        %v4301 = vrot.slane %v4251, %v4300
        %v4303 = vmul.f32 %v4293, %v4301
        %v4304 = vmul.f32 %v4294, %v4301
        %v4305 = vmul.f32 %v4295, %v4301
        %v4306 = vmul.f32 %v4296, %v4301
        %v4308 = vlaneseq
        %v4309 = vshrl.u32 %v4308, 7
        %v4310 = vsub.s32 0, %v4309
        %v4311 = vrot.slane %v4252, %v4310
        %v4313 = vadd.f32 %v4303, %v4311
        %v4314 = vadd.f32 %v4304, %v4311
        %v4315 = vadd.f32 %v4305, %v4311
        %v4316 = vadd.f32 %v4306, %v4311
        %v4317 = vpack.c.bf16 %v4314, %v4313
        %v4318 = vpack.c.bf16 %v4316, %v4315
        %v4319 = vld [vmem:[#allocation8] sm:$0xff]
        %v4320 = vld [vmem:[#allocation8 + $0x8] sm:$0xff]
        %v4321 = vld [vmem:[#allocation8 + $0x10] sm:$0xff]
        %v4322 = vld [vmem:[#allocation8 + $0x18] sm:$0xff]
        %v4323 = vld [vmem:[#allocation8 + $0x20] sm:$0xff]
        %v4324 = vld [vmem:[#allocation8 + $0x28] sm:$0xff]
        %v4325 = vld [vmem:[#allocation8 + $0x30] sm:$0xff]
        %v4326 = vld [vmem:[#allocation8 + $0x38] sm:$0xff]
        %v4327 = vld [vmem:[#allocation8 + $0x40] sm:$0xff]
        %v4328 = vld [vmem:[#allocation8 + $0x48] sm:$0xff]
        %v4329 = vld [vmem:[#allocation8 + $0x50] sm:$0xff]
        %v4330 = vld [vmem:[#allocation8 + $0x58] sm:$0xff]
        %v4331 = vld [vmem:[#allocation8 + $0x60] sm:$0xff]
        %v4332 = vld [vmem:[#allocation8 + $0x68] sm:$0xff]
        %v4333 = vld [vmem:[#allocation8 + $0x70] sm:$0xff]
        %v4334 = vld [vmem:[#allocation8 + $0x78] sm:$0xff]
        %v4335 = vld [vmem:[#allocation8 + $0x80] sm:$0xff]
        %v4336 = vld [vmem:[#allocation8 + $0x88] sm:$0xff]
        %v4337 = vld [vmem:[#allocation8 + $0x90] sm:$0xff]
        %v4338 = vld [vmem:[#allocation8 + $0x98] sm:$0xff]
        %v4339 = vld [vmem:[#allocation8 + $0xa0] sm:$0xff]
        %v4340 = vld [vmem:[#allocation8 + $0xa8] sm:$0xff]
        %v4341 = vld [vmem:[#allocation8 + $0xb0] sm:$0xff]
        %v4342 = vld [vmem:[#allocation8 + $0xb8] sm:$0xff]
        %v4343 = vld [vmem:[#allocation8 + $0xc0] sm:$0xff]
        %v4344 = vld [vmem:[#allocation8 + $0xc8] sm:$0xff]
        %v4345 = vld [vmem:[#allocation8 + $0xd0] sm:$0xff]
        %v4346 = vld [vmem:[#allocation8 + $0xd8] sm:$0xff]
        %v4347 = vld [vmem:[#allocation8 + $0xe0] sm:$0xff]
        %v4348 = vld [vmem:[#allocation8 + $0xe8] sm:$0xff]
        %v4349 = vld [vmem:[#allocation8 + $0xf0] sm:$0xff]
        %v4350 = vld [vmem:[#allocation8 + $0xf8] sm:$0xff]
        %v4351 = vld [vmem:[%s9] sm:$0xf]
        %v4353 = vlaneseq
        %v4354 = vshrl.u32 %v4353, 7
        %v4355 = vsub.s32 0, %v4354
        %v4356 = vrot.slane %v4351, %v4355
        %v4357 = vlaneseq
        %v4358 = vshrl.u32 %v4357, 7
        %v4359 = vsub.s32 1, %v4358
        %v4360 = vrot.slane %v4351, %v4359
        %v4361 = vlaneseq
        %v4362 = vshrl.u32 %v4361, 7
        %v4363 = vsub.s32 2, %v4362
        %v4364 = vrot.slane %v4351, %v4363
        %v4365 = vlaneseq
        %v4366 = vshrl.u32 %v4365, 7
        %v4367 = vsub.s32 3, %v4366
        %v4368 = vrot.slane %v4351, %v4367
        %v4405 = vunpack.c.l.b16 %v4319
        %v4406 = vunpack.c.h.b16 %v4319
        %v4407 = vunpack.c.l.b16 %v4320
        %v4408 = vunpack.c.h.b16 %v4320
        %v4409 = vunpack.c.l.b16 %v4321
        %v4410 = vunpack.c.h.b16 %v4321
        %v4411 = vunpack.c.l.b16 %v4322
        %v4412 = vunpack.c.h.b16 %v4322
        %v4413 = vunpack.c.l.b16 %v4323
        %v4414 = vunpack.c.h.b16 %v4323
        %v4415 = vunpack.c.l.b16 %v4324
        %v4416 = vunpack.c.h.b16 %v4324
        %v4417 = vunpack.c.l.b16 %v4325
        %v4418 = vunpack.c.h.b16 %v4325
        %v4419 = vunpack.c.l.b16 %v4326
        %v4420 = vunpack.c.h.b16 %v4326
        %v4421 = vunpack.c.l.b16 %v4327
        %v4422 = vunpack.c.h.b16 %v4327
        %v4423 = vunpack.c.l.b16 %v4328
        %v4424 = vunpack.c.h.b16 %v4328
        %v4425 = vunpack.c.l.b16 %v4329
        %v4426 = vunpack.c.h.b16 %v4329
        %v4427 = vunpack.c.l.b16 %v4330
        %v4428 = vunpack.c.h.b16 %v4330
        %v4429 = vunpack.c.l.b16 %v4331
        %v4430 = vunpack.c.h.b16 %v4331
        %v4431 = vunpack.c.l.b16 %v4332
        %v4432 = vunpack.c.h.b16 %v4332
        %v4433 = vunpack.c.l.b16 %v4333
        %v4434 = vunpack.c.h.b16 %v4333
        %v4435 = vunpack.c.l.b16 %v4334
        %v4436 = vunpack.c.h.b16 %v4334
        %v4437 = vunpack.c.l.b16 %v4335
        %v4438 = vunpack.c.h.b16 %v4335
        %v4439 = vunpack.c.l.b16 %v4336
        %v4440 = vunpack.c.h.b16 %v4336
        %v4441 = vunpack.c.l.b16 %v4337
        %v4442 = vunpack.c.h.b16 %v4337
        %v4443 = vunpack.c.l.b16 %v4338
        %v4444 = vunpack.c.h.b16 %v4338
        %v4445 = vunpack.c.l.b16 %v4339
        %v4446 = vunpack.c.h.b16 %v4339
        %v4447 = vunpack.c.l.b16 %v4340
        %v4448 = vunpack.c.h.b16 %v4340
        %v4449 = vunpack.c.l.b16 %v4341
        %v4450 = vunpack.c.h.b16 %v4341
        %v4451 = vunpack.c.l.b16 %v4342
        %v4452 = vunpack.c.h.b16 %v4342
        %v4453 = vunpack.c.l.b16 %v4343
        %v4454 = vunpack.c.h.b16 %v4343
        %v4455 = vunpack.c.l.b16 %v4344
        %v4456 = vunpack.c.h.b16 %v4344
        %v4457 = vunpack.c.l.b16 %v4345
        %v4458 = vunpack.c.h.b16 %v4345
        %v4459 = vunpack.c.l.b16 %v4346
        %v4460 = vunpack.c.h.b16 %v4346
        %v4461 = vunpack.c.l.b16 %v4347
        %v4462 = vunpack.c.h.b16 %v4347
        %v4463 = vunpack.c.l.b16 %v4348
        %v4464 = vunpack.c.h.b16 %v4348
        %v4465 = vunpack.c.l.b16 %v4349
        %v4466 = vunpack.c.h.b16 %v4349
        %v4467 = vunpack.c.l.b16 %v4350
        %v4468 = vunpack.c.h.b16 %v4350
        %v4469 = vpack.c.b16 %v4409, %v4405
        %v4470 = vpack.c.b16 %v4410, %v4406
        %v4471 = vpack.c.b16 %v4411, %v4407
        %v4472 = vpack.c.b16 %v4412, %v4408
        %v4473 = vpack.c.b16 %v4417, %v4413
        %v4474 = vpack.c.b16 %v4418, %v4414
        %v4475 = vpack.c.b16 %v4419, %v4415
        %v4476 = vpack.c.b16 %v4420, %v4416
        %v4477 = vpack.c.b16 %v4425, %v4421
        %v4478 = vpack.c.b16 %v4426, %v4422
        %v4479 = vpack.c.b16 %v4427, %v4423
        %v4480 = vpack.c.b16 %v4428, %v4424
        %v4481 = vpack.c.b16 %v4433, %v4429
        %v4482 = vpack.c.b16 %v4434, %v4430
        %v4483 = vpack.c.b16 %v4435, %v4431
        %v4484 = vpack.c.b16 %v4436, %v4432
        %v4485 = vpack.c.b16 %v4441, %v4437
        %v4486 = vpack.c.b16 %v4442, %v4438
        %v4487 = vpack.c.b16 %v4443, %v4439
        %v4488 = vpack.c.b16 %v4444, %v4440
        %v4489 = vpack.c.b16 %v4449, %v4445
        %v4490 = vpack.c.b16 %v4450, %v4446
        %v4491 = vpack.c.b16 %v4451, %v4447
        %v4492 = vpack.c.b16 %v4452, %v4448
        %v4493 = vpack.c.b16 %v4457, %v4453
        %v4494 = vpack.c.b16 %v4458, %v4454
        %v4495 = vpack.c.b16 %v4459, %v4455
        %v4496 = vpack.c.b16 %v4460, %v4456
        %v4497 = vpack.c.b16 %v4465, %v4461
        %v4498 = vpack.c.b16 %v4466, %v4462
        %v4499 = vpack.c.b16 %v4467, %v4463
        %v4500 = vpack.c.b16 %v4468, %v4464
        %4533 = vmatprep.subr.bf16.mxu0 %v4470
        %4534 = vmatpush1.bf16.msra.mxu0 %v4469
        %4535 = vmatprep.subr.bf16.mxu0 %v4474
        %4536 = vmatpush1.bf16.msra.mxu0 %v4473
        %4537 = vmatprep.subr.bf16.mxu0 %v4478
        %4538 = vmatpush1.bf16.msra.mxu0 %v4477
        %4539 = vmatprep.subr.bf16.mxu0 %v4482
        %4540 = vmatpush1.bf16.msra.mxu0 %v4481
        %4541 = vmatprep.subr.bf16.mxu0 %v4486
        %4542 = vmatpush1.bf16.msra.mxu0 %v4485
        %4543 = vmatprep.subr.bf16.mxu0 %v4490
        %4544 = vmatpush1.bf16.msra.mxu0 %v4489
        %4545 = vmatprep.subr.bf16.mxu0 %v4494
        %4546 = vmatpush1.bf16.msra.mxu0 %v4493
        %4547 = vmatprep.subr.bf16.mxu0 %v4498
        %4548 = vmatpush1.bf16.msra.mxu0 %v4497
        %4549 = vmatprep.subr.bf16.mxu0 0
        %4550 = vmatpush1.bf16.msra.mxu0 0
        %4551 = vmatprep.subr.bf16.mxu0 0
        %4552 = vmatpush1.bf16.msra.mxu0 0
        %4553 = vmatprep.subr.bf16.mxu0 0
        %4554 = vmatpush1.bf16.msra.mxu0 0
        %4555 = vmatprep.subr.bf16.mxu0 0
        %4556 = vmatpush1.bf16.msra.mxu0 0
        %4557 = vmatprep.subr.bf16.mxu0 0
        %4558 = vmatpush1.bf16.msra.mxu0 0
        %4559 = vmatprep.subr.bf16.mxu0 0
        %4560 = vmatpush1.bf16.msra.mxu0 0
        %4561 = vmatprep.subr.bf16.mxu0 0
        %4562 = vmatpush1.bf16.msra.mxu0 0
        %4563 = vmatprep.subr.bf16.mxu0 0
        %4564 = vmatpush1.bf16.msra.mxu0 0
        %4565 = vmatprep.mubr.bf16.mxu0 0
        %4566 = vmatmul.mubr.bf16.gmra.mrb[0].mxu0 %v4317
        %v4567 = vpop.f32.mrb[0].mxu0
        %v4568 = vadd.f32 %v4356, %v4567
        %v4569 = vpop.f32.mrb[0].mxu0
        %v4570 = vadd.f32 %v4360, %v4569
        %v4571 = vpop.f32.mrb[0].mxu0
        %v4572 = vadd.f32 %v4356, %v4571
        %v4573 = vpop.f32.mrb[0].mxu0
        %v4574 = vadd.f32 %v4360, %v4573
        %4575 = vmatprep.mubr.bf16.mxu0 0
        %4576 = vmatmul.mubr.bf16.gmra.mrb[0].mxu0 %v4318
        %v4577 = vpop.f32.mrb[0].mxu0
        %v4578 = vadd.f32 %v4356, %v4577
        %v4579 = vpop.f32.mrb[0].mxu0
        %v4580 = vadd.f32 %v4360, %v4579
        %v4581 = vpop.f32.mrb[0].mxu0
        %v4582 = vadd.f32 %v4356, %v4581
        %v4583 = vpop.f32.mrb[0].mxu0
        %v4584 = vadd.f32 %v4360, %v4583
        %4585 = vdwg.mxu0
        %4586 = vmatprep.subr.bf16.mxu0 %v4472
        %4587 = vmatpush1.bf16.msra.mxu0 %v4471
        %4588 = vmatprep.subr.bf16.mxu0 %v4476
        %4589 = vmatpush1.bf16.msra.mxu0 %v4475
        %4590 = vmatprep.subr.bf16.mxu0 %v4480
        %4591 = vmatpush1.bf16.msra.mxu0 %v4479
        %4592 = vmatprep.subr.bf16.mxu0 %v4484
        %4593 = vmatpush1.bf16.msra.mxu0 %v4483
        %4594 = vmatprep.subr.bf16.mxu0 %v4488
        %4595 = vmatpush1.bf16.msra.mxu0 %v4487
        %4596 = vmatprep.subr.bf16.mxu0 %v4492
        %4597 = vmatpush1.bf16.msra.mxu0 %v4491
        %4598 = vmatprep.subr.bf16.mxu0 %v4496
        %4599 = vmatpush1.bf16.msra.mxu0 %v4495
        %4600 = vmatprep.subr.bf16.mxu0 %v4500
        %4601 = vmatpush1.bf16.msra.mxu0 %v4499
        %4602 = vmatprep.subr.bf16.mxu0 0
        %4603 = vmatpush1.bf16.msra.mxu0 0
        %4604 = vmatprep.subr.bf16.mxu0 0
        %4605 = vmatpush1.bf16.msra.mxu0 0
        %4606 = vmatprep.subr.bf16.mxu0 0
        %4607 = vmatpush1.bf16.msra.mxu0 0
        %4608 = vmatprep.subr.bf16.mxu0 0
        %4609 = vmatpush1.bf16.msra.mxu0 0
        %4610 = vmatprep.subr.bf16.mxu0 0
        %4611 = vmatpush1.bf16.msra.mxu0 0
        %4612 = vmatprep.subr.bf16.mxu0 0
        %4613 = vmatpush1.bf16.msra.mxu0 0
        %4614 = vmatprep.subr.bf16.mxu0 0
        %4615 = vmatpush1.bf16.msra.mxu0 0
        %4616 = vmatprep.subr.bf16.mxu0 0
        %4617 = vmatpush1.bf16.msra.mxu0 0
        %4618 = vmatprep.mubr.bf16.mxu0 0
        %4619 = vmatmul.mubr.bf16.gmra.mrb[0].mxu0 %v4317
        %v4620 = vpop.f32.mrb[0].mxu0
        %v4621 = vadd.f32 %v4364, %v4620
        %v4622 = vpop.f32.mrb[0].mxu0
        %v4623 = vadd.f32 %v4368, %v4622
        %v4624 = vpop.f32.mrb[0].mxu0
        %v4625 = vadd.f32 %v4364, %v4624
        %v4626 = vpop.f32.mrb[0].mxu0
        %v4627 = vadd.f32 %v4368, %v4626
        %4628 = vmatprep.mubr.bf16.mxu0 0
        %4629 = vmatmul.mubr.bf16.gmra.mrb[0].mxu0 %v4318
        %v4630 = vpop.f32.mrb[0].mxu0
        %v4631 = vadd.f32 %v4364, %v4630
        %v4632 = vpop.f32.mrb[0].mxu0
        %v4633 = vadd.f32 %v4368, %v4632
        %v4634 = vpop.f32.mrb[0].mxu0
        %v4635 = vadd.f32 %v4364, %v4634
        %v4636 = vpop.f32.mrb[0].mxu0
        %v4637 = vadd.f32 %v4368, %v4636
        %4638 = vdwg.mxu0
        %v4639 = vmul.f32 %v4568, 0.5
        %v4640 = vmul.f32 %v4570, 0.5
        %v4641 = vmul.f32 %v4621, 0.5
        %v4642 = vmul.f32 %v4623, 0.5
        %v4643 = vmul.f32 %v4572, 0.5
        %v4644 = vmul.f32 %v4574, 0.5
        %v4645 = vmul.f32 %v4625, 0.5
        %v4646 = vmul.f32 %v4627, 0.5
        %v4647 = vmul.f32 %v4578, 0.5
        %v4648 = vmul.f32 %v4580, 0.5
        %v4649 = vmul.f32 %v4631, 0.5
        %v4650 = vmul.f32 %v4633, 0.5
        %v4651 = vmul.f32 %v4582, 0.5
        %v4652 = vmul.f32 %v4584, 0.5
        %v4653 = vmul.f32 %v4635, 0.5
        %v4654 = vmul.f32 %v4637, 0.5
        %v4655 = vmul.f32 %v4568, 0.70710677
        %v4656 = vmul.f32 %v4570, 0.70710677
        %v4657 = vmul.f32 %v4621, 0.70710677
        %v4658 = vmul.f32 %v4623, 0.70710677
        %v4659 = vmul.f32 %v4572, 0.70710677
        %v4660 = vmul.f32 %v4574, 0.70710677
        %v4661 = vmul.f32 %v4625, 0.70710677
        %v4662 = vmul.f32 %v4627, 0.70710677
        %v4663 = vmul.f32 %v4578, 0.70710677
        %v4664 = vmul.f32 %v4580, 0.70710677
        %v4665 = vmul.f32 %v4631, 0.70710677
        %v4666 = vmul.f32 %v4633, 0.70710677
        %v4667 = vmul.f32 %v4582, 0.70710677
        %v4668 = vmul.f32 %v4584, 0.70710677
        %v4669 = vmul.f32 %v4635, 0.70710677
        %v4670 = vmul.f32 %v4637, 0.70710677
        %v4671 = verf.f32.pop %v4655
        %v4672 = verf.f32.pop %v4656
        %v4673 = verf.f32.pop %v4657
        %v4674 = verf.f32.pop %v4658
        %v4675 = verf.f32.pop %v4659
        %v4676 = verf.f32.pop %v4660
        %v4677 = verf.f32.pop %v4661
        %v4678 = verf.f32.pop %v4662
        %v4679 = verf.f32.pop %v4663
        %v4680 = verf.f32.pop %v4664
        %v4681 = verf.f32.pop %v4665
        %v4682 = verf.f32.pop %v4666
        %v4683 = verf.f32.pop %v4667
        %v4684 = verf.f32.pop %v4668
        %v4685 = verf.f32.pop %v4669
        %v4686 = verf.f32.pop %v4670
        %v4687 = vadd.f32 %v4671, 1.0
        %v4688 = vadd.f32 %v4672, 1.0
        %v4689 = vadd.f32 %v4673, 1.0
        %v4690 = vadd.f32 %v4674, 1.0
        %v4691 = vadd.f32 %v4675, 1.0
        %v4692 = vadd.f32 %v4676, 1.0
        %v4693 = vadd.f32 %v4677, 1.0
        %v4694 = vadd.f32 %v4678, 1.0
        %v4695 = vadd.f32 %v4679, 1.0
        %v4696 = vadd.f32 %v4680, 1.0
        %v4697 = vadd.f32 %v4681, 1.0
        %v4698 = vadd.f32 %v4682, 1.0
        %v4699 = vadd.f32 %v4683, 1.0
        %v4700 = vadd.f32 %v4684, 1.0
        %v4701 = vadd.f32 %v4685, 1.0
        %v4702 = vadd.f32 %v4686, 1.0
        %v4703 = vmul.f32 %v4639, %v4687
        %v4704 = vmul.f32 %v4640, %v4688
        %v4705 = vmul.f32 %v4641, %v4689
        %v4706 = vmul.f32 %v4642, %v4690
        %v4707 = vmul.f32 %v4643, %v4691
        %v4708 = vmul.f32 %v4644, %v4692
        %v4709 = vmul.f32 %v4645, %v4693
        %v4710 = vmul.f32 %v4646, %v4694
        %v4711 = vmul.f32 %v4647, %v4695
        %v4712 = vmul.f32 %v4648, %v4696
        %v4713 = vmul.f32 %v4649, %v4697
        %v4714 = vmul.f32 %v4650, %v4698
        %v4715 = vmul.f32 %v4651, %v4699
        %v4716 = vmul.f32 %v4652, %v4700
        %v4717 = vmul.f32 %v4653, %v4701
        %v4718 = vmul.f32 %v4654, %v4702
        %v4719 = vpack.c.bf16 %v4707, %v4703
        %v4720 = vpack.c.bf16 %v4708, %v4704
        %v4721 = vpack.c.bf16 %v4709, %v4705
        %v4722 = vpack.c.bf16 %v4710, %v4706
        %v4723 = vpack.c.bf16 %v4715, %v4711
        %v4724 = vpack.c.bf16 %v4716, %v4712
        %v4725 = vpack.c.bf16 %v4717, %v4713
        %v4726 = vpack.c.bf16 %v4718, %v4714
        %v4727 = vld [vmem:[#allocation10] sm:$0xf]
        %v4728 = vld [vmem:[#allocation10 + $0x4] sm:$0xf]
        %v4729 = vld [vmem:[#allocation10 + $0x8] sm:$0xf]
        %v4730 = vld [vmem:[#allocation10 + $0xc] sm:$0xf]
        %v4731 = vld [vmem:[#allocation10 + $0x10] sm:$0xf]
        %v4732 = vld [vmem:[#allocation10 + $0x14] sm:$0xf]
        %v4733 = vld [vmem:[#allocation10 + $0x18] sm:$0xf]
        %v4734 = vld [vmem:[#allocation10 + $0x1c] sm:$0xf]
        %v4735 = vld [vmem:[#allocation10 + $0x20] sm:$0xf]
        %v4736 = vld [vmem:[#allocation10 + $0x24] sm:$0xf]
        %v4737 = vld [vmem:[#allocation10 + $0x28] sm:$0xf]
        %v4738 = vld [vmem:[#allocation10 + $0x2c] sm:$0xf]
        %v4739 = vld [vmem:[#allocation10 + $0x30] sm:$0xf]
        %v4740 = vld [vmem:[#allocation10 + $0x34] sm:$0xf]
        %v4741 = vld [vmem:[#allocation10 + $0x38] sm:$0xf]
        %v4742 = vld [vmem:[#allocation10 + $0x3c] sm:$0xf]
        %v4743 = vld [vmem:[#allocation10 + $0x40] sm:$0xf]
        %v4744 = vld [vmem:[#allocation10 + $0x44] sm:$0xf]
        %v4745 = vld [vmem:[#allocation10 + $0x48] sm:$0xf]
        %v4746 = vld [vmem:[#allocation10 + $0x4c] sm:$0xf]
        %v4747 = vld [vmem:[#allocation10 + $0x50] sm:$0xf]
        %v4748 = vld [vmem:[#allocation10 + $0x54] sm:$0xf]
        %v4749 = vld [vmem:[#allocation10 + $0x58] sm:$0xf]
        %v4750 = vld [vmem:[#allocation10 + $0x5c] sm:$0xf]
        %v4751 = vld [vmem:[#allocation10 + $0x60] sm:$0xf]
        %v4752 = vld [vmem:[#allocation10 + $0x64] sm:$0xf]
        %v4753 = vld [vmem:[#allocation10 + $0x68] sm:$0xf]
        %v4754 = vld [vmem:[#allocation10 + $0x6c] sm:$0xf]
        %v4755 = vld [vmem:[#allocation10 + $0x70] sm:$0xf]
        %v4756 = vld [vmem:[#allocation10 + $0x74] sm:$0xf]
        %v4757 = vld [vmem:[#allocation10 + $0x78] sm:$0xf]
        %v4758 = vld [vmem:[#allocation10 + $0x7c] sm:$0xf]
        %v4759 = vld [vmem:[#allocation10 + $0x80] sm:$0xf]
        %v4760 = vld [vmem:[#allocation10 + $0x84] sm:$0xf]
        %v4761 = vld [vmem:[#allocation10 + $0x88] sm:$0xf]
        %v4762 = vld [vmem:[#allocation10 + $0x8c] sm:$0xf]
        %v4763 = vld [vmem:[#allocation10 + $0x90] sm:$0xf]
        %v4764 = vld [vmem:[#allocation10 + $0x94] sm:$0xf]
        %v4765 = vld [vmem:[#allocation10 + $0x98] sm:$0xf]
        %v4766 = vld [vmem:[#allocation10 + $0x9c] sm:$0xf]
        %v4767 = vld [vmem:[#allocation10 + $0xa0] sm:$0xf]
        %v4768 = vld [vmem:[#allocation10 + $0xa4] sm:$0xf]
        %v4769 = vld [vmem:[#allocation10 + $0xa8] sm:$0xf]
        %v4770 = vld [vmem:[#allocation10 + $0xac] sm:$0xf]
        %v4771 = vld [vmem:[#allocation10 + $0xb0] sm:$0xf]
        %v4772 = vld [vmem:[#allocation10 + $0xb4] sm:$0xf]
        %v4773 = vld [vmem:[#allocation10 + $0xb8] sm:$0xf]
        %v4774 = vld [vmem:[#allocation10 + $0xbc] sm:$0xf]
        %v4775 = vld [vmem:[#allocation10 + $0xc0] sm:$0xf]
        %v4776 = vld [vmem:[#allocation10 + $0xc4] sm:$0xf]
        %v4777 = vld [vmem:[#allocation10 + $0xc8] sm:$0xf]
        %v4778 = vld [vmem:[#allocation10 + $0xcc] sm:$0xf]
        %v4779 = vld [vmem:[#allocation10 + $0xd0] sm:$0xf]
        %v4780 = vld [vmem:[#allocation10 + $0xd4] sm:$0xf]
        %v4781 = vld [vmem:[#allocation10 + $0xd8] sm:$0xf]
        %v4782 = vld [vmem:[#allocation10 + $0xdc] sm:$0xf]
        %v4783 = vld [vmem:[#allocation10 + $0xe0] sm:$0xf]
        %v4784 = vld [vmem:[#allocation10 + $0xe4] sm:$0xf]
        %v4785 = vld [vmem:[#allocation10 + $0xe8] sm:$0xf]
        %v4786 = vld [vmem:[#allocation10 + $0xec] sm:$0xf]
        %v4787 = vld [vmem:[#allocation10 + $0xf0] sm:$0xf]
        %v4788 = vld [vmem:[#allocation10 + $0xf4] sm:$0xf]
        %v4789 = vld [vmem:[#allocation10 + $0xf8] sm:$0xf]
        %v4790 = vld [vmem:[#allocation10 + $0xfc] sm:$0xf]
        %v4791 = vld [vmem:[%s11] sm:$0x1]
        %v4793 = vlaneseq
        %v4794 = vshrl.u32 %v4793, 7
        %v4795 = vsub.s32 0, %v4794
        %v4796 = vrot.slane %v4791, %v4795
        %v4862 = vunpack.c.l.b16 %v4727
        %v4863 = vunpack.c.l.b16 %v4728
        %v4864 = vunpack.c.l.b16 %v4729
        %v4865 = vunpack.c.l.b16 %v4730
        %v4866 = vunpack.c.l.b16 %v4731
        %v4867 = vunpack.c.l.b16 %v4732
        %v4868 = vunpack.c.l.b16 %v4733
        %v4869 = vunpack.c.l.b16 %v4734
        %v4870 = vunpack.c.l.b16 %v4735
        %v4871 = vunpack.c.l.b16 %v4736
        %v4872 = vunpack.c.l.b16 %v4737
        %v4873 = vunpack.c.l.b16 %v4738
        %v4874 = vunpack.c.l.b16 %v4739
        %v4875 = vunpack.c.l.b16 %v4740
        %v4876 = vunpack.c.l.b16 %v4741
        %v4877 = vunpack.c.l.b16 %v4742
        %v4878 = vunpack.c.l.b16 %v4743
        %v4879 = vunpack.c.l.b16 %v4744
        %v4880 = vunpack.c.l.b16 %v4745
        %v4881 = vunpack.c.l.b16 %v4746
        %v4882 = vunpack.c.l.b16 %v4747
        %v4883 = vunpack.c.l.b16 %v4748
        %v4884 = vunpack.c.l.b16 %v4749
        %v4885 = vunpack.c.l.b16 %v4750
        %v4886 = vunpack.c.l.b16 %v4751
        %v4887 = vunpack.c.l.b16 %v4752
        %v4888 = vunpack.c.l.b16 %v4753
        %v4889 = vunpack.c.l.b16 %v4754
        %v4890 = vunpack.c.l.b16 %v4755
        %v4891 = vunpack.c.l.b16 %v4756
        %v4892 = vunpack.c.l.b16 %v4757
        %v4893 = vunpack.c.l.b16 %v4758
        %v4894 = vunpack.c.l.b16 %v4759
        %v4895 = vunpack.c.l.b16 %v4760
        %v4896 = vunpack.c.l.b16 %v4761
        %v4897 = vunpack.c.l.b16 %v4762
        %v4898 = vunpack.c.l.b16 %v4763
        %v4899 = vunpack.c.l.b16 %v4764
        %v4900 = vunpack.c.l.b16 %v4765
        %v4901 = vunpack.c.l.b16 %v4766
        %v4902 = vunpack.c.l.b16 %v4767
        %v4903 = vunpack.c.l.b16 %v4768
        %v4904 = vunpack.c.l.b16 %v4769
        %v4905 = vunpack.c.l.b16 %v4770
        %v4906 = vunpack.c.l.b16 %v4771
        %v4907 = vunpack.c.l.b16 %v4772
        %v4908 = vunpack.c.l.b16 %v4773
        %v4909 = vunpack.c.l.b16 %v4774
        %v4910 = vunpack.c.l.b16 %v4775
        %v4911 = vunpack.c.l.b16 %v4776
        %v4912 = vunpack.c.l.b16 %v4777
        %v4913 = vunpack.c.l.b16 %v4778
        %v4914 = vunpack.c.l.b16 %v4779
        %v4915 = vunpack.c.l.b16 %v4780
        %v4916 = vunpack.c.l.b16 %v4781
        %v4917 = vunpack.c.l.b16 %v4782
        %v4918 = vunpack.c.l.b16 %v4783
        %v4919 = vunpack.c.l.b16 %v4784
        %v4920 = vunpack.c.l.b16 %v4785
        %v4921 = vunpack.c.l.b16 %v4786
        %v4922 = vunpack.c.l.b16 %v4787
        %v4923 = vunpack.c.l.b16 %v4788
        %v4924 = vunpack.c.l.b16 %v4789
        %v4925 = vunpack.c.l.b16 %v4790
        %v4926 = vpack.c.b16 %v4863, %v4862
        %v4927 = vpack.c.b16 %v4865, %v4864
        %v4928 = vpack.c.b16 %v4867, %v4866
        %v4929 = vpack.c.b16 %v4869, %v4868
        %v4930 = vpack.c.b16 %v4871, %v4870
        %v4931 = vpack.c.b16 %v4873, %v4872
        %v4932 = vpack.c.b16 %v4875, %v4874
        %v4933 = vpack.c.b16 %v4877, %v4876
        %v4934 = vpack.c.b16 %v4879, %v4878
        %v4935 = vpack.c.b16 %v4881, %v4880
        %v4936 = vpack.c.b16 %v4883, %v4882
        %v4937 = vpack.c.b16 %v4885, %v4884
        %v4938 = vpack.c.b16 %v4887, %v4886
        %v4939 = vpack.c.b16 %v4889, %v4888
        %v4940 = vpack.c.b16 %v4891, %v4890
        %v4941 = vpack.c.b16 %v4893, %v4892
        %v4942 = vpack.c.b16 %v4895, %v4894
        %v4943 = vpack.c.b16 %v4897, %v4896
        %v4944 = vpack.c.b16 %v4899, %v4898
        %v4945 = vpack.c.b16 %v4901, %v4900
        %v4946 = vpack.c.b16 %v4903, %v4902
        %v4947 = vpack.c.b16 %v4905, %v4904
        %v4948 = vpack.c.b16 %v4907, %v4906
        %v4949 = vpack.c.b16 %v4909, %v4908
        %v4950 = vpack.c.b16 %v4911, %v4910
        %v4951 = vpack.c.b16 %v4913, %v4912
        %v4952 = vpack.c.b16 %v4915, %v4914
        %v4953 = vpack.c.b16 %v4917, %v4916
        %v4954 = vpack.c.b16 %v4919, %v4918
        %v4955 = vpack.c.b16 %v4921, %v4920
        %v4956 = vpack.c.b16 %v4923, %v4922
        %v4957 = vpack.c.b16 %v4925, %v4924
        %4990 = vmatprep.subr.bf16.mxu0 0
        %4991 = vmatpush1.bf16.msra.mxu0 %v4926
        %4992 = vmatprep.subr.bf16.mxu0 0
        %4993 = vmatpush1.bf16.msra.mxu0 %v4927
        %4994 = vmatprep.subr.bf16.mxu0 0
        %4995 = vmatpush1.bf16.msra.mxu0 %v4928
        %4996 = vmatprep.subr.bf16.mxu0 0
        %4997 = vmatpush1.bf16.msra.mxu0 %v4929
        %4998 = vmatprep.subr.bf16.mxu0 0
        %4999 = vmatpush1.bf16.msra.mxu0 %v4930
        %5000 = vmatprep.subr.bf16.mxu0 0
        %5001 = vmatpush1.bf16.msra.mxu0 %v4931
        %5002 = vmatprep.subr.bf16.mxu0 0
        %5003 = vmatpush1.bf16.msra.mxu0 %v4932
        %5004 = vmatprep.subr.bf16.mxu0 0
        %5005 = vmatpush1.bf16.msra.mxu0 %v4933
        %5006 = vmatprep.subr.bf16.mxu0 0
        %5007 = vmatpush1.bf16.msra.mxu0 %v4934
        %5008 = vmatprep.subr.bf16.mxu0 0
        %5009 = vmatpush1.bf16.msra.mxu0 %v4935
        %5010 = vmatprep.subr.bf16.mxu0 0
        %5011 = vmatpush1.bf16.msra.mxu0 %v4936
        %5012 = vmatprep.subr.bf16.mxu0 0
        %5013 = vmatpush1.bf16.msra.mxu0 %v4937
        %5014 = vmatprep.subr.bf16.mxu0 0
        %5015 = vmatpush1.bf16.msra.mxu0 %v4938
        %5016 = vmatprep.subr.bf16.mxu0 0
        %5017 = vmatpush1.bf16.msra.mxu0 %v4939
        %5018 = vmatprep.subr.bf16.mxu0 0
        %5019 = vmatpush1.bf16.msra.mxu0 %v4940
        %5020 = vmatprep.subr.bf16.mxu0 0
        %5021 = vmatpush1.bf16.msra.mxu0 %v4941
        %5022 = vmatprep.mubr.bf16.mxu0 %v4720
        %5023 = vmatmul.mubr.bf16.gmra.mrb[0].mxu0 %v4719
        %v5024 = vpop.f32.mrb[0].mxu0
        %v5025 = vadd.f32 %v4796, %v5024
        %v5026 = vpop.f32.mrb[0].mxu0
        %v5027 = vpop.f32.mrb[0].mxu0
        %v5028 = vadd.f32 %v4796, %v5027
        %v5029 = vpop.f32.mrb[0].mxu0
        %5030 = vmatprep.mubr.bf16.mxu0 %v4724
        %5031 = vmatmul.mubr.bf16.gmra.mrb[0].mxu0 %v4723
        %v5032 = vpop.f32.mrb[0].mxu0
        %v5033 = vadd.f32 %v4796, %v5032
        %v5034 = vpop.f32.mrb[0].mxu0
        %v5035 = vpop.f32.mrb[0].mxu0
        %v5036 = vadd.f32 %v4796, %v5035
        %v5037 = vpop.f32.mrb[0].mxu0
        %5038 = vdwg.mxu0
        %5039 = vmatprep.subr.bf16.mxu0 0
        %5040 = vmatpush1.bf16.msra.mxu0 %v4942
        %5041 = vmatprep.subr.bf16.mxu0 0
        %5042 = vmatpush1.bf16.msra.mxu0 %v4943
        %5043 = vmatprep.subr.bf16.mxu0 0
        %5044 = vmatpush1.bf16.msra.mxu0 %v4944
        %5045 = vmatprep.subr.bf16.mxu0 0
        %5046 = vmatpush1.bf16.msra.mxu0 %v4945
        %5047 = vmatprep.subr.bf16.mxu0 0
        %5048 = vmatpush1.bf16.msra.mxu0 %v4946
        %5049 = vmatprep.subr.bf16.mxu0 0
        %5050 = vmatpush1.bf16.msra.mxu0 %v4947
        %5051 = vmatprep.subr.bf16.mxu0 0
        %5052 = vmatpush1.bf16.msra.mxu0 %v4948
        %5053 = vmatprep.subr.bf16.mxu0 0
        %5054 = vmatpush1.bf16.msra.mxu0 %v4949
        %5055 = vmatprep.subr.bf16.mxu0 0
        %5056 = vmatpush1.bf16.msra.mxu0 %v4950
        %5057 = vmatprep.subr.bf16.mxu0 0
        %5058 = vmatpush1.bf16.msra.mxu0 %v4951
        %5059 = vmatprep.subr.bf16.mxu0 0
        %5060 = vmatpush1.bf16.msra.mxu0 %v4952
        %5061 = vmatprep.subr.bf16.mxu0 0
        %5062 = vmatpush1.bf16.msra.mxu0 %v4953
        %5063 = vmatprep.subr.bf16.mxu0 0
        %5064 = vmatpush1.bf16.msra.mxu0 %v4954
        %5065 = vmatprep.subr.bf16.mxu0 0
        %5066 = vmatpush1.bf16.msra.mxu0 %v4955
        %5067 = vmatprep.subr.bf16.mxu0 0
        %5068 = vmatpush1.bf16.msra.mxu0 %v4956
        %5069 = vmatprep.subr.bf16.mxu0 0
        %5070 = vmatpush1.bf16.msra.mxu0 %v4957
        %5071 = vmatprep.mubr.bf16.mxu0 %v4722
        %5072 = vmatmul.mubr.bf16.gmra.mrb[0].mxu0 %v4721
        %v5073 = vpop.f32.mrb[0].mxu0
        %v5074 = vadd.f32 %v5025, %v5073
        %v5075 = vpop.f32.mrb[0].mxu0
        %v5076 = vpop.f32.mrb[0].mxu0
        %v5077 = vadd.f32 %v5028, %v5076
        %v5078 = vpop.f32.mrb[0].mxu0
        %5079 = vmatprep.mubr.bf16.mxu0 %v4726
        %5080 = vmatmul.mubr.bf16.gmra.mrb[0].mxu0 %v4725
        %v5081 = vpop.f32.mrb[0].mxu0
        %v5082 = vadd.f32 %v5033, %v5081
        %v5083 = vpop.f32.mrb[0].mxu0
        %v5084 = vpop.f32.mrb[0].mxu0
        %v5085 = vadd.f32 %v5036, %v5084
        %v5086 = vpop.f32.mrb[0].mxu0
        %5087 = vdwg.mxu0
        %v5088 = vadd.f32 %v4247, %v5074
        %v5089 = vadd.f32 %v4248, %v5077
        %v5090 = vadd.f32 %v4249, %v5082
        %v5091 = vadd.f32 %v4250, %v5085
        %5092 = vst [vmem:[%s490] sm:$0xff] %v5088
        %5093 = vst [vmem:[%s490 + $0x8] sm:$0xff] %v5089
        %5094 = vst [vmem:[%s490 + $0x10] sm:$0xff] %v5090
        %5095 = vst [vmem:[%s490 + $0x18] sm:$0xff] %v5091
        %s5096 = sand.u32 %s296, 1
        %s5097 = scalar_lea.sflag [#allocation4], %s5096
        %s5098 = sand.u32 %s296, 1
        %s5099 = smul.addr %s5098, 32
        %s5100 = scalar_lea.vmem [#allocation11], %s5099
        // Predicated region
        $region89: #{tpu_custom_call.1} parent=67 // pred_check
          %p5101 = pneg %p306
        $region90: #{tpu_custom_call.1} parent=67 // pred_check_branch
          %5103 = sbr.rel (%p5101) target = $region92
        $region91: #{tpu_custom_call.1} parent=67 // pred_region
          %s5104 = smul.u32 2, %s31
          %s5106 = ssub.s32 512, 512
          %5107 = vsyncadd %s5097, %s5106
          %s5108 = smul.addr %s5104, 2
          %s5109 = smul.addr %s5108, 128
          %s5110 = scalar_lea.hbm %s12, %s5109
          %s5111 = sshll.u32 %s5100, 4
          %s5112 = int_to_ptr.vmem [resolvable:$true] %s5111
          %5117 = dma.vmem_to_hbm [thread:$0]  %s5112, 512, %s5110, %s5097, 128, 128, 8
        $region92: #{tpu_custom_call.1} parent=67 // pred_fallthru
          _
      $region68: #{tpu_custom_call.1} parent=5 // pred_fallthru
        _
      %p5118 = scmp.le.s32.totalorder 2, %s26
      // Predicated region
      $region93: #{tpu_custom_call.1} parent=5 // pred_check
        %p5119 = pneg %p5118
      $region94: #{tpu_custom_call.1} parent=5 // pred_check_branch
        %5121 = sbr.rel (%p5119) target = $region96
      $region95: #{tpu_custom_call.1} parent=5 // pred_region
        %s5122 = ssub.s32 %s26, 2
        // Predicated region
        $region97: #{tpu_custom_call.1} parent=95 // pred_check
          %p5123 = pneg %p312
        $region98: #{tpu_custom_call.1} parent=95 // pred_check_branch
          %5125 = sbr.rel (%p5123) target = $region100
        $region99: #{tpu_custom_call.1} parent=95 // pred_region
          %s5126 = sand.u32 %s297, 1
          %s5127 = scalar_lea.sflag [#allocation4], %s5126
          %s5128 = sand.u32 %s297, 1
          %s5129 = smul.addr %s5128, 32
          %s5130 = scalar_lea.vmem [#allocation11], %s5129
          %5131 = dma.done %s5127, 512
        $region100: #{tpu_custom_call.1} parent=95 // pred_fallthru
          _
      $region96: #{tpu_custom_call.1} parent=5 // pred_fallthru
        _
    $region6: #{tpu_custom_call.1} parent=1 // loop_footer
      %s30 = sadd.s32 1, %s26
    $region7: #{tpu_custom_call.1} parent=1 // loop_footer_branch
      %25 = sbr.rel target = $region3
    $region8: #{tpu_custom_call.1} parent=1 // loop_exit
      _
    %5132 = vsyncpa [#allocation3], 1
    %s5133 = scalar_lea.sflag [#allocation3], 1
    %5134 = vsyncpa %s5133, 1
    %5135 = vsyncpa [#allocation6], 1
    %5136 = vsyncpa [#allocation9], 1
    %5137 = vsyncpa [#allocation4], 1
    %s5138 = scalar_lea.sflag [#allocation4], 1
    %5139 = vsyncpa %s5138, 1

</llo_original>
